<compile_context>
chip_gen: v7x
topology: tpu7x:2x2x1
jax: 0.10.0
libtpu: 0.0.40
codegen_flags: <defaults>
</compile_context>

<pallas_src>
import functools

import jax
import jax.numpy as jnp
import numpy as np
from jax import lax
from jax.experimental import pallas as pl
from jax.experimental.pallas import tpu as pltpu

LANE = 128
SUBLANE = 8


def _round_up(x, m):
    return (x + m - 1) // m * m


# ----------------------------- Pallas kernel --------------------------------
def _lstm_mlp_kernel(
    x_ref,     # (T, Bp, EP)        padded embedded tokens, time-major
    w1_ref,    # (EP + GP, 4*GP)    fused [W_ih ; W_hh] layer 1 (gate-padded)
    b1_ref,    # (1, 4*GP)          combined b_ih + b_hh layer 1 (gate-padded)
    w2_ref,    # (2*GP, 4*GP)       fused [W_ih ; W_hh] layer 2
    b2_ref,    # (1, 4*GP)
    wl1_ref,   # (GP, AP)           first linear (padded)
    bl1_ref,   # (1, AP)
    wl2_ref,   # (AP, OP)           second linear (padded)
    bl2_ref,   # (1, OP)
    y_ref,     # (Bp, OP)           logits (padded)
    hn_ref,    # (2, Bp, GP)        final hidden states (padded)
    cn_ref,    # (2, Bp, GP)        final cell states (padded)
):
    T, Bp, _ = x_ref.shape
    GP = hn_ref.shape[-1]

    # Hoist weights and pre-broadcast biases out of the recurrence loop.
    w1 = w1_ref[...]
    w2 = w2_ref[...]
    b1 = jnp.broadcast_to(b1_ref[...], (Bp, 4 * GP))
    b2 = jnp.broadcast_to(b2_ref[...], (Bp, 4 * GP))

    def cell(xh, c, w, b):
        z = jnp.dot(xh, w, preferred_element_type=jnp.float32) + b
        # PyTorch gate order i, f, g, o; each gate owns one 128-lane group.
        i = jax.nn.sigmoid(z[:, 0 * GP:1 * GP])
        f = jax.nn.sigmoid(z[:, 1 * GP:2 * GP])
        g = jnp.tanh(z[:, 2 * GP:3 * GP])
        o = jax.nn.sigmoid(z[:, 3 * GP:4 * GP])
        c_new = f * c + i * g
        h_new = o * jnp.tanh(c_new)
        return h_new, c_new

    def step(t, carry):
        h1, c1, h2, c2 = carry
        x_t = x_ref[t]                                          # (Bp, EP)
        h1, c1 = cell(jnp.concatenate([x_t, h1], axis=-1), c1, w1, b1)
        # TODO(synk): inter-layer nn.LSTM dropout is training-only; eval forward
        # is identity so it is omitted here.
        h2, c2 = cell(jnp.concatenate([h1, h2], axis=-1), c2, w2, b2)
        return (h1, c1, h2, c2)

    zeros = jnp.zeros((Bp, GP), jnp.float32)
    unroll = True if T <= 16 else 4
    h1, c1, h2, c2 = lax.fori_loop(
        0, T, step, (zeros, zeros, zeros, zeros), unroll=unroll
    )

    # MLP head on the last timestep's top-layer hidden state (runs once).
    a = jnp.maximum(
        jnp.dot(h2, wl1_ref[...], preferred_element_type=jnp.float32) + bl1_ref[...],
        0.0,
    )
    y = jnp.dot(a, wl2_ref[...], preferred_element_type=jnp.float32) + bl2_ref[...]
    y_ref[...] = y.astype(y_ref.dtype)
    hn_ref[0] = h1
    hn_ref[1] = h2
    cn_ref[0] = c1
    cn_ref[1] = c2


# --------------------------- padding helpers ---------------------------------
def _pad_gate_mat(w, rows_pad, H, GP):
    """(in_dim, 4H) -> (rows_pad, 4*GP); each gate moved to its own GP-lane group."""
    in_dim = w.shape[0]
    out = jnp.zeros((rows_pad, 4 * GP), jnp.float32)
    for g in range(4):
        out = out.at[:in_dim, g * GP:g * GP + H].set(w[:, g * H:(g + 1) * H])
    return out


def _pad_gate_vec(b, H, GP):
    out = jnp.zeros((1, 4 * GP), jnp.float32)
    for g in range(4):
        out = out.at[:, g * GP:g * GP + H].set(b[:, g * H:(g + 1) * H])
    return out


# ------------------------------- wrapper --------------------------------------
def lstm_classification_forward(tweet, other_info, params):
    """Pallas implementation of Network.forward (eval mode).

    tweet: (B, T) int32 token ids.  other_info is unused by the reference forward.
    Returns (y_out, (h_n, c_n)) with h_n, c_n of shape (2, B, H).
    """
    del other_info  # unused in the PyTorch forward as well
    B, T = tweet.shape
    E = params["emb"].shape[1]
    H = params["whh1"].shape[0]
    A = params["wl1"].shape[1]
    O = params["wl2"].shape[1]

    Bp = _round_up(max(B, SUBLANE), SUBLANE)   # pad batch to sublane width
    EP = _round_up(E, LANE)                    # padded embedding lanes
    GP = _round_up(H, LANE)                    # padded hidden / per-gate lanes
    AP = _round_up(A, LANE)
    OP = _round_up(O, LANE)

    # Glue: embedding gather + zero-padded (T, Bp, EP) time-major layout.
    x_emb = params["emb"][tweet]                           # (B, T, E)
    x_tbe = jnp.swapaxes(x_emb, 0, 1)                      # (T, B, E)
    x_pad = jnp.zeros((T, Bp, EP), jnp.float32).at[:, :B, :E].set(x_tbe)

    # Fused [W_ih ; W_hh] with gate-lane padding.
    w1 = jnp.concatenate(
        [_pad_gate_mat(params["wih1"], EP, H, GP),
         _pad_gate_mat(params["whh1"], GP, H, GP)], axis=0)     # (EP+GP, 4GP)
    w2 = jnp.concatenate(
        [_pad_gate_mat(params["wih2"], GP, H, GP),
         _pad_gate_mat(params["whh2"], GP, H, GP)], axis=0)     # (2GP, 4GP)
    b1 = _pad_gate_vec(params["b1"], H, GP)
    b2 = _pad_gate_vec(params["b2"], H, GP)

    wl1 = jnp.zeros((GP, AP), jnp.float32).at[:H, :A].set(params["wl1"])
    bl1 = jnp.zeros((1, AP), jnp.float32).at[:, :A].set(params["bl1"])
    wl2 = jnp.zeros((AP, OP), jnp.float32).at[:A, :O].set(params["wl2"])
    bl2 = jnp.zeros((1, OP), jnp.float32).at[:, :O].set(params["bl2"])

    vmem_spec = pl.BlockSpec(memory_space=pltpu.MemorySpace.VMEM)

    y_p, hn_p, cn_p = pl.pallas_call(
        _lstm_mlp_kernel,
        out_shape=(
            jax.ShapeDtypeStruct((Bp, OP), jnp.float32),
            jax.ShapeDtypeStruct((2, Bp, GP), jnp.float32),
            jax.ShapeDtypeStruct((2, Bp, GP), jnp.float32),
        ),
        in_specs=[vmem_spec] * 9,
        out_specs=(vmem_spec, vmem_spec, vmem_spec),
        compiler_params=pltpu.CompilerParams(
            vmem_limit_bytes=32 * 1024 * 1024,
        ),
    )(x_pad, w1, b1, w2, b2, wl1, bl1, wl2, bl2)

    # Strip padding.
    y_out = y_p[:B, :O]
    h_n = hn_p[:, :B, :H]
    c_n = cn_p[:, :B, :H]
    return y_out, (h_n, c_n)


# ------------------------- pure-JAX reference --------------------------------
def ref_forward(tweet, params):
    B, T = tweet.shape
    H = params["whh1"].shape[0]
    x = params["emb"][tweet]  # (B, T, E)

    def run_layer(xs, wih, whh, b):
        def step(carry, x_t):
            h, c = carry
            z = x_t @ wih + h @ whh + b
            i = jax.nn.sigmoid(z[:, :H])
            f = jax.nn.sigmoid(z[:, H:2 * H])
            g = jnp.tanh(z[:, 2 * H:3 * H])
            o = jax.nn.sigmoid(z[:, 3 * H:4 * H])
            c = f * c + i * g
            h = o * jnp.tanh(c)
            return (h, c), h

        init = (jnp.zeros((B, H), jnp.float32), jnp.zeros((B, H), jnp.float32))
        (h, c), hs = jax.lax.scan(step, init, jnp.swapaxes(xs, 0, 1))
        return jnp.swapaxes(hs, 0, 1), h, c

    out1, h1, c1 = run_layer(x, params["wih1"], params["whh1"], params["b1"][0])
    out2, h2, c2 = run_layer(out1, params["wih2"], params["whh2"], params["b2"][0])
    last = out2[:, -1, :]
    a = jnp.maximum(last @ params["wl1"] + params["bl1"][0], 0.0)
    y = a @ params["wl2"] + params["bl2"][0]
    return y, (jnp.stack([h1, h2]), jnp.stack([c1, c2]))


# ----------------------------- param init ------------------------------------
def init_params(key, n_vocab, n_embd, n_rnn_hidden, n_ann_hidden, n_out):
    ks = jax.random.split(key, 16)
    k = 1.0 / np.sqrt(n_rnn_hidden)
    u = lambda key, shape, s: jax.random.uniform(key, shape, jnp.float32, -s, s)
    H = n_rnn_hidden
    params = {
        "emb": jax.random.normal(ks[0], (n_vocab, n_embd), jnp.float32),
        # weights stored pre-transposed: (input_dim, 4H), PyTorch gate order i,f,g,o
        "wih1": u(ks[1], (n_embd, 4 * H), k),
        "whh1": u(ks[2], (H, 4 * H), k),
        "b1": u(ks[3], (1, 4 * H), k) + u(ks[4], (1, 4 * H), k),  # b_ih + b_hh
        "wih2": u(ks[5], (H, 4 * H), k),
        "whh2": u(ks[6], (H, 4 * H), k),
        "b2": u(ks[7], (1, 4 * H), k) + u(ks[8], (1, 4 * H), k),
        "wl1": u(ks[9], (H, n_ann_hidden), 1.0 / np.sqrt(H)),
        "bl1": u(ks[10], (1, n_ann_hidden), 1.0 / np.sqrt(H)),
        "wl2": u(ks[11], (n_ann_hidden, n_out), 1.0 / np.sqrt(n_ann_hidden)),
        "bl2": u(ks[12], (1, n_out), 1.0 / np.sqrt(n_ann_hidden)),
    }
    return params


if __name__ == "__main__":
    n_vocab, n_embd, n_rnn_hidden, n_ann_hidden, n_out = 50, 16, 32, 16, 2
    B, T = 2, 8

    key = jax.random.PRNGKey(0)
    kp, kt, ko = jax.random.split(key, 3)
    params = init_params(kp, n_vocab, n_embd, n_rnn_hidden, n_ann_hidden, n_out)
    tweet = jax.random.randint(kt, (B, T), 0, n_vocab, dtype=jnp.int32)
    other_info = jax.random.normal(ko, (B, 4), jnp.float32)  # unused by forward

    fwd = jax.jit(functools.partial(lstm_classification_forward, params=params))
    y_out, (h_n, c_n) = fwd(tweet, other_info)
    jax.block_until_ready((y_out, h_n, c_n))

    y_ref, (h_ref, c_ref) = ref_forward(tweet, params)
    np.testing.assert_allclose(np.asarray(y_out), np.asarray(y_ref), atol=1e-4, rtol=1e-4)
    np.testing.assert_allclose(np.asarray(h_n), np.asarray(h_ref), atol=1e-4, rtol=1e-4)
    np.testing.assert_allclose(np.asarray(c_n), np.asarray(c_ref), atol=1e-4, rtol=1e-4)

    print("KERNEL_OK")
</pallas_src>

<mosaic_0001>
module attributes {stable_mosaic.version = 11 : i64} {
  func.func @_lstm_mlp_kernel(%arg0: memref<8x8x128xf32, #tpu.memory_space<vmem>>, %arg1: memref<256x512xf32, #tpu.memory_space<vmem>>, %arg2: memref<1x512xf32, #tpu.memory_space<vmem>>, %arg3: memref<256x512xf32, #tpu.memory_space<vmem>>, %arg4: memref<1x512xf32, #tpu.memory_space<vmem>>, %arg5: memref<128x128xf32, #tpu.memory_space<vmem>>, %arg6: memref<1x128xf32, #tpu.memory_space<vmem>>, %arg7: memref<128x128xf32, #tpu.memory_space<vmem>>, %arg8: memref<1x128xf32, #tpu.memory_space<vmem>>, %arg9: memref<8x128xf32, #tpu.memory_space<vmem>>, %arg10: memref<2x8x128xf32, #tpu.memory_space<vmem>>, %arg11: memref<2x8x128xf32, #tpu.memory_space<vmem>>) attributes {dimension_semantics = [], scalar_prefetch = 0 : i64, scratch_operands = 0 : i64, tpu.core_type = #tpu.core_type<tc>} {
    %c0 = arith.constant 0 : index
    %c0_0 = arith.constant 0 : index
    %0 = vector.load %arg1[%c0, %c0_0] : memref<256x512xf32, #tpu.memory_space<vmem>>, vector<256x512xf32>
    %c0_1 = arith.constant 0 : index
    %c0_2 = arith.constant 0 : index
    %1 = vector.load %arg3[%c0_1, %c0_2] : memref<256x512xf32, #tpu.memory_space<vmem>>, vector<256x512xf32>
    %c0_3 = arith.constant 0 : index
    %c0_4 = arith.constant 0 : index
    %2 = vector.load %arg2[%c0_3, %c0_4] : memref<1x512xf32, #tpu.memory_space<vmem>>, vector<1x512xf32>
    %3 = vector.shape_cast %2 : vector<1x512xf32> to vector<1x512xf32>
    %4 = vector.broadcast %3 : vector<1x512xf32> to vector<8x512xf32>
    %c0_5 = arith.constant 0 : index
    %c0_6 = arith.constant 0 : index
    %5 = vector.load %arg4[%c0_5, %c0_6] : memref<1x512xf32, #tpu.memory_space<vmem>>, vector<1x512xf32>
    %6 = vector.shape_cast %5 : vector<1x512xf32> to vector<1x512xf32>
    %7 = vector.broadcast %6 : vector<1x512xf32> to vector<8x512xf32>
    %cst = arith.constant 0.000000e+00 : f32
    %8 = vector.broadcast %cst : f32 to vector<8x128xf32>
    %c0_i32 = arith.constant 0 : i32
    %9 = arith.index_cast %c0_i32 : i32 to index
    %c0_7 = arith.constant 0 : index
    %c0_8 = arith.constant 0 : index
    %10 = vector.load %arg0[%9, %c0_7, %c0_8] : memref<8x8x128xf32, #tpu.memory_space<vmem>>, vector<1x8x128xf32>
    %11 = vector.shape_cast %10 : vector<1x8x128xf32> to vector<8x128xf32>
    %12 = tpu.concatenate %11, %8 in 1 : vector<8x128xf32>, vector<8x128xf32> -> vector<8x256xf32>
    %cst_9 = arith.constant dense<0.000000e+00> : vector<8x512xf32>
    %13 = tpu.matmul %12, %0, %cst_9 {dimension_numbers = #tpu.dot_dimension_numbers<[1], [0], [0], [1], [0, 0, 1, 1], [], []>} : vector<8x256xf32>, vector<256x512xf32>, vector<8x512xf32> -> vector<8x512xf32>
    %14 = arith.addf %13, %4 : vector<8x512xf32>
    %15 = vector.extract_strided_slice %14 {offsets = [0, 0], sizes = [8, 128], strides = [1, 1]} : vector<8x512xf32> to vector<8x128xf32>
    %16 = arith.negf %15 : vector<8x128xf32>
    %17 = math.exp %16 : vector<8x128xf32>
    %cst_10 = arith.constant 1.000000e+00 : f32
    %18 = vector.broadcast %cst_10 : f32 to vector<8x128xf32>
    %19 = arith.addf %18, %17 : vector<8x128xf32>
    %20 = arith.divf %18, %19 : vector<8x128xf32>
    %21 = vector.extract_strided_slice %14 {offsets = [0, 128], sizes = [8, 128], strides = [1, 1]} : vector<8x512xf32> to vector<8x128xf32>
    %22 = arith.negf %21 : vector<8x128xf32>
    %23 = math.exp %22 : vector<8x128xf32>
    %cst_11 = arith.constant 1.000000e+00 : f32
    %24 = vector.broadcast %cst_11 : f32 to vector<8x128xf32>
    %25 = arith.addf %24, %23 : vector<8x128xf32>
    %26 = arith.divf %24, %25 : vector<8x128xf32>
    %27 = vector.extract_strided_slice %14 {offsets = [0, 256], sizes = [8, 128], strides = [1, 1]} : vector<8x512xf32> to vector<8x128xf32>
    %28 = math.tanh %27 : vector<8x128xf32>
    %29 = vector.extract_strided_slice %14 {offsets = [0, 384], sizes = [8, 128], strides = [1, 1]} : vector<8x512xf32> to vector<8x128xf32>
    %30 = arith.negf %29 : vector<8x128xf32>
    %31 = math.exp %30 : vector<8x128xf32>
    %cst_12 = arith.constant 1.000000e+00 : f32
    %32 = vector.broadcast %cst_12 : f32 to vector<8x128xf32>
    %33 = arith.addf %32, %31 : vector<8x128xf32>
    %34 = arith.divf %32, %33 : vector<8x128xf32>
    %35 = arith.mulf %26, %8 : vector<8x128xf32>
    %36 = arith.mulf %20, %28 : vector<8x128xf32>
    %37 = arith.addf %35, %36 : vector<8x128xf32>
    %38 = math.tanh %37 : vector<8x128xf32>
    %39 = arith.mulf %34, %38 : vector<8x128xf32>
    %40 = tpu.concatenate %39, %8 in 1 : vector<8x128xf32>, vector<8x128xf32> -> vector<8x256xf32>
    %cst_13 = arith.constant dense<0.000000e+00> : vector<8x512xf32>
    %41 = tpu.matmul %40, %1, %cst_13 {dimension_numbers = #tpu.dot_dimension_numbers<[1], [0], [0], [1], [0, 0, 1, 1], [], []>} : vector<8x256xf32>, vector<256x512xf32>, vector<8x512xf32> -> vector<8x512xf32>
    %42 = arith.addf %41, %7 : vector<8x512xf32>
    %43 = vector.extract_strided_slice %42 {offsets = [0, 0], sizes = [8, 128], strides = [1, 1]} : vector<8x512xf32> to vector<8x128xf32>
    %44 = arith.negf %43 : vector<8x128xf32>
    %45 = math.exp %44 : vector<8x128xf32>
    %cst_14 = arith.constant 1.000000e+00 : f32
    %46 = vector.broadcast %cst_14 : f32 to vector<8x128xf32>
    %47 = arith.addf %46, %45 : vector<8x128xf32>
    %48 = arith.divf %46, %47 : vector<8x128xf32>
    %49 = vector.extract_strided_slice %42 {offsets = [0, 128], sizes = [8, 128], strides = [1, 1]} : vector<8x512xf32> to vector<8x128xf32>
    %50 = arith.negf %49 : vector<8x128xf32>
    %51 = math.exp %50 : vector<8x128xf32>
    %cst_15 = arith.constant 1.000000e+00 : f32
    %52 = vector.broadcast %cst_15 : f32 to vector<8x128xf32>
    %53 = arith.addf %52, %51 : vector<8x128xf32>
    %54 = arith.divf %52, %53 : vector<8x128xf32>
    %55 = vector.extract_strided_slice %42 {offsets = [0, 256], sizes = [8, 128], strides = [1, 1]} : vector<8x512xf32> to vector<8x128xf32>
    %56 = math.tanh %55 : vector<8x128xf32>
    %57 = vector.extract_strided_slice %42 {offsets = [0, 384], sizes = [8, 128], strides = [1, 1]} : vector<8x512xf32> to vector<8x128xf32>
    %58 = arith.negf %57 : vector<8x128xf32>
    %59 = math.exp %58 : vector<8x128xf32>
    %cst_16 = arith.constant 1.000000e+00 : f32
    %60 = vector.broadcast %cst_16 : f32 to vector<8x128xf32>
    %61 = arith.addf %60, %59 : vector<8x128xf32>
    %62 = arith.divf %60, %61 : vector<8x128xf32>
    %63 = arith.mulf %54, %8 : vector<8x128xf32>
    %64 = arith.mulf %48, %56 : vector<8x128xf32>
    %65 = arith.addf %63, %64 : vector<8x128xf32>
    %66 = math.tanh %65 : vector<8x128xf32>
    %67 = arith.mulf %62, %66 : vector<8x128xf32>
    %c1_i32 = arith.constant 1 : i32
    %68 = arith.index_cast %c1_i32 : i32 to index
    %c0_17 = arith.constant 0 : index
    %c0_18 = arith.constant 0 : index
    %69 = vector.load %arg0[%68, %c0_17, %c0_18] : memref<8x8x128xf32, #tpu.memory_space<vmem>>, vector<1x8x128xf32>
    %70 = vector.shape_cast %69 : vector<1x8x128xf32> to vector<8x128xf32>
    %71 = tpu.concatenate %70, %39 in 1 : vector<8x128xf32>, vector<8x128xf32> -> vector<8x256xf32>
    %cst_19 = arith.constant dense<0.000000e+00> : vector<8x512xf32>
    %72 = tpu.matmul %71, %0, %cst_19 {dimension_numbers = #tpu.dot_dimension_numbers<[1], [0], [0], [1], [0, 0, 1, 1], [], []>} : vector<8x256xf32>, vector<256x512xf32>, vector<8x512xf32> -> vector<8x512xf32>
    %73 = arith.addf %72, %4 : vector<8x512xf32>
    %74 = vector.extract_strided_slice %73 {offsets = [0, 0], sizes = [8, 128], strides = [1, 1]} : vector<8x512xf32> to vector<8x128xf32>
    %75 = arith.negf %74 : vector<8x128xf32>
    %76 = math.exp %75 : vector<8x128xf32>
    %cst_20 = arith.constant 1.000000e+00 : f32
    %77 = vector.broadcast %cst_20 : f32 to vector<8x128xf32>
    %78 = arith.addf %77, %76 : vector<8x128xf32>
    %79 = arith.divf %77, %78 : vector<8x128xf32>
    %80 = vector.extract_strided_slice %73 {offsets = [0, 128], sizes = [8, 128], strides = [1, 1]} : vector<8x512xf32> to vector<8x128xf32>
    %81 = arith.negf %80 : vector<8x128xf32>
    %82 = math.exp %81 : vector<8x128xf32>
    %cst_21 = arith.constant 1.000000e+00 : f32
    %83 = vector.broadcast %cst_21 : f32 to vector<8x128xf32>
    %84 = arith.addf %83, %82 : vector<8x128xf32>
    %85 = arith.divf %83, %84 : vector<8x128xf32>
    %86 = vector.extract_strided_slice %73 {offsets = [0, 256], sizes = [8, 128], strides = [1, 1]} : vector<8x512xf32> to vector<8x128xf32>
    %87 = math.tanh %86 : vector<8x128xf32>
    %88 = vector.extract_strided_slice %73 {offsets = [0, 384], sizes = [8, 128], strides = [1, 1]} : vector<8x512xf32> to vector<8x128xf32>
    %89 = arith.negf %88 : vector<8x128xf32>
    %90 = math.exp %89 : vector<8x128xf32>
    %cst_22 = arith.constant 1.000000e+00 : f32
    %91 = vector.broadcast %cst_22 : f32 to vector<8x128xf32>
    %92 = arith.addf %91, %90 : vector<8x128xf32>
    %93 = arith.divf %91, %92 : vector<8x128xf32>
    %94 = arith.mulf %85, %37 : vector<8x128xf32>
    %95 = arith.mulf %79, %87 : vector<8x128xf32>
    %96 = arith.addf %94, %95 : vector<8x128xf32>
    %97 = math.tanh %96 : vector<8x128xf32>
    %98 = arith.mulf %93, %97 : vector<8x128xf32>
    %99 = tpu.concatenate %98, %67 in 1 : vector<8x128xf32>, vector<8x128xf32> -> vector<8x256xf32>
    %cst_23 = arith.constant dense<0.000000e+00> : vector<8x512xf32>
    %100 = tpu.matmul %99, %1, %cst_23 {dimension_numbers = #tpu.dot_dimension_numbers<[1], [0], [0], [1], [0, 0, 1, 1], [], []>} : vector<8x256xf32>, vector<256x512xf32>, vector<8x512xf32> -> vector<8x512xf32>
    %101 = arith.addf %100, %7 : vector<8x512xf32>
    %102 = vector.extract_strided_slice %101 {offsets = [0, 0], sizes = [8, 128], strides = [1, 1]} : vector<8x512xf32> to vector<8x128xf32>
    %103 = arith.negf %102 : vector<8x128xf32>
    %104 = math.exp %103 : vector<8x128xf32>
    %cst_24 = arith.constant 1.000000e+00 : f32
    %105 = vector.broadcast %cst_24 : f32 to vector<8x128xf32>
    %106 = arith.addf %105, %104 : vector<8x128xf32>
    %107 = arith.divf %105, %106 : vector<8x128xf32>
    %108 = vector.extract_strided_slice %101 {offsets = [0, 128], sizes = [8, 128], strides = [1, 1]} : vector<8x512xf32> to vector<8x128xf32>
    %109 = arith.negf %108 : vector<8x128xf32>
    %110 = math.exp %109 : vector<8x128xf32>
    %cst_25 = arith.constant 1.000000e+00 : f32
    %111 = vector.broadcast %cst_25 : f32 to vector<8x128xf32>
    %112 = arith.addf %111, %110 : vector<8x128xf32>
    %113 = arith.divf %111, %112 : vector<8x128xf32>
    %114 = vector.extract_strided_slice %101 {offsets = [0, 256], sizes = [8, 128], strides = [1, 1]} : vector<8x512xf32> to vector<8x128xf32>
    %115 = math.tanh %114 : vector<8x128xf32>
    %116 = vector.extract_strided_slice %101 {offsets = [0, 384], sizes = [8, 128], strides = [1, 1]} : vector<8x512xf32> to vector<8x128xf32>
    %117 = arith.negf %116 : vector<8x128xf32>
    %118 = math.exp %117 : vector<8x128xf32>
    %cst_26 = arith.constant 1.000000e+00 : f32
    %119 = vector.broadcast %cst_26 : f32 to vector<8x128xf32>
    %120 = arith.addf %119, %118 : vector<8x128xf32>
    %121 = arith.divf %119, %120 : vector<8x128xf32>
    %122 = arith.mulf %113, %65 : vector<8x128xf32>
    %123 = arith.mulf %107, %115 : vector<8x128xf32>
    %124 = arith.addf %122, %123 : vector<8x128xf32>
    %125 = math.tanh %124 : vector<8x128xf32>
    %126 = arith.mulf %121, %125 : vector<8x128xf32>
    %c2_i32 = arith.constant 2 : i32
    %127 = arith.index_cast %c2_i32 : i32 to index
    %c0_27 = arith.constant 0 : index
    %c0_28 = arith.constant 0 : index
    %128 = vector.load %arg0[%127, %c0_27, %c0_28] : memref<8x8x128xf32, #tpu.memory_space<vmem>>, vector<1x8x128xf32>
    %129 = vector.shape_cast %128 : vector<1x8x128xf32> to vector<8x128xf32>
    %130 = tpu.concatenate %129, %98 in 1 : vector<8x128xf32>, vector<8x128xf32> -> vector<8x256xf32>
    %cst_29 = arith.constant dense<0.000000e+00> : vector<8x512xf32>
    %131 = tpu.matmul %130, %0, %cst_29 {dimension_numbers = #tpu.dot_dimension_numbers<[1], [0], [0], [1], [0, 0, 1, 1], [], []>} : vector<8x256xf32>, vector<256x512xf32>, vector<8x512xf32> -> vector<8x512xf32>
    %132 = arith.addf %131, %4 : vector<8x512xf32>
    %133 = vector.extract_strided_slice %132 {offsets = [0, 0], sizes = [8, 128], strides = [1, 1]} : vector<8x512xf32> to vector<8x128xf32>
    %134 = arith.negf %133 : vector<8x128xf32>
    %135 = math.exp %134 : vector<8x128xf32>
    %cst_30 = arith.constant 1.000000e+00 : f32
    %136 = vector.broadcast %cst_30 : f32 to vector<8x128xf32>
    %137 = arith.addf %136, %135 : vector<8x128xf32>
    %138 = arith.divf %136, %137 : vector<8x128xf32>
    %139 = vector.extract_strided_slice %132 {offsets = [0, 128], sizes = [8, 128], strides = [1, 1]} : vector<8x512xf32> to vector<8x128xf32>
    %140 = arith.negf %139 : vector<8x128xf32>
    %141 = math.exp %140 : vector<8x128xf32>
    %cst_31 = arith.constant 1.000000e+00 : f32
    %142 = vector.broadcast %cst_31 : f32 to vector<8x128xf32>
    %143 = arith.addf %142, %141 : vector<8x128xf32>
    %144 = arith.divf %142, %143 : vector<8x128xf32>
    %145 = vector.extract_strided_slice %132 {offsets = [0, 256], sizes = [8, 128], strides = [1, 1]} : vector<8x512xf32> to vector<8x128xf32>
    %146 = math.tanh %145 : vector<8x128xf32>
    %147 = vector.extract_strided_slice %132 {offsets = [0, 384], sizes = [8, 128], strides = [1, 1]} : vector<8x512xf32> to vector<8x128xf32>
    %148 = arith.negf %147 : vector<8x128xf32>
    %149 = math.exp %148 : vector<8x128xf32>
    %cst_32 = arith.constant 1.000000e+00 : f32
    %150 = vector.broadcast %cst_32 : f32 to vector<8x128xf32>
    %151 = arith.addf %150, %149 : vector<8x128xf32>
    %152 = arith.divf %150, %151 : vector<8x128xf32>
    %153 = arith.mulf %144, %96 : vector<8x128xf32>
    %154 = arith.mulf %138, %146 : vector<8x128xf32>
    %155 = arith.addf %153, %154 : vector<8x128xf32>
    %156 = math.tanh %155 : vector<8x128xf32>
    %157 = arith.mulf %152, %156 : vector<8x128xf32>
    %158 = tpu.concatenate %157, %126 in 1 : vector<8x128xf32>, vector<8x128xf32> -> vector<8x256xf32>
    %cst_33 = arith.constant dense<0.000000e+00> : vector<8x512xf32>
    %159 = tpu.matmul %158, %1, %cst_33 {dimension_numbers = #tpu.dot_dimension_numbers<[1], [0], [0], [1], [0, 0, 1, 1], [], []>} : vector<8x256xf32>, vector<256x512xf32>, vector<8x512xf32> -> vector<8x512xf32>
    %160 = arith.addf %159, %7 : vector<8x512xf32>
    %161 = vector.extract_strided_slice %160 {offsets = [0, 0], sizes = [8, 128], strides = [1, 1]} : vector<8x512xf32> to vector<8x128xf32>
    %162 = arith.negf %161 : vector<8x128xf32>
    %163 = math.exp %162 : vector<8x128xf32>
    %cst_34 = arith.constant 1.000000e+00 : f32
    %164 = vector.broadcast %cst_34 : f32 to vector<8x128xf32>
    %165 = arith.addf %164, %163 : vector<8x128xf32>
    %166 = arith.divf %164, %165 : vector<8x128xf32>
    %167 = vector.extract_strided_slice %160 {offsets = [0, 128], sizes = [8, 128], strides = [1, 1]} : vector<8x512xf32> to vector<8x128xf32>
    %168 = arith.negf %167 : vector<8x128xf32>
    %169 = math.exp %168 : vector<8x128xf32>
    %cst_35 = arith.constant 1.000000e+00 : f32
    %170 = vector.broadcast %cst_35 : f32 to vector<8x128xf32>
    %171 = arith.addf %170, %169 : vector<8x128xf32>
    %172 = arith.divf %170, %171 : vector<8x128xf32>
    %173 = vector.extract_strided_slice %160 {offsets = [0, 256], sizes = [8, 128], strides = [1, 1]} : vector<8x512xf32> to vector<8x128xf32>
    %174 = math.tanh %173 : vector<8x128xf32>
    %175 = vector.extract_strided_slice %160 {offsets = [0, 384], sizes = [8, 128], strides = [1, 1]} : vector<8x512xf32> to vector<8x128xf32>
    %176 = arith.negf %175 : vector<8x128xf32>
    %177 = math.exp %176 : vector<8x128xf32>
    %cst_36 = arith.constant 1.000000e+00 : f32
    %178 = vector.broadcast %cst_36 : f32 to vector<8x128xf32>
    %179 = arith.addf %178, %177 : vector<8x128xf32>
    %180 = arith.divf %178, %179 : vector<8x128xf32>
    %181 = arith.mulf %172, %124 : vector<8x128xf32>
    %182 = arith.mulf %166, %174 : vector<8x128xf32>
    %183 = arith.addf %181, %182 : vector<8x128xf32>
    %184 = math.tanh %183 : vector<8x128xf32>
    %185 = arith.mulf %180, %184 : vector<8x128xf32>
    %c3_i32 = arith.constant 3 : i32
    %186 = arith.index_cast %c3_i32 : i32 to index
    %c0_37 = arith.constant 0 : index
    %c0_38 = arith.constant 0 : index
    %187 = vector.load %arg0[%186, %c0_37, %c0_38] : memref<8x8x128xf32, #tpu.memory_space<vmem>>, vector<1x8x128xf32>
    %188 = vector.shape_cast %187 : vector<1x8x128xf32> to vector<8x128xf32>
    %189 = tpu.concatenate %188, %157 in 1 : vector<8x128xf32>, vector<8x128xf32> -> vector<8x256xf32>
    %cst_39 = arith.constant dense<0.000000e+00> : vector<8x512xf32>
    %190 = tpu.matmul %189, %0, %cst_39 {dimension_numbers = #tpu.dot_dimension_numbers<[1], [0], [0], [1], [0, 0, 1, 1], [], []>} : vector<8x256xf32>, vector<256x512xf32>, vector<8x512xf32> -> vector<8x512xf32>
    %191 = arith.addf %190, %4 : vector<8x512xf32>
    %192 = vector.extract_strided_slice %191 {offsets = [0, 0], sizes = [8, 128], strides = [1, 1]} : vector<8x512xf32> to vector<8x128xf32>
    %193 = arith.negf %192 : vector<8x128xf32>
    %194 = math.exp %193 : vector<8x128xf32>
    %cst_40 = arith.constant 1.000000e+00 : f32
    %195 = vector.broadcast %cst_40 : f32 to vector<8x128xf32>
    %196 = arith.addf %195, %194 : vector<8x128xf32>
    %197 = arith.divf %195, %196 : vector<8x128xf32>
    %198 = vector.extract_strided_slice %191 {offsets = [0, 128], sizes = [8, 128], strides = [1, 1]} : vector<8x512xf32> to vector<8x128xf32>
    %199 = arith.negf %198 : vector<8x128xf32>
    %200 = math.exp %199 : vector<8x128xf32>
    %cst_41 = arith.constant 1.000000e+00 : f32
    %201 = vector.broadcast %cst_41 : f32 to vector<8x128xf32>
    %202 = arith.addf %201, %200 : vector<8x128xf32>
    %203 = arith.divf %201, %202 : vector<8x128xf32>
    %204 = vector.extract_strided_slice %191 {offsets = [0, 256], sizes = [8, 128], strides = [1, 1]} : vector<8x512xf32> to vector<8x128xf32>
    %205 = math.tanh %204 : vector<8x128xf32>
    %206 = vector.extract_strided_slice %191 {offsets = [0, 384], sizes = [8, 128], strides = [1, 1]} : vector<8x512xf32> to vector<8x128xf32>
    %207 = arith.negf %206 : vector<8x128xf32>
    %208 = math.exp %207 : vector<8x128xf32>
    %cst_42 = arith.constant 1.000000e+00 : f32
    %209 = vector.broadcast %cst_42 : f32 to vector<8x128xf32>
    %210 = arith.addf %209, %208 : vector<8x128xf32>
    %211 = arith.divf %209, %210 : vector<8x128xf32>
    %212 = arith.mulf %203, %155 : vector<8x128xf32>
    %213 = arith.mulf %197, %205 : vector<8x128xf32>
    %214 = arith.addf %212, %213 : vector<8x128xf32>
    %215 = math.tanh %214 : vector<8x128xf32>
    %216 = arith.mulf %211, %215 : vector<8x128xf32>
    %217 = tpu.concatenate %216, %185 in 1 : vector<8x128xf32>, vector<8x128xf32> -> vector<8x256xf32>
    %cst_43 = arith.constant dense<0.000000e+00> : vector<8x512xf32>
    %218 = tpu.matmul %217, %1, %cst_43 {dimension_numbers = #tpu.dot_dimension_numbers<[1], [0], [0], [1], [0, 0, 1, 1], [], []>} : vector<8x256xf32>, vector<256x512xf32>, vector<8x512xf32> -> vector<8x512xf32>
    %219 = arith.addf %218, %7 : vector<8x512xf32>
    %220 = vector.extract_strided_slice %219 {offsets = [0, 0], sizes = [8, 128], strides = [1, 1]} : vector<8x512xf32> to vector<8x128xf32>
    %221 = arith.negf %220 : vector<8x128xf32>
    %222 = math.exp %221 : vector<8x128xf32>
    %cst_44 = arith.constant 1.000000e+00 : f32
    %223 = vector.broadcast %cst_44 : f32 to vector<8x128xf32>
    %224 = arith.addf %223, %222 : vector<8x128xf32>
    %225 = arith.divf %223, %224 : vector<8x128xf32>
    %226 = vector.extract_strided_slice %219 {offsets = [0, 128], sizes = [8, 128], strides = [1, 1]} : vector<8x512xf32> to vector<8x128xf32>
    %227 = arith.negf %226 : vector<8x128xf32>
    %228 = math.exp %227 : vector<8x128xf32>
    %cst_45 = arith.constant 1.000000e+00 : f32
    %229 = vector.broadcast %cst_45 : f32 to vector<8x128xf32>
    %230 = arith.addf %229, %228 : vector<8x128xf32>
    %231 = arith.divf %229, %230 : vector<8x128xf32>
    %232 = vector.extract_strided_slice %219 {offsets = [0, 256], sizes = [8, 128], strides = [1, 1]} : vector<8x512xf32> to vector<8x128xf32>
    %233 = math.tanh %232 : vector<8x128xf32>
    %234 = vector.extract_strided_slice %219 {offsets = [0, 384], sizes = [8, 128], strides = [1, 1]} : vector<8x512xf32> to vector<8x128xf32>
    %235 = arith.negf %234 : vector<8x128xf32>
    %236 = math.exp %235 : vector<8x128xf32>
    %cst_46 = arith.constant 1.000000e+00 : f32
    %237 = vector.broadcast %cst_46 : f32 to vector<8x128xf32>
    %238 = arith.addf %237, %236 : vector<8x128xf32>
    %239 = arith.divf %237, %238 : vector<8x128xf32>
    %240 = arith.mulf %231, %183 : vector<8x128xf32>
    %241 = arith.mulf %225, %233 : vector<8x128xf32>
    %242 = arith.addf %240, %241 : vector<8x128xf32>
    %243 = math.tanh %242 : vector<8x128xf32>
    %244 = arith.mulf %239, %243 : vector<8x128xf32>
    %c4_i32 = arith.constant 4 : i32
    %245 = arith.index_cast %c4_i32 : i32 to index
    %c0_47 = arith.constant 0 : index
    %c0_48 = arith.constant 0 : index
    %246 = vector.load %arg0[%245, %c0_47, %c0_48] : memref<8x8x128xf32, #tpu.memory_space<vmem>>, vector<1x8x128xf32>
    %247 = vector.shape_cast %246 : vector<1x8x128xf32> to vector<8x128xf32>
    %248 = tpu.concatenate %247, %216 in 1 : vector<8x128xf32>, vector<8x128xf32> -> vector<8x256xf32>
    %cst_49 = arith.constant dense<0.000000e+00> : vector<8x512xf32>
    %249 = tpu.matmul %248, %0, %cst_49 {dimension_numbers = #tpu.dot_dimension_numbers<[1], [0], [0], [1], [0, 0, 1, 1], [], []>} : vector<8x256xf32>, vector<256x512xf32>, vector<8x512xf32> -> vector<8x512xf32>
    %250 = arith.addf %249, %4 : vector<8x512xf32>
    %251 = vector.extract_strided_slice %250 {offsets = [0, 0], sizes = [8, 128], strides = [1, 1]} : vector<8x512xf32> to vector<8x128xf32>
    %252 = arith.negf %251 : vector<8x128xf32>
    %253 = math.exp %252 : vector<8x128xf32>
    %cst_50 = arith.constant 1.000000e+00 : f32
    %254 = vector.broadcast %cst_50 : f32 to vector<8x128xf32>
    %255 = arith.addf %254, %253 : vector<8x128xf32>
    %256 = arith.divf %254, %255 : vector<8x128xf32>
    %257 = vector.extract_strided_slice %250 {offsets = [0, 128], sizes = [8, 128], strides = [1, 1]} : vector<8x512xf32> to vector<8x128xf32>
    %258 = arith.negf %257 : vector<8x128xf32>
    %259 = math.exp %258 : vector<8x128xf32>
    %cst_51 = arith.constant 1.000000e+00 : f32
    %260 = vector.broadcast %cst_51 : f32 to vector<8x128xf32>
    %261 = arith.addf %260, %259 : vector<8x128xf32>
    %262 = arith.divf %260, %261 : vector<8x128xf32>
    %263 = vector.extract_strided_slice %250 {offsets = [0, 256], sizes = [8, 128], strides = [1, 1]} : vector<8x512xf32> to vector<8x128xf32>
    %264 = math.tanh %263 : vector<8x128xf32>
    %265 = vector.extract_strided_slice %250 {offsets = [0, 384], sizes = [8, 128], strides = [1, 1]} : vector<8x512xf32> to vector<8x128xf32>
    %266 = arith.negf %265 : vector<8x128xf32>
    %267 = math.exp %266 : vector<8x128xf32>
    %cst_52 = arith.constant 1.000000e+00 : f32
    %268 = vector.broadcast %cst_52 : f32 to vector<8x128xf32>
    %269 = arith.addf %268, %267 : vector<8x128xf32>
    %270 = arith.divf %268, %269 : vector<8x128xf32>
    %271 = arith.mulf %262, %214 : vector<8x128xf32>
    %272 = arith.mulf %256, %264 : vector<8x128xf32>
    %273 = arith.addf %271, %272 : vector<8x128xf32>
    %274 = math.tanh %273 : vector<8x128xf32>
    %275 = arith.mulf %270, %274 : vector<8x128xf32>
    %276 = tpu.concatenate %275, %244 in 1 : vector<8x128xf32>, vector<8x128xf32> -> vector<8x256xf32>
    %cst_53 = arith.constant dense<0.000000e+00> : vector<8x512xf32>
    %277 = tpu.matmul %276, %1, %cst_53 {dimension_numbers = #tpu.dot_dimension_numbers<[1], [0], [0], [1], [0, 0, 1, 1], [], []>} : vector<8x256xf32>, vector<256x512xf32>, vector<8x512xf32> -> vector<8x512xf32>
    %278 = arith.addf %277, %7 : vector<8x512xf32>
    %279 = vector.extract_strided_slice %278 {offsets = [0, 0], sizes = [8, 128], strides = [1, 1]} : vector<8x512xf32> to vector<8x128xf32>
    %280 = arith.negf %279 : vector<8x128xf32>
    %281 = math.exp %280 : vector<8x128xf32>
    %cst_54 = arith.constant 1.000000e+00 : f32
    %282 = vector.broadcast %cst_54 : f32 to vector<8x128xf32>
    %283 = arith.addf %282, %281 : vector<8x128xf32>
    %284 = arith.divf %282, %283 : vector<8x128xf32>
    %285 = vector.extract_strided_slice %278 {offsets = [0, 128], sizes = [8, 128], strides = [1, 1]} : vector<8x512xf32> to vector<8x128xf32>
    %286 = arith.negf %285 : vector<8x128xf32>
    %287 = math.exp %286 : vector<8x128xf32>
    %cst_55 = arith.constant 1.000000e+00 : f32
    %288 = vector.broadcast %cst_55 : f32 to vector<8x128xf32>
    %289 = arith.addf %288, %287 : vector<8x128xf32>
    %290 = arith.divf %288, %289 : vector<8x128xf32>
    %291 = vector.extract_strided_slice %278 {offsets = [0, 256], sizes = [8, 128], strides = [1, 1]} : vector<8x512xf32> to vector<8x128xf32>
    %292 = math.tanh %291 : vector<8x128xf32>
    %293 = vector.extract_strided_slice %278 {offsets = [0, 384], sizes = [8, 128], strides = [1, 1]} : vector<8x512xf32> to vector<8x128xf32>
    %294 = arith.negf %293 : vector<8x128xf32>
    %295 = math.exp %294 : vector<8x128xf32>
    %cst_56 = arith.constant 1.000000e+00 : f32
    %296 = vector.broadcast %cst_56 : f32 to vector<8x128xf32>
    %297 = arith.addf %296, %295 : vector<8x128xf32>
    %298 = arith.divf %296, %297 : vector<8x128xf32>
    %299 = arith.mulf %290, %242 : vector<8x128xf32>
    %300 = arith.mulf %284, %292 : vector<8x128xf32>
    %301 = arith.addf %299, %300 : vector<8x128xf32>
    %302 = math.tanh %301 : vector<8x128xf32>
    %303 = arith.mulf %298, %302 : vector<8x128xf32>
    %c5_i32 = arith.constant 5 : i32
    %304 = arith.index_cast %c5_i32 : i32 to index
    %c0_57 = arith.constant 0 : index
    %c0_58 = arith.constant 0 : index
    %305 = vector.load %arg0[%304, %c0_57, %c0_58] : memref<8x8x128xf32, #tpu.memory_space<vmem>>, vector<1x8x128xf32>
    %306 = vector.shape_cast %305 : vector<1x8x128xf32> to vector<8x128xf32>
    %307 = tpu.concatenate %306, %275 in 1 : vector<8x128xf32>, vector<8x128xf32> -> vector<8x256xf32>
    %cst_59 = arith.constant dense<0.000000e+00> : vector<8x512xf32>
    %308 = tpu.matmul %307, %0, %cst_59 {dimension_numbers = #tpu.dot_dimension_numbers<[1], [0], [0], [1], [0, 0, 1, 1], [], []>} : vector<8x256xf32>, vector<256x512xf32>, vector<8x512xf32> -> vector<8x512xf32>
    %309 = arith.addf %308, %4 : vector<8x512xf32>
    %310 = vector.extract_strided_slice %309 {offsets = [0, 0], sizes = [8, 128], strides = [1, 1]} : vector<8x512xf32> to vector<8x128xf32>
    %311 = arith.negf %310 : vector<8x128xf32>
    %312 = math.exp %311 : vector<8x128xf32>
    %cst_60 = arith.constant 1.000000e+00 : f32
    %313 = vector.broadcast %cst_60 : f32 to vector<8x128xf32>
    %314 = arith.addf %313, %312 : vector<8x128xf32>
    %315 = arith.divf %313, %314 : vector<8x128xf32>
    %316 = vector.extract_strided_slice %309 {offsets = [0, 128], sizes = [8, 128], strides = [1, 1]} : vector<8x512xf32> to vector<8x128xf32>
    %317 = arith.negf %316 : vector<8x128xf32>
    %318 = math.exp %317 : vector<8x128xf32>
    %cst_61 = arith.constant 1.000000e+00 : f32
    %319 = vector.broadcast %cst_61 : f32 to vector<8x128xf32>
    %320 = arith.addf %319, %318 : vector<8x128xf32>
    %321 = arith.divf %319, %320 : vector<8x128xf32>
    %322 = vector.extract_strided_slice %309 {offsets = [0, 256], sizes = [8, 128], strides = [1, 1]} : vector<8x512xf32> to vector<8x128xf32>
    %323 = math.tanh %322 : vector<8x128xf32>
    %324 = vector.extract_strided_slice %309 {offsets = [0, 384], sizes = [8, 128], strides = [1, 1]} : vector<8x512xf32> to vector<8x128xf32>
    %325 = arith.negf %324 : vector<8x128xf32>
    %326 = math.exp %325 : vector<8x128xf32>
    %cst_62 = arith.constant 1.000000e+00 : f32
    %327 = vector.broadcast %cst_62 : f32 to vector<8x128xf32>
    %328 = arith.addf %327, %326 : vector<8x128xf32>
    %329 = arith.divf %327, %328 : vector<8x128xf32>
    %330 = arith.mulf %321, %273 : vector<8x128xf32>
    %331 = arith.mulf %315, %323 : vector<8x128xf32>
    %332 = arith.addf %330, %331 : vector<8x128xf32>
    %333 = math.tanh %332 : vector<8x128xf32>
    %334 = arith.mulf %329, %333 : vector<8x128xf32>
    %335 = tpu.concatenate %334, %303 in 1 : vector<8x128xf32>, vector<8x128xf32> -> vector<8x256xf32>
    %cst_63 = arith.constant dense<0.000000e+00> : vector<8x512xf32>
    %336 = tpu.matmul %335, %1, %cst_63 {dimension_numbers = #tpu.dot_dimension_numbers<[1], [0], [0], [1], [0, 0, 1, 1], [], []>} : vector<8x256xf32>, vector<256x512xf32>, vector<8x512xf32> -> vector<8x512xf32>
    %337 = arith.addf %336, %7 : vector<8x512xf32>
    %338 = vector.extract_strided_slice %337 {offsets = [0, 0], sizes = [8, 128], strides = [1, 1]} : vector<8x512xf32> to vector<8x128xf32>
    %339 = arith.negf %338 : vector<8x128xf32>
    %340 = math.exp %339 : vector<8x128xf32>
    %cst_64 = arith.constant 1.000000e+00 : f32
    %341 = vector.broadcast %cst_64 : f32 to vector<8x128xf32>
    %342 = arith.addf %341, %340 : vector<8x128xf32>
    %343 = arith.divf %341, %342 : vector<8x128xf32>
    %344 = vector.extract_strided_slice %337 {offsets = [0, 128], sizes = [8, 128], strides = [1, 1]} : vector<8x512xf32> to vector<8x128xf32>
    %345 = arith.negf %344 : vector<8x128xf32>
    %346 = math.exp %345 : vector<8x128xf32>
    %cst_65 = arith.constant 1.000000e+00 : f32
    %347 = vector.broadcast %cst_65 : f32 to vector<8x128xf32>
    %348 = arith.addf %347, %346 : vector<8x128xf32>
    %349 = arith.divf %347, %348 : vector<8x128xf32>
    %350 = vector.extract_strided_slice %337 {offsets = [0, 256], sizes = [8, 128], strides = [1, 1]} : vector<8x512xf32> to vector<8x128xf32>
    %351 = math.tanh %350 : vector<8x128xf32>
    %352 = vector.extract_strided_slice %337 {offsets = [0, 384], sizes = [8, 128], strides = [1, 1]} : vector<8x512xf32> to vector<8x128xf32>
    %353 = arith.negf %352 : vector<8x128xf32>
    %354 = math.exp %353 : vector<8x128xf32>
    %cst_66 = arith.constant 1.000000e+00 : f32
    %355 = vector.broadcast %cst_66 : f32 to vector<8x128xf32>
    %356 = arith.addf %355, %354 : vector<8x128xf32>
    %357 = arith.divf %355, %356 : vector<8x128xf32>
    %358 = arith.mulf %349, %301 : vector<8x128xf32>
    %359 = arith.mulf %343, %351 : vector<8x128xf32>
    %360 = arith.addf %358, %359 : vector<8x128xf32>
    %361 = math.tanh %360 : vector<8x128xf32>
    %362 = arith.mulf %357, %361 : vector<8x128xf32>
    %c6_i32 = arith.constant 6 : i32
    %363 = arith.index_cast %c6_i32 : i32 to index
    %c0_67 = arith.constant 0 : index
    %c0_68 = arith.constant 0 : index
    %364 = vector.load %arg0[%363, %c0_67, %c0_68] : memref<8x8x128xf32, #tpu.memory_space<vmem>>, vector<1x8x128xf32>
    %365 = vector.shape_cast %364 : vector<1x8x128xf32> to vector<8x128xf32>
    %366 = tpu.concatenate %365, %334 in 1 : vector<8x128xf32>, vector<8x128xf32> -> vector<8x256xf32>
    %cst_69 = arith.constant dense<0.000000e+00> : vector<8x512xf32>
    %367 = tpu.matmul %366, %0, %cst_69 {dimension_numbers = #tpu.dot_dimension_numbers<[1], [0], [0], [1], [0, 0, 1, 1], [], []>} : vector<8x256xf32>, vector<256x512xf32>, vector<8x512xf32> -> vector<8x512xf32>
    %368 = arith.addf %367, %4 : vector<8x512xf32>
    %369 = vector.extract_strided_slice %368 {offsets = [0, 0], sizes = [8, 128], strides = [1, 1]} : vector<8x512xf32> to vector<8x128xf32>
    %370 = arith.negf %369 : vector<8x128xf32>
    %371 = math.exp %370 : vector<8x128xf32>
    %cst_70 = arith.constant 1.000000e+00 : f32
    %372 = vector.broadcast %cst_70 : f32 to vector<8x128xf32>
    %373 = arith.addf %372, %371 : vector<8x128xf32>
    %374 = arith.divf %372, %373 : vector<8x128xf32>
    %375 = vector.extract_strided_slice %368 {offsets = [0, 128], sizes = [8, 128], strides = [1, 1]} : vector<8x512xf32> to vector<8x128xf32>
    %376 = arith.negf %375 : vector<8x128xf32>
    %377 = math.exp %376 : vector<8x128xf32>
    %cst_71 = arith.constant 1.000000e+00 : f32
    %378 = vector.broadcast %cst_71 : f32 to vector<8x128xf32>
    %379 = arith.addf %378, %377 : vector<8x128xf32>
    %380 = arith.divf %378, %379 : vector<8x128xf32>
    %381 = vector.extract_strided_slice %368 {offsets = [0, 256], sizes = [8, 128], strides = [1, 1]} : vector<8x512xf32> to vector<8x128xf32>
    %382 = math.tanh %381 : vector<8x128xf32>
    %383 = vector.extract_strided_slice %368 {offsets = [0, 384], sizes = [8, 128], strides = [1, 1]} : vector<8x512xf32> to vector<8x128xf32>
    %384 = arith.negf %383 : vector<8x128xf32>
    %385 = math.exp %384 : vector<8x128xf32>
    %cst_72 = arith.constant 1.000000e+00 : f32
    %386 = vector.broadcast %cst_72 : f32 to vector<8x128xf32>
    %387 = arith.addf %386, %385 : vector<8x128xf32>
    %388 = arith.divf %386, %387 : vector<8x128xf32>
    %389 = arith.mulf %380, %332 : vector<8x128xf32>
    %390 = arith.mulf %374, %382 : vector<8x128xf32>
    %391 = arith.addf %389, %390 : vector<8x128xf32>
    %392 = math.tanh %391 : vector<8x128xf32>
    %393 = arith.mulf %388, %392 : vector<8x128xf32>
    %394 = tpu.concatenate %393, %362 in 1 : vector<8x128xf32>, vector<8x128xf32> -> vector<8x256xf32>
    %cst_73 = arith.constant dense<0.000000e+00> : vector<8x512xf32>
    %395 = tpu.matmul %394, %1, %cst_73 {dimension_numbers = #tpu.dot_dimension_numbers<[1], [0], [0], [1], [0, 0, 1, 1], [], []>} : vector<8x256xf32>, vector<256x512xf32>, vector<8x512xf32> -> vector<8x512xf32>
    %396 = arith.addf %395, %7 : vector<8x512xf32>
    %397 = vector.extract_strided_slice %396 {offsets = [0, 0], sizes = [8, 128], strides = [1, 1]} : vector<8x512xf32> to vector<8x128xf32>
    %398 = arith.negf %397 : vector<8x128xf32>
    %399 = math.exp %398 : vector<8x128xf32>
    %cst_74 = arith.constant 1.000000e+00 : f32
    %400 = vector.broadcast %cst_74 : f32 to vector<8x128xf32>
    %401 = arith.addf %400, %399 : vector<8x128xf32>
    %402 = arith.divf %400, %401 : vector<8x128xf32>
    %403 = vector.extract_strided_slice %396 {offsets = [0, 128], sizes = [8, 128], strides = [1, 1]} : vector<8x512xf32> to vector<8x128xf32>
    %404 = arith.negf %403 : vector<8x128xf32>
    %405 = math.exp %404 : vector<8x128xf32>
    %cst_75 = arith.constant 1.000000e+00 : f32
    %406 = vector.broadcast %cst_75 : f32 to vector<8x128xf32>
    %407 = arith.addf %406, %405 : vector<8x128xf32>
    %408 = arith.divf %406, %407 : vector<8x128xf32>
    %409 = vector.extract_strided_slice %396 {offsets = [0, 256], sizes = [8, 128], strides = [1, 1]} : vector<8x512xf32> to vector<8x128xf32>
    %410 = math.tanh %409 : vector<8x128xf32>
    %411 = vector.extract_strided_slice %396 {offsets = [0, 384], sizes = [8, 128], strides = [1, 1]} : vector<8x512xf32> to vector<8x128xf32>
    %412 = arith.negf %411 : vector<8x128xf32>
    %413 = math.exp %412 : vector<8x128xf32>
    %cst_76 = arith.constant 1.000000e+00 : f32
    %414 = vector.broadcast %cst_76 : f32 to vector<8x128xf32>
    %415 = arith.addf %414, %413 : vector<8x128xf32>
    %416 = arith.divf %414, %415 : vector<8x128xf32>
    %417 = arith.mulf %408, %360 : vector<8x128xf32>
    %418 = arith.mulf %402, %410 : vector<8x128xf32>
    %419 = arith.addf %417, %418 : vector<8x128xf32>
    %420 = math.tanh %419 : vector<8x128xf32>
    %421 = arith.mulf %416, %420 : vector<8x128xf32>
    %c7_i32 = arith.constant 7 : i32
    %422 = arith.index_cast %c7_i32 : i32 to index
    %c0_77 = arith.constant 0 : index
    %c0_78 = arith.constant 0 : index
    %423 = vector.load %arg0[%422, %c0_77, %c0_78] : memref<8x8x128xf32, #tpu.memory_space<vmem>>, vector<1x8x128xf32>
    %424 = vector.shape_cast %423 : vector<1x8x128xf32> to vector<8x128xf32>
    %425 = tpu.concatenate %424, %393 in 1 : vector<8x128xf32>, vector<8x128xf32> -> vector<8x256xf32>
    %cst_79 = arith.constant dense<0.000000e+00> : vector<8x512xf32>
    %426 = tpu.matmul %425, %0, %cst_79 {dimension_numbers = #tpu.dot_dimension_numbers<[1], [0], [0], [1], [0, 0, 1, 1], [], []>} : vector<8x256xf32>, vector<256x512xf32>, vector<8x512xf32> -> vector<8x512xf32>
    %427 = arith.addf %426, %4 : vector<8x512xf32>
    %428 = vector.extract_strided_slice %427 {offsets = [0, 0], sizes = [8, 128], strides = [1, 1]} : vector<8x512xf32> to vector<8x128xf32>
    %429 = arith.negf %428 : vector<8x128xf32>
    %430 = math.exp %429 : vector<8x128xf32>
    %cst_80 = arith.constant 1.000000e+00 : f32
    %431 = vector.broadcast %cst_80 : f32 to vector<8x128xf32>
    %432 = arith.addf %431, %430 : vector<8x128xf32>
    %433 = arith.divf %431, %432 : vector<8x128xf32>
    %434 = vector.extract_strided_slice %427 {offsets = [0, 128], sizes = [8, 128], strides = [1, 1]} : vector<8x512xf32> to vector<8x128xf32>
    %435 = arith.negf %434 : vector<8x128xf32>
    %436 = math.exp %435 : vector<8x128xf32>
    %cst_81 = arith.constant 1.000000e+00 : f32
    %437 = vector.broadcast %cst_81 : f32 to vector<8x128xf32>
    %438 = arith.addf %437, %436 : vector<8x128xf32>
    %439 = arith.divf %437, %438 : vector<8x128xf32>
    %440 = vector.extract_strided_slice %427 {offsets = [0, 256], sizes = [8, 128], strides = [1, 1]} : vector<8x512xf32> to vector<8x128xf32>
    %441 = math.tanh %440 : vector<8x128xf32>
    %442 = vector.extract_strided_slice %427 {offsets = [0, 384], sizes = [8, 128], strides = [1, 1]} : vector<8x512xf32> to vector<8x128xf32>
    %443 = arith.negf %442 : vector<8x128xf32>
    %444 = math.exp %443 : vector<8x128xf32>
    %cst_82 = arith.constant 1.000000e+00 : f32
    %445 = vector.broadcast %cst_82 : f32 to vector<8x128xf32>
    %446 = arith.addf %445, %444 : vector<8x128xf32>
    %447 = arith.divf %445, %446 : vector<8x128xf32>
    %448 = arith.mulf %439, %391 : vector<8x128xf32>
    %449 = arith.mulf %433, %441 : vector<8x128xf32>
    %450 = arith.addf %448, %449 : vector<8x128xf32>
    %451 = math.tanh %450 : vector<8x128xf32>
    %452 = arith.mulf %447, %451 : vector<8x128xf32>
    %453 = tpu.concatenate %452, %421 in 1 : vector<8x128xf32>, vector<8x128xf32> -> vector<8x256xf32>
    %cst_83 = arith.constant dense<0.000000e+00> : vector<8x512xf32>
    %454 = tpu.matmul %453, %1, %cst_83 {dimension_numbers = #tpu.dot_dimension_numbers<[1], [0], [0], [1], [0, 0, 1, 1], [], []>} : vector<8x256xf32>, vector<256x512xf32>, vector<8x512xf32> -> vector<8x512xf32>
    %455 = arith.addf %454, %7 : vector<8x512xf32>
    %456 = vector.extract_strided_slice %455 {offsets = [0, 0], sizes = [8, 128], strides = [1, 1]} : vector<8x512xf32> to vector<8x128xf32>
    %457 = arith.negf %456 : vector<8x128xf32>
    %458 = math.exp %457 : vector<8x128xf32>
    %cst_84 = arith.constant 1.000000e+00 : f32
    %459 = vector.broadcast %cst_84 : f32 to vector<8x128xf32>
    %460 = arith.addf %459, %458 : vector<8x128xf32>
    %461 = arith.divf %459, %460 : vector<8x128xf32>
    %462 = vector.extract_strided_slice %455 {offsets = [0, 128], sizes = [8, 128], strides = [1, 1]} : vector<8x512xf32> to vector<8x128xf32>
    %463 = arith.negf %462 : vector<8x128xf32>
    %464 = math.exp %463 : vector<8x128xf32>
    %cst_85 = arith.constant 1.000000e+00 : f32
    %465 = vector.broadcast %cst_85 : f32 to vector<8x128xf32>
    %466 = arith.addf %465, %464 : vector<8x128xf32>
    %467 = arith.divf %465, %466 : vector<8x128xf32>
    %468 = vector.extract_strided_slice %455 {offsets = [0, 256], sizes = [8, 128], strides = [1, 1]} : vector<8x512xf32> to vector<8x128xf32>
    %469 = math.tanh %468 : vector<8x128xf32>
    %470 = vector.extract_strided_slice %455 {offsets = [0, 384], sizes = [8, 128], strides = [1, 1]} : vector<8x512xf32> to vector<8x128xf32>
    %471 = arith.negf %470 : vector<8x128xf32>
    %472 = math.exp %471 : vector<8x128xf32>
    %cst_86 = arith.constant 1.000000e+00 : f32
    %473 = vector.broadcast %cst_86 : f32 to vector<8x128xf32>
    %474 = arith.addf %473, %472 : vector<8x128xf32>
    %475 = arith.divf %473, %474 : vector<8x128xf32>
    %476 = arith.mulf %467, %419 : vector<8x128xf32>
    %477 = arith.mulf %461, %469 : vector<8x128xf32>
    %478 = arith.addf %476, %477 : vector<8x128xf32>
    %479 = math.tanh %478 : vector<8x128xf32>
    %480 = arith.mulf %475, %479 : vector<8x128xf32>
    %c8_i32 = arith.constant 8 : i32
    %c0_87 = arith.constant 0 : index
    %c0_88 = arith.constant 0 : index
    %481 = vector.load %arg5[%c0_87, %c0_88] : memref<128x128xf32, #tpu.memory_space<vmem>>, vector<128x128xf32>
    %cst_89 = arith.constant dense<0.000000e+00> : vector<8x128xf32>
    %482 = tpu.matmul %480, %481, %cst_89 {dimension_numbers = #tpu.dot_dimension_numbers<[1], [0], [0], [1], [0, 0, 1, 1], [], []>} : vector<8x128xf32>, vector<128x128xf32>, vector<8x128xf32> -> vector<8x128xf32>
    %c0_90 = arith.constant 0 : index
    %c0_91 = arith.constant 0 : index
    %483 = vector.load %arg6[%c0_90, %c0_91] : memref<1x128xf32, #tpu.memory_space<vmem>>, vector<1x128xf32>
    %484 = vector.broadcast %483 : vector<1x128xf32> to vector<8x128xf32>
    %485 = arith.addf %482, %484 : vector<8x128xf32>
    %cst_92 = arith.constant 0.000000e+00 : f32
    %486 = vector.broadcast %cst_92 : f32 to vector<8x128xf32>
    %487 = arith.maximumf %485, %486 : vector<8x128xf32>
    %c0_93 = arith.constant 0 : index
    %c0_94 = arith.constant 0 : index
    %488 = vector.load %arg7[%c0_93, %c0_94] : memref<128x128xf32, #tpu.memory_space<vmem>>, vector<128x128xf32>
    %cst_95 = arith.constant dense<0.000000e+00> : vector<8x128xf32>
    %489 = tpu.matmul %487, %488, %cst_95 {dimension_numbers = #tpu.dot_dimension_numbers<[1], [0], [0], [1], [0, 0, 1, 1], [], []>} : vector<8x128xf32>, vector<128x128xf32>, vector<8x128xf32> -> vector<8x128xf32>
    %c0_96 = arith.constant 0 : index
    %c0_97 = arith.constant 0 : index
    %490 = vector.load %arg8[%c0_96, %c0_97] : memref<1x128xf32, #tpu.memory_space<vmem>>, vector<1x128xf32>
    %491 = vector.broadcast %490 : vector<1x128xf32> to vector<8x128xf32>
    %492 = arith.addf %489, %491 : vector<8x128xf32>
    %c0_98 = arith.constant 0 : index
    %c0_99 = arith.constant 0 : index
    %493 = vector.load %arg9[%c0_98, %c0_99] : memref<8x128xf32, #tpu.memory_space<vmem>>, vector<8x128xf32>
    tpu.vector_store %arg9[%c0_98, %c0_99], %492 {strides = array<i32>} : memref<8x128xf32, #tpu.memory_space<vmem>>, vector<8x128xf32>,
    %c0_100 = arith.constant 0 : index
    %c0_101 = arith.constant 0 : index
    %c0_102 = arith.constant 0 : index
    %494 = vector.load %arg10[%c0_100, %c0_101, %c0_102] : memref<2x8x128xf32, #tpu.memory_space<vmem>>, vector<1x8x128xf32>
    %495 = vector.shape_cast %494 : vector<1x8x128xf32> to vector<8x128xf32>
    %496 = vector.shape_cast %452 : vector<8x128xf32> to vector<1x8x128xf32>
    tpu.vector_store %arg10[%c0_100, %c0_101, %c0_102], %496 {strides = array<i32>} : memref<2x8x128xf32, #tpu.memory_space<vmem>>, vector<1x8x128xf32>,
    %c1 = arith.constant 1 : index
    %c0_103 = arith.constant 0 : index
    %c0_104 = arith.constant 0 : index
    %497 = vector.load %arg10[%c1, %c0_103, %c0_104] : memref<2x8x128xf32, #tpu.memory_space<vmem>>, vector<1x8x128xf32>
    %498 = vector.shape_cast %497 : vector<1x8x128xf32> to vector<8x128xf32>
    %499 = vector.shape_cast %480 : vector<8x128xf32> to vector<1x8x128xf32>
    tpu.vector_store %arg10[%c1, %c0_103, %c0_104], %499 {strides = array<i32>} : memref<2x8x128xf32, #tpu.memory_space<vmem>>, vector<1x8x128xf32>,
    %c0_105 = arith.constant 0 : index
    %c0_106 = arith.constant 0 : index
    %c0_107 = arith.constant 0 : index
    %500 = vector.load %arg11[%c0_105, %c0_106, %c0_107] : memref<2x8x128xf32, #tpu.memory_space<vmem>>, vector<1x8x128xf32>
    %501 = vector.shape_cast %500 : vector<1x8x128xf32> to vector<8x128xf32>
    %502 = vector.shape_cast %450 : vector<8x128xf32> to vector<1x8x128xf32>
    tpu.vector_store %arg11[%c0_105, %c0_106, %c0_107], %502 {strides = array<i32>} : memref<2x8x128xf32, #tpu.memory_space<vmem>>, vector<1x8x128xf32>,
    %c1_108 = arith.constant 1 : index
    %c0_109 = arith.constant 0 : index
    %c0_110 = arith.constant 0 : index
    %503 = vector.load %arg11[%c1_108, %c0_109, %c0_110] : memref<2x8x128xf32, #tpu.memory_space<vmem>>, vector<1x8x128xf32>
    %504 = vector.shape_cast %503 : vector<1x8x128xf32> to vector<8x128xf32>
    %505 = vector.shape_cast %478 : vector<8x128xf32> to vector<1x8x128xf32>
    tpu.vector_store %arg11[%c1_108, %c0_109, %c0_110], %505 {strides = array<i32>} : memref<2x8x128xf32, #tpu.memory_space<vmem>>, vector<1x8x128xf32>,
    return
  }
}

</mosaic_0001>

<llo_original>
// kernel: lstm_classification_forward.1
$region0: #{lstm_classification_forward.1}
  #allocation0 [shape = 'u32[]', space=smem, size = 0x4, offset = 0x4, fixed_abs, tag = 'smem constant byte address 0x4 - core index']
  #allocation1 [shape = 'u32[144,128]{1,0:T(1,128)}', space=vmem, size = 0x12000, scoped, tag = 'internal scratch']
  %s0 = inlined_call_operand.vmem [shape: f32[8,8,128], index: 0, kind: input, shape index: {}]
  %s1 = inlined_call_operand.vmem [shape: f32[256,512], index: 1, kind: input, shape index: {}]
  %s2 = inlined_call_operand.vmem [shape: f32[1,512], index: 2, kind: input, shape index: {}]
  %s3 = inlined_call_operand.vmem [shape: f32[256,512], index: 3, kind: input, shape index: {}]
  %s4 = inlined_call_operand.vmem [shape: f32[1,512], index: 4, kind: input, shape index: {}]
  %s5 = inlined_call_operand.vmem [shape: f32[128,128], index: 5, kind: input, shape index: {}]
  %s6 = inlined_call_operand.vmem [shape: f32[1,128], index: 6, kind: input, shape index: {}]
  %s7 = inlined_call_operand.vmem [shape: f32[128,128], index: 7, kind: input, shape index: {}]
  %s8 = inlined_call_operand.vmem [shape: f32[1,128], index: 8, kind: input, shape index: {}]
  %s9 = inlined_call_operand.vmem [shape: f32[8,128], index: 9, kind: output, shape index: {0}]
  %s10 = inlined_call_operand.vmem [shape: f32[2,8,128], index: 10, kind: output, shape index: {1}]
  %s11 = inlined_call_operand.vmem [shape: f32[2,8,128], index: 11, kind: output, shape index: {2}]
  %12 = xla_tuple %s9, %s10, %s11
  %s13 = sld [smem:[#allocation0]]
  $region62: #{lstm_classification_forward.1} parent=0
    _
  %s15 = ssub.s32 1, %s13
  %s16 = scalar_select 0, %s15, %s13
  // Predicated region
  $region2: #{lstm_classification_forward.1} parent=0 // pred_check
    _
  $region3: #{lstm_classification_forward.1} parent=0 // pred_check_branch
    %18 = sbr.rel (0) target = $region5
  $region4: #{lstm_classification_forward.1} parent=0 // pred_region
    _
  $region5: #{lstm_classification_forward.1} parent=0 // pred_fallthru
    _
  // Predicated region
  $region6: #{lstm_classification_forward.1} parent=0 // pred_check
    _
  $region7: #{lstm_classification_forward.1} parent=0 // pred_check_branch
    %20 = sbr.rel (0) target = $region9
  $region8: #{lstm_classification_forward.1} parent=0 // pred_region
    _
  $region9: #{lstm_classification_forward.1} parent=0 // pred_fallthru
    _
  // Predicated region
  $region10: #{lstm_classification_forward.1} parent=0 // pred_check
    _
  $region11: #{lstm_classification_forward.1} parent=0 // pred_check_branch
    %22 = sbr.rel (0) target = $region13
  $region12: #{lstm_classification_forward.1} parent=0 // pred_region
    _
  $region13: #{lstm_classification_forward.1} parent=0 // pred_fallthru
    _
  // Predicated region
  $region14: #{lstm_classification_forward.1} parent=0 // pred_check
    _
  $region15: #{lstm_classification_forward.1} parent=0 // pred_check_branch
    %24 = sbr.rel (0) target = $region17
  $region16: #{lstm_classification_forward.1} parent=0 // pred_region
    _
  $region17: #{lstm_classification_forward.1} parent=0 // pred_fallthru
    _
  // Predicated region
  $region18: #{lstm_classification_forward.1} parent=0 // pred_check
    _
  $region19: #{lstm_classification_forward.1} parent=0 // pred_check_branch
    %26 = sbr.rel (0) target = $region21
  $region20: #{lstm_classification_forward.1} parent=0 // pred_region
    _
  $region21: #{lstm_classification_forward.1} parent=0 // pred_fallthru
    _
  // Predicated region
  $region22: #{lstm_classification_forward.1} parent=0 // pred_check
    _
  $region23: #{lstm_classification_forward.1} parent=0 // pred_check_branch
    %28 = sbr.rel (0) target = $region25
  $region24: #{lstm_classification_forward.1} parent=0 // pred_region
    _
  $region25: #{lstm_classification_forward.1} parent=0 // pred_fallthru
    _
  // Predicated region
  $region26: #{lstm_classification_forward.1} parent=0 // pred_check
    _
  $region27: #{lstm_classification_forward.1} parent=0 // pred_check_branch
    %30 = sbr.rel (0) target = $region29
  $region28: #{lstm_classification_forward.1} parent=0 // pred_region
    _
  $region29: #{lstm_classification_forward.1} parent=0 // pred_fallthru
    _
  // Predicated region
  $region30: #{lstm_classification_forward.1} parent=0 // pred_check
    _
  $region31: #{lstm_classification_forward.1} parent=0 // pred_check_branch
    %32 = sbr.rel (0) target = $region33
  $region32: #{lstm_classification_forward.1} parent=0 // pred_region
    _
  $region33: #{lstm_classification_forward.1} parent=0 // pred_fallthru
    _
  // Predicated region
  $region34: #{lstm_classification_forward.1} parent=0 // pred_check
    _
  $region35: #{lstm_classification_forward.1} parent=0 // pred_check_branch
    %34 = sbr.rel (0) target = $region37
  $region36: #{lstm_classification_forward.1} parent=0 // pred_region
    _
  $region37: #{lstm_classification_forward.1} parent=0 // pred_fallthru
    _
  %v35 = vld [vmem:[%s1] sm:$0xff]
  %v36 = vld [vmem:[%s1 + $0x8] sm:$0xff]
  %v37 = vld [vmem:[%s1 + $0x10] sm:$0xff]
  %v38 = vld [vmem:[%s1 + $0x18] sm:$0xff]
  %v39 = vld [vmem:[%s1 + $0x20] sm:$0xff]
  %v40 = vld [vmem:[%s1 + $0x28] sm:$0xff]
  %v41 = vld [vmem:[%s1 + $0x30] sm:$0xff]
  %v42 = vld [vmem:[%s1 + $0x38] sm:$0xff]
  %v43 = vld [vmem:[%s1 + $0x40] sm:$0xff]
  %v44 = vld [vmem:[%s1 + $0x48] sm:$0xff]
  %v45 = vld [vmem:[%s1 + $0x50] sm:$0xff]
  %v46 = vld [vmem:[%s1 + $0x58] sm:$0xff]
  %v47 = vld [vmem:[%s1 + $0x60] sm:$0xff]
  %v48 = vld [vmem:[%s1 + $0x68] sm:$0xff]
  %v49 = vld [vmem:[%s1 + $0x70] sm:$0xff]
  %v50 = vld [vmem:[%s1 + $0x78] sm:$0xff]
  %v51 = vld [vmem:[%s1 + $0x80] sm:$0xff]
  %v52 = vld [vmem:[%s1 + $0x88] sm:$0xff]
  %v53 = vld [vmem:[%s1 + $0x90] sm:$0xff]
  %v54 = vld [vmem:[%s1 + $0x98] sm:$0xff]
  %v55 = vld [vmem:[%s1 + $0xa0] sm:$0xff]
  %v56 = vld [vmem:[%s1 + $0xa8] sm:$0xff]
  %v57 = vld [vmem:[%s1 + $0xb0] sm:$0xff]
  %v58 = vld [vmem:[%s1 + $0xb8] sm:$0xff]
  %v59 = vld [vmem:[%s1 + $0xc0] sm:$0xff]
  %v60 = vld [vmem:[%s1 + $0xc8] sm:$0xff]
  %v61 = vld [vmem:[%s1 + $0xd0] sm:$0xff]
  %v62 = vld [vmem:[%s1 + $0xd8] sm:$0xff]
  %v63 = vld [vmem:[%s1 + $0xe0] sm:$0xff]
  %v64 = vld [vmem:[%s1 + $0xe8] sm:$0xff]
  %v65 = vld [vmem:[%s1 + $0xf0] sm:$0xff]
  %v66 = vld [vmem:[%s1 + $0xf8] sm:$0xff]
  %v67 = vld [vmem:[%s1 + $0x100] sm:$0xff]
  %v68 = vld [vmem:[%s1 + $0x108] sm:$0xff]
  %v69 = vld [vmem:[%s1 + $0x110] sm:$0xff]
  %v70 = vld [vmem:[%s1 + $0x118] sm:$0xff]
  %v71 = vld [vmem:[%s1 + $0x120] sm:$0xff]
  %v72 = vld [vmem:[%s1 + $0x128] sm:$0xff]
  %v73 = vld [vmem:[%s1 + $0x130] sm:$0xff]
  %v74 = vld [vmem:[%s1 + $0x138] sm:$0xff]
  %v75 = vld [vmem:[%s1 + $0x140] sm:$0xff]
  %v76 = vld [vmem:[%s1 + $0x148] sm:$0xff]
  %v77 = vld [vmem:[%s1 + $0x150] sm:$0xff]
  %v78 = vld [vmem:[%s1 + $0x158] sm:$0xff]
  %v79 = vld [vmem:[%s1 + $0x160] sm:$0xff]
  %v80 = vld [vmem:[%s1 + $0x168] sm:$0xff]
  %v81 = vld [vmem:[%s1 + $0x170] sm:$0xff]
  %v82 = vld [vmem:[%s1 + $0x178] sm:$0xff]
  %v83 = vld [vmem:[%s1 + $0x180] sm:$0xff]
  %v84 = vld [vmem:[%s1 + $0x188] sm:$0xff]
  %v85 = vld [vmem:[%s1 + $0x190] sm:$0xff]
  %v86 = vld [vmem:[%s1 + $0x198] sm:$0xff]
  %v87 = vld [vmem:[%s1 + $0x1a0] sm:$0xff]
  %v88 = vld [vmem:[%s1 + $0x1a8] sm:$0xff]
  %v89 = vld [vmem:[%s1 + $0x1b0] sm:$0xff]
  %v90 = vld [vmem:[%s1 + $0x1b8] sm:$0xff]
  %v91 = vld [vmem:[%s1 + $0x1c0] sm:$0xff]
  %v92 = vld [vmem:[%s1 + $0x1c8] sm:$0xff]
  %v93 = vld [vmem:[%s1 + $0x1d0] sm:$0xff]
  %v94 = vld [vmem:[%s1 + $0x1d8] sm:$0xff]
  %v95 = vld [vmem:[%s1 + $0x1e0] sm:$0xff]
  %v96 = vld [vmem:[%s1 + $0x1e8] sm:$0xff]
  %v97 = vld [vmem:[%s1 + $0x1f0] sm:$0xff]
  %v98 = vld [vmem:[%s1 + $0x1f8] sm:$0xff]
  %v99 = vld [vmem:[%s1 + $0x200] sm:$0xff]
  %v100 = vld [vmem:[%s1 + $0x208] sm:$0xff]
  %v101 = vld [vmem:[%s1 + $0x210] sm:$0xff]
  %v102 = vld [vmem:[%s1 + $0x218] sm:$0xff]
  %v103 = vld [vmem:[%s1 + $0x220] sm:$0xff]
  %v104 = vld [vmem:[%s1 + $0x228] sm:$0xff]
  %v105 = vld [vmem:[%s1 + $0x230] sm:$0xff]
  %v106 = vld [vmem:[%s1 + $0x238] sm:$0xff]
  %v107 = vld [vmem:[%s1 + $0x240] sm:$0xff]
  %v108 = vld [vmem:[%s1 + $0x248] sm:$0xff]
  %v109 = vld [vmem:[%s1 + $0x250] sm:$0xff]
  %v110 = vld [vmem:[%s1 + $0x258] sm:$0xff]
  %v111 = vld [vmem:[%s1 + $0x260] sm:$0xff]
  %v112 = vld [vmem:[%s1 + $0x268] sm:$0xff]
  %v113 = vld [vmem:[%s1 + $0x270] sm:$0xff]
  %v114 = vld [vmem:[%s1 + $0x278] sm:$0xff]
  %v115 = vld [vmem:[%s1 + $0x280] sm:$0xff]
  %v116 = vld [vmem:[%s1 + $0x288] sm:$0xff]
  %v117 = vld [vmem:[%s1 + $0x290] sm:$0xff]
  %v118 = vld [vmem:[%s1 + $0x298] sm:$0xff]
  %v119 = vld [vmem:[%s1 + $0x2a0] sm:$0xff]
  %v120 = vld [vmem:[%s1 + $0x2a8] sm:$0xff]
  %v121 = vld [vmem:[%s1 + $0x2b0] sm:$0xff]
  %v122 = vld [vmem:[%s1 + $0x2b8] sm:$0xff]
  %v123 = vld [vmem:[%s1 + $0x2c0] sm:$0xff]
  %v124 = vld [vmem:[%s1 + $0x2c8] sm:$0xff]
  %v125 = vld [vmem:[%s1 + $0x2d0] sm:$0xff]
  %v126 = vld [vmem:[%s1 + $0x2d8] sm:$0xff]
  %v127 = vld [vmem:[%s1 + $0x2e0] sm:$0xff]
  %v128 = vld [vmem:[%s1 + $0x2e8] sm:$0xff]
  %v129 = vld [vmem:[%s1 + $0x2f0] sm:$0xff]
  %v130 = vld [vmem:[%s1 + $0x2f8] sm:$0xff]
  %v131 = vld [vmem:[%s1 + $0x300] sm:$0xff]
  %v132 = vld [vmem:[%s1 + $0x308] sm:$0xff]
  %v133 = vld [vmem:[%s1 + $0x310] sm:$0xff]
  %v134 = vld [vmem:[%s1 + $0x318] sm:$0xff]
  %v135 = vld [vmem:[%s1 + $0x320] sm:$0xff]
  %v136 = vld [vmem:[%s1 + $0x328] sm:$0xff]
  %v137 = vld [vmem:[%s1 + $0x330] sm:$0xff]
  %v138 = vld [vmem:[%s1 + $0x338] sm:$0xff]
  %v139 = vld [vmem:[%s1 + $0x340] sm:$0xff]
  %v140 = vld [vmem:[%s1 + $0x348] sm:$0xff]
  %v141 = vld [vmem:[%s1 + $0x350] sm:$0xff]
  %v142 = vld [vmem:[%s1 + $0x358] sm:$0xff]
  %v143 = vld [vmem:[%s1 + $0x360] sm:$0xff]
  %v144 = vld [vmem:[%s1 + $0x368] sm:$0xff]
  %v145 = vld [vmem:[%s1 + $0x370] sm:$0xff]
  %v146 = vld [vmem:[%s1 + $0x378] sm:$0xff]
  %v147 = vld [vmem:[%s1 + $0x380] sm:$0xff]
  %v148 = vld [vmem:[%s1 + $0x388] sm:$0xff]
  %v149 = vld [vmem:[%s1 + $0x390] sm:$0xff]
  %v150 = vld [vmem:[%s1 + $0x398] sm:$0xff]
  %v151 = vld [vmem:[%s1 + $0x3a0] sm:$0xff]
  %v152 = vld [vmem:[%s1 + $0x3a8] sm:$0xff]
  %v153 = vld [vmem:[%s1 + $0x3b0] sm:$0xff]
  %v154 = vld [vmem:[%s1 + $0x3b8] sm:$0xff]
  %v155 = vld [vmem:[%s1 + $0x3c0] sm:$0xff]
  %v156 = vld [vmem:[%s1 + $0x3c8] sm:$0xff]
  %v157 = vld [vmem:[%s1 + $0x3d0] sm:$0xff]
  %v158 = vld [vmem:[%s1 + $0x3d8] sm:$0xff]
  %v159 = vld [vmem:[%s1 + $0x3e0] sm:$0xff]
  %v160 = vld [vmem:[%s1 + $0x3e8] sm:$0xff]
  %v161 = vld [vmem:[%s1 + $0x3f0] sm:$0xff]
  %v162 = vld [vmem:[%s1 + $0x3f8] sm:$0xff]
  %v163 = vld [vmem:[%s3] sm:$0xff]
  %v164 = vld [vmem:[%s3 + $0x8] sm:$0xff]
  %v165 = vld [vmem:[%s3 + $0x10] sm:$0xff]
  %v166 = vld [vmem:[%s3 + $0x18] sm:$0xff]
  %v167 = vld [vmem:[%s3 + $0x20] sm:$0xff]
  %v168 = vld [vmem:[%s3 + $0x28] sm:$0xff]
  %v169 = vld [vmem:[%s3 + $0x30] sm:$0xff]
  %v170 = vld [vmem:[%s3 + $0x38] sm:$0xff]
  %v171 = vld [vmem:[%s3 + $0x40] sm:$0xff]
  %v172 = vld [vmem:[%s3 + $0x48] sm:$0xff]
  %v173 = vld [vmem:[%s3 + $0x50] sm:$0xff]
  %v174 = vld [vmem:[%s3 + $0x58] sm:$0xff]
  %v175 = vld [vmem:[%s3 + $0x60] sm:$0xff]
  %v176 = vld [vmem:[%s3 + $0x68] sm:$0xff]
  %v177 = vld [vmem:[%s3 + $0x70] sm:$0xff]
  %v178 = vld [vmem:[%s3 + $0x78] sm:$0xff]
  %v179 = vld [vmem:[%s3 + $0x80] sm:$0xff]
  %v180 = vld [vmem:[%s3 + $0x88] sm:$0xff]
  %v181 = vld [vmem:[%s3 + $0x90] sm:$0xff]
  %v182 = vld [vmem:[%s3 + $0x98] sm:$0xff]
  %v183 = vld [vmem:[%s3 + $0xa0] sm:$0xff]
  %v184 = vld [vmem:[%s3 + $0xa8] sm:$0xff]
  %v185 = vld [vmem:[%s3 + $0xb0] sm:$0xff]
  %v186 = vld [vmem:[%s3 + $0xb8] sm:$0xff]
  %v187 = vld [vmem:[%s3 + $0xc0] sm:$0xff]
  %v188 = vld [vmem:[%s3 + $0xc8] sm:$0xff]
  %v189 = vld [vmem:[%s3 + $0xd0] sm:$0xff]
  %v190 = vld [vmem:[%s3 + $0xd8] sm:$0xff]
  %v191 = vld [vmem:[%s3 + $0xe0] sm:$0xff]
  %v192 = vld [vmem:[%s3 + $0xe8] sm:$0xff]
  %v193 = vld [vmem:[%s3 + $0xf0] sm:$0xff]
  %v194 = vld [vmem:[%s3 + $0xf8] sm:$0xff]
  %v195 = vld [vmem:[%s3 + $0x100] sm:$0xff]
  %v196 = vld [vmem:[%s3 + $0x108] sm:$0xff]
  %v197 = vld [vmem:[%s3 + $0x110] sm:$0xff]
  %v198 = vld [vmem:[%s3 + $0x118] sm:$0xff]
  %v199 = vld [vmem:[%s3 + $0x120] sm:$0xff]
  %v200 = vld [vmem:[%s3 + $0x128] sm:$0xff]
  %v201 = vld [vmem:[%s3 + $0x130] sm:$0xff]
  %v202 = vld [vmem:[%s3 + $0x138] sm:$0xff]
  %v203 = vld [vmem:[%s3 + $0x140] sm:$0xff]
  %v204 = vld [vmem:[%s3 + $0x148] sm:$0xff]
  %v205 = vld [vmem:[%s3 + $0x150] sm:$0xff]
  %v206 = vld [vmem:[%s3 + $0x158] sm:$0xff]
  %v207 = vld [vmem:[%s3 + $0x160] sm:$0xff]
  %v208 = vld [vmem:[%s3 + $0x168] sm:$0xff]
  %v209 = vld [vmem:[%s3 + $0x170] sm:$0xff]
  %v210 = vld [vmem:[%s3 + $0x178] sm:$0xff]
  %v211 = vld [vmem:[%s3 + $0x180] sm:$0xff]
  %v212 = vld [vmem:[%s3 + $0x188] sm:$0xff]
  %v213 = vld [vmem:[%s3 + $0x190] sm:$0xff]
  %v214 = vld [vmem:[%s3 + $0x198] sm:$0xff]
  %v215 = vld [vmem:[%s3 + $0x1a0] sm:$0xff]
  %v216 = vld [vmem:[%s3 + $0x1a8] sm:$0xff]
  %v217 = vld [vmem:[%s3 + $0x1b0] sm:$0xff]
  %v218 = vld [vmem:[%s3 + $0x1b8] sm:$0xff]
  %v219 = vld [vmem:[%s3 + $0x1c0] sm:$0xff]
  %v220 = vld [vmem:[%s3 + $0x1c8] sm:$0xff]
  %v221 = vld [vmem:[%s3 + $0x1d0] sm:$0xff]
  %v222 = vld [vmem:[%s3 + $0x1d8] sm:$0xff]
  %v223 = vld [vmem:[%s3 + $0x1e0] sm:$0xff]
  %v224 = vld [vmem:[%s3 + $0x1e8] sm:$0xff]
  %v225 = vld [vmem:[%s3 + $0x1f0] sm:$0xff]
  %v226 = vld [vmem:[%s3 + $0x1f8] sm:$0xff]
  %v227 = vld [vmem:[%s3 + $0x200] sm:$0xff]
  %v228 = vld [vmem:[%s3 + $0x208] sm:$0xff]
  %v229 = vld [vmem:[%s3 + $0x210] sm:$0xff]
  %v230 = vld [vmem:[%s3 + $0x218] sm:$0xff]
  %v231 = vld [vmem:[%s3 + $0x220] sm:$0xff]
  %v232 = vld [vmem:[%s3 + $0x228] sm:$0xff]
  %v233 = vld [vmem:[%s3 + $0x230] sm:$0xff]
  %v234 = vld [vmem:[%s3 + $0x238] sm:$0xff]
  %v235 = vld [vmem:[%s3 + $0x240] sm:$0xff]
  %v236 = vld [vmem:[%s3 + $0x248] sm:$0xff]
  %v237 = vld [vmem:[%s3 + $0x250] sm:$0xff]
  %v238 = vld [vmem:[%s3 + $0x258] sm:$0xff]
  %v239 = vld [vmem:[%s3 + $0x260] sm:$0xff]
  %v240 = vld [vmem:[%s3 + $0x268] sm:$0xff]
  %v241 = vld [vmem:[%s3 + $0x270] sm:$0xff]
  %v242 = vld [vmem:[%s3 + $0x278] sm:$0xff]
  %v243 = vld [vmem:[%s3 + $0x280] sm:$0xff]
  %v244 = vld [vmem:[%s3 + $0x288] sm:$0xff]
  %v245 = vld [vmem:[%s3 + $0x290] sm:$0xff]
  %v246 = vld [vmem:[%s3 + $0x298] sm:$0xff]
  %v247 = vld [vmem:[%s3 + $0x2a0] sm:$0xff]
  %v248 = vld [vmem:[%s3 + $0x2a8] sm:$0xff]
  %v249 = vld [vmem:[%s3 + $0x2b0] sm:$0xff]
  %v250 = vld [vmem:[%s3 + $0x2b8] sm:$0xff]
  %v251 = vld [vmem:[%s3 + $0x2c0] sm:$0xff]
  %v252 = vld [vmem:[%s3 + $0x2c8] sm:$0xff]
  %v253 = vld [vmem:[%s3 + $0x2d0] sm:$0xff]
  %v254 = vld [vmem:[%s3 + $0x2d8] sm:$0xff]
  %v255 = vld [vmem:[%s3 + $0x2e0] sm:$0xff]
  %v256 = vld [vmem:[%s3 + $0x2e8] sm:$0xff]
  %v257 = vld [vmem:[%s3 + $0x2f0] sm:$0xff]
  %v258 = vld [vmem:[%s3 + $0x2f8] sm:$0xff]
  %v259 = vld [vmem:[%s3 + $0x300] sm:$0xff]
  %v260 = vld [vmem:[%s3 + $0x308] sm:$0xff]
  %v261 = vld [vmem:[%s3 + $0x310] sm:$0xff]
  %v262 = vld [vmem:[%s3 + $0x318] sm:$0xff]
  %v263 = vld [vmem:[%s3 + $0x320] sm:$0xff]
  %v264 = vld [vmem:[%s3 + $0x328] sm:$0xff]
  %v265 = vld [vmem:[%s3 + $0x330] sm:$0xff]
  %v266 = vld [vmem:[%s3 + $0x338] sm:$0xff]
  %v267 = vld [vmem:[%s3 + $0x340] sm:$0xff]
  %v268 = vld [vmem:[%s3 + $0x348] sm:$0xff]
  %v269 = vld [vmem:[%s3 + $0x350] sm:$0xff]
  %v270 = vld [vmem:[%s3 + $0x358] sm:$0xff]
  %v271 = vld [vmem:[%s3 + $0x360] sm:$0xff]
  %v272 = vld [vmem:[%s3 + $0x368] sm:$0xff]
  %v273 = vld [vmem:[%s3 + $0x370] sm:$0xff]
  %v274 = vld [vmem:[%s3 + $0x378] sm:$0xff]
  %v275 = vld [vmem:[%s3 + $0x380] sm:$0xff]
  %v276 = vld [vmem:[%s3 + $0x388] sm:$0xff]
  %v277 = vld [vmem:[%s3 + $0x390] sm:$0xff]
  %v278 = vld [vmem:[%s3 + $0x398] sm:$0xff]
  %v279 = vld [vmem:[%s3 + $0x3a0] sm:$0xff]
  %v280 = vld [vmem:[%s3 + $0x3a8] sm:$0xff]
  %v281 = vld [vmem:[%s3 + $0x3b0] sm:$0xff]
  %v282 = vld [vmem:[%s3 + $0x3b8] sm:$0xff]
  %v283 = vld [vmem:[%s3 + $0x3c0] sm:$0xff]
  %v284 = vld [vmem:[%s3 + $0x3c8] sm:$0xff]
  %v285 = vld [vmem:[%s3 + $0x3d0] sm:$0xff]
  %v286 = vld [vmem:[%s3 + $0x3d8] sm:$0xff]
  %v287 = vld [vmem:[%s3 + $0x3e0] sm:$0xff]
  %v288 = vld [vmem:[%s3 + $0x3e8] sm:$0xff]
  %v289 = vld [vmem:[%s3 + $0x3f0] sm:$0xff]
  %v290 = vld [vmem:[%s3 + $0x3f8] sm:$0xff]
  %v291 = vld [vmem:[%s2] sm:$0xf]
  %v293 = vlaneseq
  %v294 = vshrl.u32 %v293, 7
  %v295 = vsub.s32 0, %v294
  %v296 = vrot.slane %v291, %v295
  %v297 = vlaneseq
  %v298 = vshrl.u32 %v297, 7
  %v299 = vsub.s32 1, %v298
  %v300 = vrot.slane %v291, %v299
  %v301 = vlaneseq
  %v302 = vshrl.u32 %v301, 7
  %v303 = vsub.s32 2, %v302
  %v304 = vrot.slane %v291, %v303
  %v305 = vlaneseq
  %v306 = vshrl.u32 %v305, 7
  %v307 = vsub.s32 3, %v306
  %v308 = vrot.slane %v291, %v307
  %v313 = vld [vmem:[%s4] sm:$0xf]
  %v315 = vlaneseq
  %v316 = vshrl.u32 %v315, 7
  %v317 = vsub.s32 0, %v316
  %v318 = vrot.slane %v313, %v317
  %v319 = vlaneseq
  %v320 = vshrl.u32 %v319, 7
  %v321 = vsub.s32 1, %v320
  %v322 = vrot.slane %v313, %v321
  %v323 = vlaneseq
  %v324 = vshrl.u32 %v323, 7
  %v325 = vsub.s32 2, %v324
  %v326 = vrot.slane %v313, %v325
  %v327 = vlaneseq
  %v328 = vshrl.u32 %v327, 7
  %v329 = vsub.s32 3, %v328
  %v330 = vrot.slane %v313, %v329
  %v335 = vld [vmem:[%s0] sm:$0xff]
  %336 = vmatprep.subr.mxu0 %v36
  %337 = vmatpush1.msra.mxu0 %v35
  %338 = vmatprep.subr.mxu0 %v40
  %339 = vmatpush1.msra.mxu0 %v39
  %340 = vmatprep.subr.mxu0 %v44
  %341 = vmatpush1.msra.mxu0 %v43
  %342 = vmatprep.subr.mxu0 %v48
  %343 = vmatpush1.msra.mxu0 %v47
  %344 = vmatprep.subr.mxu0 %v52
  %345 = vmatpush1.msra.mxu0 %v51
  %346 = vmatprep.subr.mxu0 %v56
  %347 = vmatpush1.msra.mxu0 %v55
  %348 = vmatprep.subr.mxu0 %v60
  %349 = vmatpush1.msra.mxu0 %v59
  %350 = vmatprep.subr.mxu0 %v64
  %351 = vmatpush1.msra.mxu0 %v63
  %352 = vmatprep.subr.mxu0 %v68
  %353 = vmatpush1.msra.mxu0 %v67
  %354 = vmatprep.subr.mxu0 %v72
  %355 = vmatpush1.msra.mxu0 %v71
  %356 = vmatprep.subr.mxu0 %v76
  %357 = vmatpush1.msra.mxu0 %v75
  %358 = vmatprep.subr.mxu0 %v80
  %359 = vmatpush1.msra.mxu0 %v79
  %360 = vmatprep.subr.mxu0 %v84
  %361 = vmatpush1.msra.mxu0 %v83
  %362 = vmatprep.subr.mxu0 %v88
  %363 = vmatpush1.msra.mxu0 %v87
  %364 = vmatprep.subr.mxu0 %v92
  %365 = vmatpush1.msra.mxu0 %v91
  %366 = vmatprep.subr.mxu0 %v96
  %367 = vmatpush1.msra.mxu0 %v95
  %368 = vmatprep.subr.mxu0 %v100
  %369 = vmatpush1.msra.mxu0 %v99
  %370 = vmatprep.subr.mxu0 %v104
  %371 = vmatpush1.msra.mxu0 %v103
  %372 = vmatprep.subr.mxu0 %v108
  %373 = vmatpush1.msra.mxu0 %v107
  %374 = vmatprep.subr.mxu0 %v112
  %375 = vmatpush1.msra.mxu0 %v111
  %376 = vmatprep.subr.mxu0 %v116
  %377 = vmatpush1.msra.mxu0 %v115
  %378 = vmatprep.subr.mxu0 %v120
  %379 = vmatpush1.msra.mxu0 %v119
  %380 = vmatprep.subr.mxu0 %v124
  %381 = vmatpush1.msra.mxu0 %v123
  %382 = vmatprep.subr.mxu0 %v128
  %383 = vmatpush1.msra.mxu0 %v127
  %384 = vmatprep.subr.mxu0 %v132
  %385 = vmatpush1.msra.mxu0 %v131
  %386 = vmatprep.subr.mxu0 %v136
  %387 = vmatpush1.msra.mxu0 %v135
  %388 = vmatprep.subr.mxu0 %v140
  %389 = vmatpush1.msra.mxu0 %v139
  %390 = vmatprep.subr.mxu0 %v144
  %391 = vmatpush1.msra.mxu0 %v143
  %392 = vmatprep.subr.mxu0 %v148
  %393 = vmatpush1.msra.mxu0 %v147
  %394 = vmatprep.subr.mxu0 %v152
  %395 = vmatpush1.msra.mxu0 %v151
  %396 = vmatprep.subr.mxu0 %v156
  %397 = vmatpush1.msra.mxu0 %v155
  %398 = vmatprep.subr.mxu0 %v160
  %399 = vmatpush1.msra.mxu0 %v159
  %400 = vmatprep.mubr.f32.mxu0 0.0
  %401 = vmatmul.mubr.f32.gmra.mrb[0].mxu0 %v335
  %v402 = vpop.f32.mrb[0].mxu0
  %v403 = vadd.f32 %v296, %v402
  %v404 = vpop.f32.mrb[0].mxu0
  %v405 = vadd.f32 %v300, %v404
  %406 = vdwg.mxu0
  %407 = vmatprep.subr.mxu0 %v38
  %408 = vmatpush1.msra.mxu0 %v37
  %409 = vmatprep.subr.mxu0 %v42
  %410 = vmatpush1.msra.mxu0 %v41
  %411 = vmatprep.subr.mxu0 %v46
  %412 = vmatpush1.msra.mxu0 %v45
  %413 = vmatprep.subr.mxu0 %v50
  %414 = vmatpush1.msra.mxu0 %v49
  %415 = vmatprep.subr.mxu0 %v54
  %416 = vmatpush1.msra.mxu0 %v53
  %417 = vmatprep.subr.mxu0 %v58
  %418 = vmatpush1.msra.mxu0 %v57
  %419 = vmatprep.subr.mxu0 %v62
  %420 = vmatpush1.msra.mxu0 %v61
  %421 = vmatprep.subr.mxu0 %v66
  %422 = vmatpush1.msra.mxu0 %v65
  %423 = vmatprep.subr.mxu0 %v70
  %424 = vmatpush1.msra.mxu0 %v69
  %425 = vmatprep.subr.mxu0 %v74
  %426 = vmatpush1.msra.mxu0 %v73
  %427 = vmatprep.subr.mxu0 %v78
  %428 = vmatpush1.msra.mxu0 %v77
  %429 = vmatprep.subr.mxu0 %v82
  %430 = vmatpush1.msra.mxu0 %v81
  %431 = vmatprep.subr.mxu0 %v86
  %432 = vmatpush1.msra.mxu0 %v85
  %433 = vmatprep.subr.mxu0 %v90
  %434 = vmatpush1.msra.mxu0 %v89
  %435 = vmatprep.subr.mxu0 %v94
  %436 = vmatpush1.msra.mxu0 %v93
  %437 = vmatprep.subr.mxu0 %v98
  %438 = vmatpush1.msra.mxu0 %v97
  %439 = vmatprep.subr.mxu0 %v102
  %440 = vmatpush1.msra.mxu0 %v101
  %441 = vmatprep.subr.mxu0 %v106
  %442 = vmatpush1.msra.mxu0 %v105
  %443 = vmatprep.subr.mxu0 %v110
  %444 = vmatpush1.msra.mxu0 %v109
  %445 = vmatprep.subr.mxu0 %v114
  %446 = vmatpush1.msra.mxu0 %v113
  %447 = vmatprep.subr.mxu0 %v118
  %448 = vmatpush1.msra.mxu0 %v117
  %449 = vmatprep.subr.mxu0 %v122
  %450 = vmatpush1.msra.mxu0 %v121
  %451 = vmatprep.subr.mxu0 %v126
  %452 = vmatpush1.msra.mxu0 %v125
  %453 = vmatprep.subr.mxu0 %v130
  %454 = vmatpush1.msra.mxu0 %v129
  %455 = vmatprep.subr.mxu0 %v134
  %456 = vmatpush1.msra.mxu0 %v133
  %457 = vmatprep.subr.mxu0 %v138
  %458 = vmatpush1.msra.mxu0 %v137
  %459 = vmatprep.subr.mxu0 %v142
  %460 = vmatpush1.msra.mxu0 %v141
  %461 = vmatprep.subr.mxu0 %v146
  %462 = vmatpush1.msra.mxu0 %v145
  %463 = vmatprep.subr.mxu0 %v150
  %464 = vmatpush1.msra.mxu0 %v149
  %465 = vmatprep.subr.mxu0 %v154
  %466 = vmatpush1.msra.mxu0 %v153
  %467 = vmatprep.subr.mxu0 %v158
  %468 = vmatpush1.msra.mxu0 %v157
  %469 = vmatprep.subr.mxu0 %v162
  %470 = vmatpush1.msra.mxu0 %v161
  %471 = vmatprep.mubr.f32.mxu0 0.0
  %472 = vmatmul.mubr.f32.gmra.mrb[0].mxu0 %v335
  %v473 = vpop.f32.mrb[0].mxu0
  %v474 = vadd.f32 %v304, %v473
  %v475 = vpop.f32.mrb[0].mxu0
  %v476 = vadd.f32 %v308, %v475
  %477 = vdwg.mxu0
  %v478 = vxor.u32 %v403, 2147483648
  %v479 = vmul.f32 %v478, 1.442695
  %v480 = vpow.pop %v479
  %v481 = vadd.f32 %v480, 1.0
  %v482 = vrcp.pop %v481
  %v483 = vmul.f32 1.0, %v482
  %v484 = vxor.u32 %v405, 2147483648
  %v485 = vmul.f32 %v484, 1.442695
  %v486 = vpow.pop %v485
  %v487 = vadd.f32 %v486, 1.0
  %v488 = vrcp.pop %v487
  %v489 = vmul.f32 1.0, %v488
  %v490 = vtanh.pop %v474
  %v491 = vxor.u32 %v476, 2147483648
  %v492 = vmul.f32 %v491, 1.442695
  %v493 = vpow.pop %v492
  %v494 = vadd.f32 %v493, 1.0
  %v495 = vrcp.pop %v494
  %v496 = vmul.f32 1.0, %v495
  %v497 = vmul.f32 %v489, 0.0
  %v498 = vmul.f32 %v483, %v490
  %v499 = vadd.f32 %v497, %v498
  %v500 = vtanh.pop %v499
  %v501 = vmul.f32 %v496, %v500
  %502 = vmatprep.subr.mxu0 %v164
  %503 = vmatpush1.msra.mxu0 %v163
  %504 = vmatprep.subr.mxu0 %v168
  %505 = vmatpush1.msra.mxu0 %v167
  %506 = vmatprep.subr.mxu0 %v172
  %507 = vmatpush1.msra.mxu0 %v171
  %508 = vmatprep.subr.mxu0 %v176
  %509 = vmatpush1.msra.mxu0 %v175
  %510 = vmatprep.subr.mxu0 %v180
  %511 = vmatpush1.msra.mxu0 %v179
  %512 = vmatprep.subr.mxu0 %v184
  %513 = vmatpush1.msra.mxu0 %v183
  %514 = vmatprep.subr.mxu0 %v188
  %515 = vmatpush1.msra.mxu0 %v187
  %516 = vmatprep.subr.mxu0 %v192
  %517 = vmatpush1.msra.mxu0 %v191
  %518 = vmatprep.subr.mxu0 %v196
  %519 = vmatpush1.msra.mxu0 %v195
  %520 = vmatprep.subr.mxu0 %v200
  %521 = vmatpush1.msra.mxu0 %v199
  %522 = vmatprep.subr.mxu0 %v204
  %523 = vmatpush1.msra.mxu0 %v203
  %524 = vmatprep.subr.mxu0 %v208
  %525 = vmatpush1.msra.mxu0 %v207
  %526 = vmatprep.subr.mxu0 %v212
  %527 = vmatpush1.msra.mxu0 %v211
  %528 = vmatprep.subr.mxu0 %v216
  %529 = vmatpush1.msra.mxu0 %v215
  %530 = vmatprep.subr.mxu0 %v220
  %531 = vmatpush1.msra.mxu0 %v219
  %532 = vmatprep.subr.mxu0 %v224
  %533 = vmatpush1.msra.mxu0 %v223
  %534 = vmatprep.subr.mxu0 %v228
  %535 = vmatpush1.msra.mxu0 %v227
  %536 = vmatprep.subr.mxu0 %v232
  %537 = vmatpush1.msra.mxu0 %v231
  %538 = vmatprep.subr.mxu0 %v236
  %539 = vmatpush1.msra.mxu0 %v235
  %540 = vmatprep.subr.mxu0 %v240
  %541 = vmatpush1.msra.mxu0 %v239
  %542 = vmatprep.subr.mxu0 %v244
  %543 = vmatpush1.msra.mxu0 %v243
  %544 = vmatprep.subr.mxu0 %v248
  %545 = vmatpush1.msra.mxu0 %v247
  %546 = vmatprep.subr.mxu0 %v252
  %547 = vmatpush1.msra.mxu0 %v251
  %548 = vmatprep.subr.mxu0 %v256
  %549 = vmatpush1.msra.mxu0 %v255
  %550 = vmatprep.subr.mxu0 %v260
  %551 = vmatpush1.msra.mxu0 %v259
  %552 = vmatprep.subr.mxu0 %v264
  %553 = vmatpush1.msra.mxu0 %v263
  %554 = vmatprep.subr.mxu0 %v268
  %555 = vmatpush1.msra.mxu0 %v267
  %556 = vmatprep.subr.mxu0 %v272
  %557 = vmatpush1.msra.mxu0 %v271
  %558 = vmatprep.subr.mxu0 %v276
  %559 = vmatpush1.msra.mxu0 %v275
  %560 = vmatprep.subr.mxu0 %v280
  %561 = vmatpush1.msra.mxu0 %v279
  %562 = vmatprep.subr.mxu0 %v284
  %563 = vmatpush1.msra.mxu0 %v283
  %564 = vmatprep.subr.mxu0 %v288
  %565 = vmatpush1.msra.mxu0 %v287
  %566 = vmatprep.mubr.f32.mxu0 0.0
  %567 = vmatmul.mubr.f32.gmra.mrb[0].mxu0 %v501
  %v568 = vpop.f32.mrb[0].mxu0
  %v569 = vadd.f32 %v318, %v568
  %v570 = vpop.f32.mrb[0].mxu0
  %v571 = vadd.f32 %v322, %v570
  %572 = vdwg.mxu0
  %573 = vmatprep.subr.mxu0 %v166
  %574 = vmatpush1.msra.mxu0 %v165
  %575 = vmatprep.subr.mxu0 %v170
  %576 = vmatpush1.msra.mxu0 %v169
  %577 = vmatprep.subr.mxu0 %v174
  %578 = vmatpush1.msra.mxu0 %v173
  %579 = vmatprep.subr.mxu0 %v178
  %580 = vmatpush1.msra.mxu0 %v177
  %581 = vmatprep.subr.mxu0 %v182
  %582 = vmatpush1.msra.mxu0 %v181
  %583 = vmatprep.subr.mxu0 %v186
  %584 = vmatpush1.msra.mxu0 %v185
  %585 = vmatprep.subr.mxu0 %v190
  %586 = vmatpush1.msra.mxu0 %v189
  %587 = vmatprep.subr.mxu0 %v194
  %588 = vmatpush1.msra.mxu0 %v193
  %589 = vmatprep.subr.mxu0 %v198
  %590 = vmatpush1.msra.mxu0 %v197
  %591 = vmatprep.subr.mxu0 %v202
  %592 = vmatpush1.msra.mxu0 %v201
  %593 = vmatprep.subr.mxu0 %v206
  %594 = vmatpush1.msra.mxu0 %v205
  %595 = vmatprep.subr.mxu0 %v210
  %596 = vmatpush1.msra.mxu0 %v209
  %597 = vmatprep.subr.mxu0 %v214
  %598 = vmatpush1.msra.mxu0 %v213
  %599 = vmatprep.subr.mxu0 %v218
  %600 = vmatpush1.msra.mxu0 %v217
  %601 = vmatprep.subr.mxu0 %v222
  %602 = vmatpush1.msra.mxu0 %v221
  %603 = vmatprep.subr.mxu0 %v226
  %604 = vmatpush1.msra.mxu0 %v225
  %605 = vmatprep.subr.mxu0 %v230
  %606 = vmatpush1.msra.mxu0 %v229
  %607 = vmatprep.subr.mxu0 %v234
  %608 = vmatpush1.msra.mxu0 %v233
  %609 = vmatprep.subr.mxu0 %v238
  %610 = vmatpush1.msra.mxu0 %v237
  %611 = vmatprep.subr.mxu0 %v242
  %612 = vmatpush1.msra.mxu0 %v241
  %613 = vmatprep.subr.mxu0 %v246
  %614 = vmatpush1.msra.mxu0 %v245
  %615 = vmatprep.subr.mxu0 %v250
  %616 = vmatpush1.msra.mxu0 %v249
  %617 = vmatprep.subr.mxu0 %v254
  %618 = vmatpush1.msra.mxu0 %v253
  %619 = vmatprep.subr.mxu0 %v258
  %620 = vmatpush1.msra.mxu0 %v257
  %621 = vmatprep.subr.mxu0 %v262
  %622 = vmatpush1.msra.mxu0 %v261
  %623 = vmatprep.subr.mxu0 %v266
  %624 = vmatpush1.msra.mxu0 %v265
  %625 = vmatprep.subr.mxu0 %v270
  %626 = vmatpush1.msra.mxu0 %v269
  %627 = vmatprep.subr.mxu0 %v274
  %628 = vmatpush1.msra.mxu0 %v273
  %629 = vmatprep.subr.mxu0 %v278
  %630 = vmatpush1.msra.mxu0 %v277
  %631 = vmatprep.subr.mxu0 %v282
  %632 = vmatpush1.msra.mxu0 %v281
  %633 = vmatprep.subr.mxu0 %v286
  %634 = vmatpush1.msra.mxu0 %v285
  %635 = vmatprep.subr.mxu0 %v290
  %636 = vmatpush1.msra.mxu0 %v289
  %637 = vmatprep.mubr.f32.mxu0 0.0
  %638 = vmatmul.mubr.f32.gmra.mrb[0].mxu0 %v501
  %v639 = vpop.f32.mrb[0].mxu0
  %v640 = vadd.f32 %v326, %v639
  %v641 = vpop.f32.mrb[0].mxu0
  %v642 = vadd.f32 %v330, %v641
  %643 = vdwg.mxu0
  %v644 = vxor.u32 %v569, 2147483648
  %v645 = vmul.f32 %v644, 1.442695
  %v646 = vpow.pop %v645
  %v647 = vadd.f32 %v646, 1.0
  %v648 = vrcp.pop %v647
  %v649 = vmul.f32 1.0, %v648
  %v650 = vxor.u32 %v571, 2147483648
  %v651 = vmul.f32 %v650, 1.442695
  %v652 = vpow.pop %v651
  %v653 = vadd.f32 %v652, 1.0
  %v654 = vrcp.pop %v653
  %v655 = vmul.f32 1.0, %v654
  %v656 = vtanh.pop %v640
  %v657 = vxor.u32 %v642, 2147483648
  %v658 = vmul.f32 %v657, 1.442695
  %v659 = vpow.pop %v658
  %v660 = vadd.f32 %v659, 1.0
  %v661 = vrcp.pop %v660
  %v662 = vmul.f32 1.0, %v661
  %v663 = vmul.f32 %v655, 0.0
  %v664 = vmul.f32 %v649, %v656
  %v665 = vadd.f32 %v663, %v664
  %v666 = vtanh.pop %v665
  %v667 = vmul.f32 %v662, %v666
  %s668 = scalar_lea.vmem %s0, 8
  %v669 = vld [vmem:[%s668] sm:$0xff]
  %670 = vmatprep.subr.mxu0 %v36
  %671 = vmatpush1.msra.mxu0 %v35
  %672 = vmatprep.subr.mxu0 %v40
  %673 = vmatpush1.msra.mxu0 %v39
  %674 = vmatprep.subr.mxu0 %v44
  %675 = vmatpush1.msra.mxu0 %v43
  %676 = vmatprep.subr.mxu0 %v48
  %677 = vmatpush1.msra.mxu0 %v47
  %678 = vmatprep.subr.mxu0 %v52
  %679 = vmatpush1.msra.mxu0 %v51
  %680 = vmatprep.subr.mxu0 %v56
  %681 = vmatpush1.msra.mxu0 %v55
  %682 = vmatprep.subr.mxu0 %v60
  %683 = vmatpush1.msra.mxu0 %v59
  %684 = vmatprep.subr.mxu0 %v64
  %685 = vmatpush1.msra.mxu0 %v63
  %686 = vmatprep.subr.mxu0 %v68
  %687 = vmatpush1.msra.mxu0 %v67
  %688 = vmatprep.subr.mxu0 %v72
  %689 = vmatpush1.msra.mxu0 %v71
  %690 = vmatprep.subr.mxu0 %v76
  %691 = vmatpush1.msra.mxu0 %v75
  %692 = vmatprep.subr.mxu0 %v80
  %693 = vmatpush1.msra.mxu0 %v79
  %694 = vmatprep.subr.mxu0 %v84
  %695 = vmatpush1.msra.mxu0 %v83
  %696 = vmatprep.subr.mxu0 %v88
  %697 = vmatpush1.msra.mxu0 %v87
  %698 = vmatprep.subr.mxu0 %v92
  %699 = vmatpush1.msra.mxu0 %v91
  %700 = vmatprep.subr.mxu0 %v96
  %701 = vmatpush1.msra.mxu0 %v95
  %702 = vmatprep.subr.mxu0 %v100
  %703 = vmatpush1.msra.mxu0 %v99
  %704 = vmatprep.subr.mxu0 %v104
  %705 = vmatpush1.msra.mxu0 %v103
  %706 = vmatprep.subr.mxu0 %v108
  %707 = vmatpush1.msra.mxu0 %v107
  %708 = vmatprep.subr.mxu0 %v112
  %709 = vmatpush1.msra.mxu0 %v111
  %710 = vmatprep.subr.mxu0 %v116
  %711 = vmatpush1.msra.mxu0 %v115
  %712 = vmatprep.subr.mxu0 %v120
  %713 = vmatpush1.msra.mxu0 %v119
  %714 = vmatprep.subr.mxu0 %v124
  %715 = vmatpush1.msra.mxu0 %v123
  %716 = vmatprep.subr.mxu0 %v128
  %717 = vmatpush1.msra.mxu0 %v127
  %718 = vmatprep.subr.mxu0 %v132
  %719 = vmatpush1.msra.mxu0 %v131
  %720 = vmatprep.subr.mxu0 %v136
  %721 = vmatpush1.msra.mxu0 %v135
  %722 = vmatprep.subr.mxu0 %v140
  %723 = vmatpush1.msra.mxu0 %v139
  %724 = vmatprep.subr.mxu0 %v144
  %725 = vmatpush1.msra.mxu0 %v143
  %726 = vmatprep.subr.mxu0 %v148
  %727 = vmatpush1.msra.mxu0 %v147
  %728 = vmatprep.subr.mxu0 %v152
  %729 = vmatpush1.msra.mxu0 %v151
  %730 = vmatprep.subr.mxu0 %v156
  %731 = vmatpush1.msra.mxu0 %v155
  %732 = vmatprep.subr.mxu0 %v160
  %733 = vmatpush1.msra.mxu0 %v159
  %734 = vmatprep.mubr.f32.mxu0 %v501
  %735 = vmatmul.mubr.f32.gmra.mrb[0].mxu0 %v669
  %v736 = vpop.f32.mrb[0].mxu0
  %v737 = vadd.f32 %v296, %v736
  %v738 = vpop.f32.mrb[0].mxu0
  %v739 = vadd.f32 %v300, %v738
  %740 = vdwg.mxu0
  %741 = vmatprep.subr.mxu0 %v38
  %742 = vmatpush1.msra.mxu0 %v37
  %743 = vmatprep.subr.mxu0 %v42
  %744 = vmatpush1.msra.mxu0 %v41
  %745 = vmatprep.subr.mxu0 %v46
  %746 = vmatpush1.msra.mxu0 %v45
  %747 = vmatprep.subr.mxu0 %v50
  %748 = vmatpush1.msra.mxu0 %v49
  %749 = vmatprep.subr.mxu0 %v54
  %750 = vmatpush1.msra.mxu0 %v53
  %751 = vmatprep.subr.mxu0 %v58
  %752 = vmatpush1.msra.mxu0 %v57
  %753 = vmatprep.subr.mxu0 %v62
  %754 = vmatpush1.msra.mxu0 %v61
  %755 = vmatprep.subr.mxu0 %v66
  %756 = vmatpush1.msra.mxu0 %v65
  %757 = vmatprep.subr.mxu0 %v70
  %758 = vmatpush1.msra.mxu0 %v69
  %759 = vmatprep.subr.mxu0 %v74
  %760 = vmatpush1.msra.mxu0 %v73
  %761 = vmatprep.subr.mxu0 %v78
  %762 = vmatpush1.msra.mxu0 %v77
  %763 = vmatprep.subr.mxu0 %v82
  %764 = vmatpush1.msra.mxu0 %v81
  %765 = vmatprep.subr.mxu0 %v86
  %766 = vmatpush1.msra.mxu0 %v85
  %767 = vmatprep.subr.mxu0 %v90
  %768 = vmatpush1.msra.mxu0 %v89
  %769 = vmatprep.subr.mxu0 %v94
  %770 = vmatpush1.msra.mxu0 %v93
  %771 = vmatprep.subr.mxu0 %v98
  %772 = vmatpush1.msra.mxu0 %v97
  %773 = vmatprep.subr.mxu0 %v102
  %774 = vmatpush1.msra.mxu0 %v101
  %775 = vmatprep.subr.mxu0 %v106
  %776 = vmatpush1.msra.mxu0 %v105
  %777 = vmatprep.subr.mxu0 %v110
  %778 = vmatpush1.msra.mxu0 %v109
  %779 = vmatprep.subr.mxu0 %v114
  %780 = vmatpush1.msra.mxu0 %v113
  %781 = vmatprep.subr.mxu0 %v118
  %782 = vmatpush1.msra.mxu0 %v117
  %783 = vmatprep.subr.mxu0 %v122
  %784 = vmatpush1.msra.mxu0 %v121
  %785 = vmatprep.subr.mxu0 %v126
  %786 = vmatpush1.msra.mxu0 %v125
  %787 = vmatprep.subr.mxu0 %v130
  %788 = vmatpush1.msra.mxu0 %v129
  %789 = vmatprep.subr.mxu0 %v134
  %790 = vmatpush1.msra.mxu0 %v133
  %791 = vmatprep.subr.mxu0 %v138
  %792 = vmatpush1.msra.mxu0 %v137
  %793 = vmatprep.subr.mxu0 %v142
  %794 = vmatpush1.msra.mxu0 %v141
  %795 = vmatprep.subr.mxu0 %v146
  %796 = vmatpush1.msra.mxu0 %v145
  %797 = vmatprep.subr.mxu0 %v150
  %798 = vmatpush1.msra.mxu0 %v149
  %799 = vmatprep.subr.mxu0 %v154
  %800 = vmatpush1.msra.mxu0 %v153
  %801 = vmatprep.subr.mxu0 %v158
  %802 = vmatpush1.msra.mxu0 %v157
  %803 = vmatprep.subr.mxu0 %v162
  %804 = vmatpush1.msra.mxu0 %v161
  %805 = vmatprep.mubr.f32.mxu0 %v501
  %806 = vmatmul.mubr.f32.gmra.mrb[0].mxu0 %v669
  %v807 = vpop.f32.mrb[0].mxu0
  %v808 = vadd.f32 %v304, %v807
  %v809 = vpop.f32.mrb[0].mxu0
  %v810 = vadd.f32 %v308, %v809
  %811 = vdwg.mxu0
  %v812 = vxor.u32 %v737, 2147483648
  %v813 = vmul.f32 %v812, 1.442695
  %v814 = vpow.pop %v813
  %v815 = vadd.f32 %v814, 1.0
  %v816 = vrcp.pop %v815
  %v817 = vmul.f32 1.0, %v816
  %v818 = vxor.u32 %v739, 2147483648
  %v819 = vmul.f32 %v818, 1.442695
  %v820 = vpow.pop %v819
  %v821 = vadd.f32 %v820, 1.0
  %v822 = vrcp.pop %v821
  %v823 = vmul.f32 1.0, %v822
  %v824 = vtanh.pop %v808
  %v825 = vxor.u32 %v810, 2147483648
  %v826 = vmul.f32 %v825, 1.442695
  %v827 = vpow.pop %v826
  %v828 = vadd.f32 %v827, 1.0
  %v829 = vrcp.pop %v828
  %v830 = vmul.f32 1.0, %v829
  %v831 = vmul.f32 %v823, %v499
  %v832 = vmul.f32 %v817, %v824
  %v833 = vadd.f32 %v831, %v832
  %v834 = vtanh.pop %v833
  %v835 = vmul.f32 %v830, %v834
  %836 = vmatprep.subr.mxu0 %v164
  %837 = vmatpush1.msra.mxu0 %v163
  %838 = vmatprep.subr.mxu0 %v168
  %839 = vmatpush1.msra.mxu0 %v167
  %840 = vmatprep.subr.mxu0 %v172
  %841 = vmatpush1.msra.mxu0 %v171
  %842 = vmatprep.subr.mxu0 %v176
  %843 = vmatpush1.msra.mxu0 %v175
  %844 = vmatprep.subr.mxu0 %v180
  %845 = vmatpush1.msra.mxu0 %v179
  %846 = vmatprep.subr.mxu0 %v184
  %847 = vmatpush1.msra.mxu0 %v183
  %848 = vmatprep.subr.mxu0 %v188
  %849 = vmatpush1.msra.mxu0 %v187
  %850 = vmatprep.subr.mxu0 %v192
  %851 = vmatpush1.msra.mxu0 %v191
  %852 = vmatprep.subr.mxu0 %v196
  %853 = vmatpush1.msra.mxu0 %v195
  %854 = vmatprep.subr.mxu0 %v200
  %855 = vmatpush1.msra.mxu0 %v199
  %856 = vmatprep.subr.mxu0 %v204
  %857 = vmatpush1.msra.mxu0 %v203
  %858 = vmatprep.subr.mxu0 %v208
  %859 = vmatpush1.msra.mxu0 %v207
  %860 = vmatprep.subr.mxu0 %v212
  %861 = vmatpush1.msra.mxu0 %v211
  %862 = vmatprep.subr.mxu0 %v216
  %863 = vmatpush1.msra.mxu0 %v215
  %864 = vmatprep.subr.mxu0 %v220
  %865 = vmatpush1.msra.mxu0 %v219
  %866 = vmatprep.subr.mxu0 %v224
  %867 = vmatpush1.msra.mxu0 %v223
  %868 = vmatprep.subr.mxu0 %v228
  %869 = vmatpush1.msra.mxu0 %v227
  %870 = vmatprep.subr.mxu0 %v232
  %871 = vmatpush1.msra.mxu0 %v231
  %872 = vmatprep.subr.mxu0 %v236
  %873 = vmatpush1.msra.mxu0 %v235
  %874 = vmatprep.subr.mxu0 %v240
  %875 = vmatpush1.msra.mxu0 %v239
  %876 = vmatprep.subr.mxu0 %v244
  %877 = vmatpush1.msra.mxu0 %v243
  %878 = vmatprep.subr.mxu0 %v248
  %879 = vmatpush1.msra.mxu0 %v247
  %880 = vmatprep.subr.mxu0 %v252
  %881 = vmatpush1.msra.mxu0 %v251
  %882 = vmatprep.subr.mxu0 %v256
  %883 = vmatpush1.msra.mxu0 %v255
  %884 = vmatprep.subr.mxu0 %v260
  %885 = vmatpush1.msra.mxu0 %v259
  %886 = vmatprep.subr.mxu0 %v264
  %887 = vmatpush1.msra.mxu0 %v263
  %888 = vmatprep.subr.mxu0 %v268
  %889 = vmatpush1.msra.mxu0 %v267
  %890 = vmatprep.subr.mxu0 %v272
  %891 = vmatpush1.msra.mxu0 %v271
  %892 = vmatprep.subr.mxu0 %v276
  %893 = vmatpush1.msra.mxu0 %v275
  %894 = vmatprep.subr.mxu0 %v280
  %895 = vmatpush1.msra.mxu0 %v279
  %896 = vmatprep.subr.mxu0 %v284
  %897 = vmatpush1.msra.mxu0 %v283
  %898 = vmatprep.subr.mxu0 %v288
  %899 = vmatpush1.msra.mxu0 %v287
  %900 = vmatprep.mubr.f32.mxu0 %v667
  %901 = vmatmul.mubr.f32.gmra.mrb[0].mxu0 %v835
  %v902 = vpop.f32.mrb[0].mxu0
  %v903 = vadd.f32 %v318, %v902
  %v904 = vpop.f32.mrb[0].mxu0
  %v905 = vadd.f32 %v322, %v904
  %906 = vdwg.mxu0
  %907 = vmatprep.subr.mxu0 %v166
  %908 = vmatpush1.msra.mxu0 %v165
  %909 = vmatprep.subr.mxu0 %v170
  %910 = vmatpush1.msra.mxu0 %v169
  %911 = vmatprep.subr.mxu0 %v174
  %912 = vmatpush1.msra.mxu0 %v173
  %913 = vmatprep.subr.mxu0 %v178
  %914 = vmatpush1.msra.mxu0 %v177
  %915 = vmatprep.subr.mxu0 %v182
  %916 = vmatpush1.msra.mxu0 %v181
  %917 = vmatprep.subr.mxu0 %v186
  %918 = vmatpush1.msra.mxu0 %v185
  %919 = vmatprep.subr.mxu0 %v190
  %920 = vmatpush1.msra.mxu0 %v189
  %921 = vmatprep.subr.mxu0 %v194
  %922 = vmatpush1.msra.mxu0 %v193
  %923 = vmatprep.subr.mxu0 %v198
  %924 = vmatpush1.msra.mxu0 %v197
  %925 = vmatprep.subr.mxu0 %v202
  %926 = vmatpush1.msra.mxu0 %v201
  %927 = vmatprep.subr.mxu0 %v206
  %928 = vmatpush1.msra.mxu0 %v205
  %929 = vmatprep.subr.mxu0 %v210
  %930 = vmatpush1.msra.mxu0 %v209
  %931 = vmatprep.subr.mxu0 %v214
  %932 = vmatpush1.msra.mxu0 %v213
  %933 = vmatprep.subr.mxu0 %v218
  %934 = vmatpush1.msra.mxu0 %v217
  %935 = vmatprep.subr.mxu0 %v222
  %936 = vmatpush1.msra.mxu0 %v221
  %937 = vmatprep.subr.mxu0 %v226
  %938 = vmatpush1.msra.mxu0 %v225
  %939 = vmatprep.subr.mxu0 %v230
  %940 = vmatpush1.msra.mxu0 %v229
  %941 = vmatprep.subr.mxu0 %v234
  %942 = vmatpush1.msra.mxu0 %v233
  %943 = vmatprep.subr.mxu0 %v238
  %944 = vmatpush1.msra.mxu0 %v237
  %945 = vmatprep.subr.mxu0 %v242
  %946 = vmatpush1.msra.mxu0 %v241
  %947 = vmatprep.subr.mxu0 %v246
  %948 = vmatpush1.msra.mxu0 %v245
  %949 = vmatprep.subr.mxu0 %v250
  %950 = vmatpush1.msra.mxu0 %v249
  %951 = vmatprep.subr.mxu0 %v254
  %952 = vmatpush1.msra.mxu0 %v253
  %953 = vmatprep.subr.mxu0 %v258
  %954 = vmatpush1.msra.mxu0 %v257
  %955 = vmatprep.subr.mxu0 %v262
  %956 = vmatpush1.msra.mxu0 %v261
  %957 = vmatprep.subr.mxu0 %v266
  %958 = vmatpush1.msra.mxu0 %v265
  %959 = vmatprep.subr.mxu0 %v270
  %960 = vmatpush1.msra.mxu0 %v269
  %961 = vmatprep.subr.mxu0 %v274
  %962 = vmatpush1.msra.mxu0 %v273
  %963 = vmatprep.subr.mxu0 %v278
  %964 = vmatpush1.msra.mxu0 %v277
  %965 = vmatprep.subr.mxu0 %v282
  %966 = vmatpush1.msra.mxu0 %v281
  %967 = vmatprep.subr.mxu0 %v286
  %968 = vmatpush1.msra.mxu0 %v285
  %969 = vmatprep.subr.mxu0 %v290
  %970 = vmatpush1.msra.mxu0 %v289
  %971 = vmatprep.mubr.f32.mxu0 %v667
  %972 = vmatmul.mubr.f32.gmra.mrb[0].mxu0 %v835
  %v973 = vpop.f32.mrb[0].mxu0
  %v974 = vadd.f32 %v326, %v973
  %v975 = vpop.f32.mrb[0].mxu0
  %v976 = vadd.f32 %v330, %v975
  %977 = vdwg.mxu0
  %v978 = vxor.u32 %v903, 2147483648
  %v979 = vmul.f32 %v978, 1.442695
  %v980 = vpow.pop %v979
  %v981 = vadd.f32 %v980, 1.0
  %v982 = vrcp.pop %v981
  %v983 = vmul.f32 1.0, %v982
  %v984 = vxor.u32 %v905, 2147483648
  %v985 = vmul.f32 %v984, 1.442695
  %v986 = vpow.pop %v985
  %v987 = vadd.f32 %v986, 1.0
  %v988 = vrcp.pop %v987
  %v989 = vmul.f32 1.0, %v988
  %v990 = vtanh.pop %v974
  %v991 = vxor.u32 %v976, 2147483648
  %v992 = vmul.f32 %v991, 1.442695
  %v993 = vpow.pop %v992
  %v994 = vadd.f32 %v993, 1.0
  %v995 = vrcp.pop %v994
  %v996 = vmul.f32 1.0, %v995
  %v997 = vmul.f32 %v989, %v665
  %v998 = vmul.f32 %v983, %v990
  %v999 = vadd.f32 %v997, %v998
  %v1000 = vtanh.pop %v999
  %v1001 = vmul.f32 %v996, %v1000
  %s1002 = scalar_lea.vmem %s0, 16
  %v1003 = vld [vmem:[%s1002] sm:$0xff]
  %1004 = vmatprep.subr.mxu0 %v36
  %1005 = vmatpush1.msra.mxu0 %v35
  %1006 = vmatprep.subr.mxu0 %v40
  %1007 = vmatpush1.msra.mxu0 %v39
  %1008 = vmatprep.subr.mxu0 %v44
  %1009 = vmatpush1.msra.mxu0 %v43
  %1010 = vmatprep.subr.mxu0 %v48
  %1011 = vmatpush1.msra.mxu0 %v47
  %1012 = vmatprep.subr.mxu0 %v52
  %1013 = vmatpush1.msra.mxu0 %v51
  %1014 = vmatprep.subr.mxu0 %v56
  %1015 = vmatpush1.msra.mxu0 %v55
  %1016 = vmatprep.subr.mxu0 %v60
  %1017 = vmatpush1.msra.mxu0 %v59
  %1018 = vmatprep.subr.mxu0 %v64
  %1019 = vmatpush1.msra.mxu0 %v63
  %1020 = vmatprep.subr.mxu0 %v68
  %1021 = vmatpush1.msra.mxu0 %v67
  %1022 = vmatprep.subr.mxu0 %v72
  %1023 = vmatpush1.msra.mxu0 %v71
  %1024 = vmatprep.subr.mxu0 %v76
  %1025 = vmatpush1.msra.mxu0 %v75
  %1026 = vmatprep.subr.mxu0 %v80
  %1027 = vmatpush1.msra.mxu0 %v79
  %1028 = vmatprep.subr.mxu0 %v84
  %1029 = vmatpush1.msra.mxu0 %v83
  %1030 = vmatprep.subr.mxu0 %v88
  %1031 = vmatpush1.msra.mxu0 %v87
  %1032 = vmatprep.subr.mxu0 %v92
  %1033 = vmatpush1.msra.mxu0 %v91
  %1034 = vmatprep.subr.mxu0 %v96
  %1035 = vmatpush1.msra.mxu0 %v95
  %1036 = vmatprep.subr.mxu0 %v100
  %1037 = vmatpush1.msra.mxu0 %v99
  %1038 = vmatprep.subr.mxu0 %v104
  %1039 = vmatpush1.msra.mxu0 %v103
  %1040 = vmatprep.subr.mxu0 %v108
  %1041 = vmatpush1.msra.mxu0 %v107
  %1042 = vmatprep.subr.mxu0 %v112
  %1043 = vmatpush1.msra.mxu0 %v111
  %1044 = vmatprep.subr.mxu0 %v116
  %1045 = vmatpush1.msra.mxu0 %v115
  %1046 = vmatprep.subr.mxu0 %v120
  %1047 = vmatpush1.msra.mxu0 %v119
  %1048 = vmatprep.subr.mxu0 %v124
  %1049 = vmatpush1.msra.mxu0 %v123
  %1050 = vmatprep.subr.mxu0 %v128
  %1051 = vmatpush1.msra.mxu0 %v127
  %1052 = vmatprep.subr.mxu0 %v132
  %1053 = vmatpush1.msra.mxu0 %v131
  %1054 = vmatprep.subr.mxu0 %v136
  %1055 = vmatpush1.msra.mxu0 %v135
  %1056 = vmatprep.subr.mxu0 %v140
  %1057 = vmatpush1.msra.mxu0 %v139
  %1058 = vmatprep.subr.mxu0 %v144
  %1059 = vmatpush1.msra.mxu0 %v143
  %1060 = vmatprep.subr.mxu0 %v148
  %1061 = vmatpush1.msra.mxu0 %v147
  %1062 = vmatprep.subr.mxu0 %v152
  %1063 = vmatpush1.msra.mxu0 %v151
  %1064 = vmatprep.subr.mxu0 %v156
  %1065 = vmatpush1.msra.mxu0 %v155
  %1066 = vmatprep.subr.mxu0 %v160
  %1067 = vmatpush1.msra.mxu0 %v159
  %1068 = vmatprep.mubr.f32.mxu0 %v835
  %1069 = vmatmul.mubr.f32.gmra.mrb[0].mxu0 %v1003
  %v1070 = vpop.f32.mrb[0].mxu0
  %v1071 = vadd.f32 %v296, %v1070
  %v1072 = vpop.f32.mrb[0].mxu0
  %v1073 = vadd.f32 %v300, %v1072
  %1074 = vdwg.mxu0
  %1075 = vmatprep.subr.mxu0 %v38
  %1076 = vmatpush1.msra.mxu0 %v37
  %1077 = vmatprep.subr.mxu0 %v42
  %1078 = vmatpush1.msra.mxu0 %v41
  %1079 = vmatprep.subr.mxu0 %v46
  %1080 = vmatpush1.msra.mxu0 %v45
  %1081 = vmatprep.subr.mxu0 %v50
  %1082 = vmatpush1.msra.mxu0 %v49
  %1083 = vmatprep.subr.mxu0 %v54
  %1084 = vmatpush1.msra.mxu0 %v53
  %1085 = vmatprep.subr.mxu0 %v58
  %1086 = vmatpush1.msra.mxu0 %v57
  %1087 = vmatprep.subr.mxu0 %v62
  %1088 = vmatpush1.msra.mxu0 %v61
  %1089 = vmatprep.subr.mxu0 %v66
  %1090 = vmatpush1.msra.mxu0 %v65
  %1091 = vmatprep.subr.mxu0 %v70
  %1092 = vmatpush1.msra.mxu0 %v69
  %1093 = vmatprep.subr.mxu0 %v74
  %1094 = vmatpush1.msra.mxu0 %v73
  %1095 = vmatprep.subr.mxu0 %v78
  %1096 = vmatpush1.msra.mxu0 %v77
  %1097 = vmatprep.subr.mxu0 %v82
  %1098 = vmatpush1.msra.mxu0 %v81
  %1099 = vmatprep.subr.mxu0 %v86
  %1100 = vmatpush1.msra.mxu0 %v85
  %1101 = vmatprep.subr.mxu0 %v90
  %1102 = vmatpush1.msra.mxu0 %v89
  %1103 = vmatprep.subr.mxu0 %v94
  %1104 = vmatpush1.msra.mxu0 %v93
  %1105 = vmatprep.subr.mxu0 %v98
  %1106 = vmatpush1.msra.mxu0 %v97
  %1107 = vmatprep.subr.mxu0 %v102
  %1108 = vmatpush1.msra.mxu0 %v101
  %1109 = vmatprep.subr.mxu0 %v106
  %1110 = vmatpush1.msra.mxu0 %v105
  %1111 = vmatprep.subr.mxu0 %v110
  %1112 = vmatpush1.msra.mxu0 %v109
  %1113 = vmatprep.subr.mxu0 %v114
  %1114 = vmatpush1.msra.mxu0 %v113
  %1115 = vmatprep.subr.mxu0 %v118
  %1116 = vmatpush1.msra.mxu0 %v117
  %1117 = vmatprep.subr.mxu0 %v122
  %1118 = vmatpush1.msra.mxu0 %v121
  %1119 = vmatprep.subr.mxu0 %v126
  %1120 = vmatpush1.msra.mxu0 %v125
  %1121 = vmatprep.subr.mxu0 %v130
  %1122 = vmatpush1.msra.mxu0 %v129
  %1123 = vmatprep.subr.mxu0 %v134
  %1124 = vmatpush1.msra.mxu0 %v133
  %1125 = vmatprep.subr.mxu0 %v138
  %1126 = vmatpush1.msra.mxu0 %v137
  %1127 = vmatprep.subr.mxu0 %v142
  %1128 = vmatpush1.msra.mxu0 %v141
  %1129 = vmatprep.subr.mxu0 %v146
  %1130 = vmatpush1.msra.mxu0 %v145
  %1131 = vmatprep.subr.mxu0 %v150
  %1132 = vmatpush1.msra.mxu0 %v149
  %1133 = vmatprep.subr.mxu0 %v154
  %1134 = vmatpush1.msra.mxu0 %v153
  %1135 = vmatprep.subr.mxu0 %v158
  %1136 = vmatpush1.msra.mxu0 %v157
  %1137 = vmatprep.subr.mxu0 %v162
  %1138 = vmatpush1.msra.mxu0 %v161
  %1139 = vmatprep.mubr.f32.mxu0 %v835
  %1140 = vmatmul.mubr.f32.gmra.mrb[0].mxu0 %v1003
  %v1141 = vpop.f32.mrb[0].mxu0
  %v1142 = vadd.f32 %v304, %v1141
  %v1143 = vpop.f32.mrb[0].mxu0
  %v1144 = vadd.f32 %v308, %v1143
  %1145 = vdwg.mxu0
  %v1146 = vxor.u32 %v1071, 2147483648
  %v1147 = vmul.f32 %v1146, 1.442695
  %v1148 = vpow.pop %v1147
  %v1149 = vadd.f32 %v1148, 1.0
  %v1150 = vrcp.pop %v1149
  %v1151 = vmul.f32 1.0, %v1150
  %v1152 = vxor.u32 %v1073, 2147483648
  %v1153 = vmul.f32 %v1152, 1.442695
  %v1154 = vpow.pop %v1153
  %v1155 = vadd.f32 %v1154, 1.0
  %v1156 = vrcp.pop %v1155
  %v1157 = vmul.f32 1.0, %v1156
  %v1158 = vtanh.pop %v1142
  %v1159 = vxor.u32 %v1144, 2147483648
  %v1160 = vmul.f32 %v1159, 1.442695
  %v1161 = vpow.pop %v1160
  %v1162 = vadd.f32 %v1161, 1.0
  %v1163 = vrcp.pop %v1162
  %v1164 = vmul.f32 1.0, %v1163
  %v1165 = vmul.f32 %v1157, %v833
  %v1166 = vmul.f32 %v1151, %v1158
  %v1167 = vadd.f32 %v1165, %v1166
  %v1168 = vtanh.pop %v1167
  %v1169 = vmul.f32 %v1164, %v1168
  %1170 = vmatprep.subr.mxu0 %v164
  %1171 = vmatpush1.msra.mxu0 %v163
  %1172 = vmatprep.subr.mxu0 %v168
  %1173 = vmatpush1.msra.mxu0 %v167
  %1174 = vmatprep.subr.mxu0 %v172
  %1175 = vmatpush1.msra.mxu0 %v171
  %1176 = vmatprep.subr.mxu0 %v176
  %1177 = vmatpush1.msra.mxu0 %v175
  %1178 = vmatprep.subr.mxu0 %v180
  %1179 = vmatpush1.msra.mxu0 %v179
  %1180 = vmatprep.subr.mxu0 %v184
  %1181 = vmatpush1.msra.mxu0 %v183
  %1182 = vmatprep.subr.mxu0 %v188
  %1183 = vmatpush1.msra.mxu0 %v187
  %1184 = vmatprep.subr.mxu0 %v192
  %1185 = vmatpush1.msra.mxu0 %v191
  %1186 = vmatprep.subr.mxu0 %v196
  %1187 = vmatpush1.msra.mxu0 %v195
  %1188 = vmatprep.subr.mxu0 %v200
  %1189 = vmatpush1.msra.mxu0 %v199
  %1190 = vmatprep.subr.mxu0 %v204
  %1191 = vmatpush1.msra.mxu0 %v203
  %1192 = vmatprep.subr.mxu0 %v208
  %1193 = vmatpush1.msra.mxu0 %v207
  %1194 = vmatprep.subr.mxu0 %v212
  %1195 = vmatpush1.msra.mxu0 %v211
  %1196 = vmatprep.subr.mxu0 %v216
  %1197 = vmatpush1.msra.mxu0 %v215
  %1198 = vmatprep.subr.mxu0 %v220
  %1199 = vmatpush1.msra.mxu0 %v219
  %1200 = vmatprep.subr.mxu0 %v224
  %1201 = vmatpush1.msra.mxu0 %v223
  %1202 = vmatprep.subr.mxu0 %v228
  %1203 = vmatpush1.msra.mxu0 %v227
  %1204 = vmatprep.subr.mxu0 %v232
  %1205 = vmatpush1.msra.mxu0 %v231
  %1206 = vmatprep.subr.mxu0 %v236
  %1207 = vmatpush1.msra.mxu0 %v235
  %1208 = vmatprep.subr.mxu0 %v240
  %1209 = vmatpush1.msra.mxu0 %v239
  %1210 = vmatprep.subr.mxu0 %v244
  %1211 = vmatpush1.msra.mxu0 %v243
  %1212 = vmatprep.subr.mxu0 %v248
  %1213 = vmatpush1.msra.mxu0 %v247
  %1214 = vmatprep.subr.mxu0 %v252
  %1215 = vmatpush1.msra.mxu0 %v251
  %1216 = vmatprep.subr.mxu0 %v256
  %1217 = vmatpush1.msra.mxu0 %v255
  %1218 = vmatprep.subr.mxu0 %v260
  %1219 = vmatpush1.msra.mxu0 %v259
  %1220 = vmatprep.subr.mxu0 %v264
  %1221 = vmatpush1.msra.mxu0 %v263
  %1222 = vmatprep.subr.mxu0 %v268
  %1223 = vmatpush1.msra.mxu0 %v267
  %1224 = vmatprep.subr.mxu0 %v272
  %1225 = vmatpush1.msra.mxu0 %v271
  %1226 = vmatprep.subr.mxu0 %v276
  %1227 = vmatpush1.msra.mxu0 %v275
  %1228 = vmatprep.subr.mxu0 %v280
  %1229 = vmatpush1.msra.mxu0 %v279
  %1230 = vmatprep.subr.mxu0 %v284
  %1231 = vmatpush1.msra.mxu0 %v283
  %1232 = vmatprep.subr.mxu0 %v288
  %1233 = vmatpush1.msra.mxu0 %v287
  %1234 = vmatprep.mubr.f32.mxu0 %v1001
  %1235 = vmatmul.mubr.f32.gmra.mrb[0].mxu0 %v1169
  %v1236 = vpop.f32.mrb[0].mxu0
  %v1237 = vadd.f32 %v318, %v1236
  %v1238 = vpop.f32.mrb[0].mxu0
  %v1239 = vadd.f32 %v322, %v1238
  %1240 = vdwg.mxu0
  %1241 = vmatprep.subr.mxu0 %v166
  %1242 = vmatpush1.msra.mxu0 %v165
  %1243 = vmatprep.subr.mxu0 %v170
  %1244 = vmatpush1.msra.mxu0 %v169
  %1245 = vmatprep.subr.mxu0 %v174
  %1246 = vmatpush1.msra.mxu0 %v173
  %1247 = vmatprep.subr.mxu0 %v178
  %1248 = vmatpush1.msra.mxu0 %v177
  %1249 = vmatprep.subr.mxu0 %v182
  %1250 = vmatpush1.msra.mxu0 %v181
  %1251 = vmatprep.subr.mxu0 %v186
  %1252 = vmatpush1.msra.mxu0 %v185
  %1253 = vmatprep.subr.mxu0 %v190
  %1254 = vmatpush1.msra.mxu0 %v189
  %1255 = vmatprep.subr.mxu0 %v194
  %1256 = vmatpush1.msra.mxu0 %v193
  %1257 = vmatprep.subr.mxu0 %v198
  %1258 = vmatpush1.msra.mxu0 %v197
  %1259 = vmatprep.subr.mxu0 %v202
  %1260 = vmatpush1.msra.mxu0 %v201
  %1261 = vmatprep.subr.mxu0 %v206
  %1262 = vmatpush1.msra.mxu0 %v205
  %1263 = vmatprep.subr.mxu0 %v210
  %1264 = vmatpush1.msra.mxu0 %v209
  %1265 = vmatprep.subr.mxu0 %v214
  %1266 = vmatpush1.msra.mxu0 %v213
  %1267 = vmatprep.subr.mxu0 %v218
  %1268 = vmatpush1.msra.mxu0 %v217
  %1269 = vmatprep.subr.mxu0 %v222
  %1270 = vmatpush1.msra.mxu0 %v221
  %1271 = vmatprep.subr.mxu0 %v226
  %1272 = vmatpush1.msra.mxu0 %v225
  %1273 = vmatprep.subr.mxu0 %v230
  %1274 = vmatpush1.msra.mxu0 %v229
  %1275 = vmatprep.subr.mxu0 %v234
  %1276 = vmatpush1.msra.mxu0 %v233
  %1277 = vmatprep.subr.mxu0 %v238
  %1278 = vmatpush1.msra.mxu0 %v237
  %1279 = vmatprep.subr.mxu0 %v242
  %1280 = vmatpush1.msra.mxu0 %v241
  %1281 = vmatprep.subr.mxu0 %v246
  %1282 = vmatpush1.msra.mxu0 %v245
  %1283 = vmatprep.subr.mxu0 %v250
  %1284 = vmatpush1.msra.mxu0 %v249
  %1285 = vmatprep.subr.mxu0 %v254
  %1286 = vmatpush1.msra.mxu0 %v253
  %1287 = vmatprep.subr.mxu0 %v258
  %1288 = vmatpush1.msra.mxu0 %v257
  %1289 = vmatprep.subr.mxu0 %v262
  %1290 = vmatpush1.msra.mxu0 %v261
  %1291 = vmatprep.subr.mxu0 %v266
  %1292 = vmatpush1.msra.mxu0 %v265
  %1293 = vmatprep.subr.mxu0 %v270
  %1294 = vmatpush1.msra.mxu0 %v269
  %1295 = vmatprep.subr.mxu0 %v274
  %1296 = vmatpush1.msra.mxu0 %v273
  %1297 = vmatprep.subr.mxu0 %v278
  %1298 = vmatpush1.msra.mxu0 %v277
  %1299 = vmatprep.subr.mxu0 %v282
  %1300 = vmatpush1.msra.mxu0 %v281
  %1301 = vmatprep.subr.mxu0 %v286
  %1302 = vmatpush1.msra.mxu0 %v285
  %1303 = vmatprep.subr.mxu0 %v290
  %1304 = vmatpush1.msra.mxu0 %v289
  %1305 = vmatprep.mubr.f32.mxu0 %v1001
  %1306 = vmatmul.mubr.f32.gmra.mrb[0].mxu0 %v1169
  %v1307 = vpop.f32.mrb[0].mxu0
  %v1308 = vadd.f32 %v326, %v1307
  %v1309 = vpop.f32.mrb[0].mxu0
  %v1310 = vadd.f32 %v330, %v1309
  %1311 = vdwg.mxu0
  %v1312 = vxor.u32 %v1237, 2147483648
  %v1313 = vmul.f32 %v1312, 1.442695
  %v1314 = vpow.pop %v1313
  %v1315 = vadd.f32 %v1314, 1.0
  %v1316 = vrcp.pop %v1315
  %v1317 = vmul.f32 1.0, %v1316
  %v1318 = vxor.u32 %v1239, 2147483648
  %v1319 = vmul.f32 %v1318, 1.442695
  %v1320 = vpow.pop %v1319
  %v1321 = vadd.f32 %v1320, 1.0
  %v1322 = vrcp.pop %v1321
  %v1323 = vmul.f32 1.0, %v1322
  %v1324 = vtanh.pop %v1308
  %v1325 = vxor.u32 %v1310, 2147483648
  %v1326 = vmul.f32 %v1325, 1.442695
  %v1327 = vpow.pop %v1326
  %v1328 = vadd.f32 %v1327, 1.0
  %v1329 = vrcp.pop %v1328
  %v1330 = vmul.f32 1.0, %v1329
  %v1331 = vmul.f32 %v1323, %v999
  %v1332 = vmul.f32 %v1317, %v1324
  %v1333 = vadd.f32 %v1331, %v1332
  %v1334 = vtanh.pop %v1333
  %v1335 = vmul.f32 %v1330, %v1334
  %s1336 = scalar_lea.vmem %s0, 24
  %v1337 = vld [vmem:[%s1336] sm:$0xff]
  %1338 = vmatprep.subr.mxu0 %v36
  %1339 = vmatpush1.msra.mxu0 %v35
  %1340 = vmatprep.subr.mxu0 %v40
  %1341 = vmatpush1.msra.mxu0 %v39
  %1342 = vmatprep.subr.mxu0 %v44
  %1343 = vmatpush1.msra.mxu0 %v43
  %1344 = vmatprep.subr.mxu0 %v48
  %1345 = vmatpush1.msra.mxu0 %v47
  %1346 = vmatprep.subr.mxu0 %v52
  %1347 = vmatpush1.msra.mxu0 %v51
  %1348 = vmatprep.subr.mxu0 %v56
  %1349 = vmatpush1.msra.mxu0 %v55
  %1350 = vmatprep.subr.mxu0 %v60
  %1351 = vmatpush1.msra.mxu0 %v59
  %1352 = vmatprep.subr.mxu0 %v64
  %1353 = vmatpush1.msra.mxu0 %v63
  %1354 = vmatprep.subr.mxu0 %v68
  %1355 = vmatpush1.msra.mxu0 %v67
  %1356 = vmatprep.subr.mxu0 %v72
  %1357 = vmatpush1.msra.mxu0 %v71
  %1358 = vmatprep.subr.mxu0 %v76
  %1359 = vmatpush1.msra.mxu0 %v75
  %1360 = vmatprep.subr.mxu0 %v80
  %1361 = vmatpush1.msra.mxu0 %v79
  %1362 = vmatprep.subr.mxu0 %v84
  %1363 = vmatpush1.msra.mxu0 %v83
  %1364 = vmatprep.subr.mxu0 %v88
  %1365 = vmatpush1.msra.mxu0 %v87
  %1366 = vmatprep.subr.mxu0 %v92
  %1367 = vmatpush1.msra.mxu0 %v91
  %1368 = vmatprep.subr.mxu0 %v96
  %1369 = vmatpush1.msra.mxu0 %v95
  %1370 = vmatprep.subr.mxu0 %v100
  %1371 = vmatpush1.msra.mxu0 %v99
  %1372 = vmatprep.subr.mxu0 %v104
  %1373 = vmatpush1.msra.mxu0 %v103
  %1374 = vmatprep.subr.mxu0 %v108
  %1375 = vmatpush1.msra.mxu0 %v107
  %1376 = vmatprep.subr.mxu0 %v112
  %1377 = vmatpush1.msra.mxu0 %v111
  %1378 = vmatprep.subr.mxu0 %v116
  %1379 = vmatpush1.msra.mxu0 %v115
  %1380 = vmatprep.subr.mxu0 %v120
  %1381 = vmatpush1.msra.mxu0 %v119
  %1382 = vmatprep.subr.mxu0 %v124
  %1383 = vmatpush1.msra.mxu0 %v123
  %1384 = vmatprep.subr.mxu0 %v128
  %1385 = vmatpush1.msra.mxu0 %v127
  %1386 = vmatprep.subr.mxu0 %v132
  %1387 = vmatpush1.msra.mxu0 %v131
  %1388 = vmatprep.subr.mxu0 %v136
  %1389 = vmatpush1.msra.mxu0 %v135
  %1390 = vmatprep.subr.mxu0 %v140
  %1391 = vmatpush1.msra.mxu0 %v139
  %1392 = vmatprep.subr.mxu0 %v144
  %1393 = vmatpush1.msra.mxu0 %v143
  %1394 = vmatprep.subr.mxu0 %v148
  %1395 = vmatpush1.msra.mxu0 %v147
  %1396 = vmatprep.subr.mxu0 %v152
  %1397 = vmatpush1.msra.mxu0 %v151
  %1398 = vmatprep.subr.mxu0 %v156
  %1399 = vmatpush1.msra.mxu0 %v155
  %1400 = vmatprep.subr.mxu0 %v160
  %1401 = vmatpush1.msra.mxu0 %v159
  %1402 = vmatprep.mubr.f32.mxu0 %v1169
  %1403 = vmatmul.mubr.f32.gmra.mrb[0].mxu0 %v1337
  %v1404 = vpop.f32.mrb[0].mxu0
  %v1405 = vadd.f32 %v296, %v1404
  %v1406 = vpop.f32.mrb[0].mxu0
  %v1407 = vadd.f32 %v300, %v1406
  %1408 = vdwg.mxu0
  %1409 = vmatprep.subr.mxu0 %v38
  %1410 = vmatpush1.msra.mxu0 %v37
  %1411 = vmatprep.subr.mxu0 %v42
  %1412 = vmatpush1.msra.mxu0 %v41
  %1413 = vmatprep.subr.mxu0 %v46
  %1414 = vmatpush1.msra.mxu0 %v45
  %1415 = vmatprep.subr.mxu0 %v50
  %1416 = vmatpush1.msra.mxu0 %v49
  %1417 = vmatprep.subr.mxu0 %v54
  %1418 = vmatpush1.msra.mxu0 %v53
  %1419 = vmatprep.subr.mxu0 %v58
  %1420 = vmatpush1.msra.mxu0 %v57
  %1421 = vmatprep.subr.mxu0 %v62
  %1422 = vmatpush1.msra.mxu0 %v61
  %1423 = vmatprep.subr.mxu0 %v66
  %1424 = vmatpush1.msra.mxu0 %v65
  %1425 = vmatprep.subr.mxu0 %v70
  %1426 = vmatpush1.msra.mxu0 %v69
  %1427 = vmatprep.subr.mxu0 %v74
  %1428 = vmatpush1.msra.mxu0 %v73
  %1429 = vmatprep.subr.mxu0 %v78
  %1430 = vmatpush1.msra.mxu0 %v77
  %1431 = vmatprep.subr.mxu0 %v82
  %1432 = vmatpush1.msra.mxu0 %v81
  %1433 = vmatprep.subr.mxu0 %v86
  %1434 = vmatpush1.msra.mxu0 %v85
  %1435 = vmatprep.subr.mxu0 %v90
  %1436 = vmatpush1.msra.mxu0 %v89
  %1437 = vmatprep.subr.mxu0 %v94
  %1438 = vmatpush1.msra.mxu0 %v93
  %1439 = vmatprep.subr.mxu0 %v98
  %1440 = vmatpush1.msra.mxu0 %v97
  %1441 = vmatprep.subr.mxu0 %v102
  %1442 = vmatpush1.msra.mxu0 %v101
  %1443 = vmatprep.subr.mxu0 %v106
  %1444 = vmatpush1.msra.mxu0 %v105
  %1445 = vmatprep.subr.mxu0 %v110
  %1446 = vmatpush1.msra.mxu0 %v109
  %1447 = vmatprep.subr.mxu0 %v114
  %1448 = vmatpush1.msra.mxu0 %v113
  %1449 = vmatprep.subr.mxu0 %v118
  %1450 = vmatpush1.msra.mxu0 %v117
  %1451 = vmatprep.subr.mxu0 %v122
  %1452 = vmatpush1.msra.mxu0 %v121
  %1453 = vmatprep.subr.mxu0 %v126
  %1454 = vmatpush1.msra.mxu0 %v125
  %1455 = vmatprep.subr.mxu0 %v130
  %1456 = vmatpush1.msra.mxu0 %v129
  %1457 = vmatprep.subr.mxu0 %v134
  %1458 = vmatpush1.msra.mxu0 %v133
  %1459 = vmatprep.subr.mxu0 %v138
  %1460 = vmatpush1.msra.mxu0 %v137
  %1461 = vmatprep.subr.mxu0 %v142
  %1462 = vmatpush1.msra.mxu0 %v141
  %1463 = vmatprep.subr.mxu0 %v146
  %1464 = vmatpush1.msra.mxu0 %v145
  %1465 = vmatprep.subr.mxu0 %v150
  %1466 = vmatpush1.msra.mxu0 %v149
  %1467 = vmatprep.subr.mxu0 %v154
  %1468 = vmatpush1.msra.mxu0 %v153
  %1469 = vmatprep.subr.mxu0 %v158
  %1470 = vmatpush1.msra.mxu0 %v157
  %1471 = vmatprep.subr.mxu0 %v162
  %1472 = vmatpush1.msra.mxu0 %v161
  %1473 = vmatprep.mubr.f32.mxu0 %v1169
  %1474 = vmatmul.mubr.f32.gmra.mrb[0].mxu0 %v1337
  %v1475 = vpop.f32.mrb[0].mxu0
  %v1476 = vadd.f32 %v304, %v1475
  %v1477 = vpop.f32.mrb[0].mxu0
  %v1478 = vadd.f32 %v308, %v1477
  %1479 = vdwg.mxu0
  %v1480 = vxor.u32 %v1405, 2147483648
  %v1481 = vmul.f32 %v1480, 1.442695
  %v1482 = vpow.pop %v1481
  %v1483 = vadd.f32 %v1482, 1.0
  %v1484 = vrcp.pop %v1483
  %v1485 = vmul.f32 1.0, %v1484
  %v1486 = vxor.u32 %v1407, 2147483648
  %v1487 = vmul.f32 %v1486, 1.442695
  %v1488 = vpow.pop %v1487
  %v1489 = vadd.f32 %v1488, 1.0
  %v1490 = vrcp.pop %v1489
  %v1491 = vmul.f32 1.0, %v1490
  %v1492 = vtanh.pop %v1476
  %v1493 = vxor.u32 %v1478, 2147483648
  %v1494 = vmul.f32 %v1493, 1.442695
  %v1495 = vpow.pop %v1494
  %v1496 = vadd.f32 %v1495, 1.0
  %v1497 = vrcp.pop %v1496
  %v1498 = vmul.f32 1.0, %v1497
  %v1499 = vmul.f32 %v1491, %v1167
  %v1500 = vmul.f32 %v1485, %v1492
  %v1501 = vadd.f32 %v1499, %v1500
  %v1502 = vtanh.pop %v1501
  %v1503 = vmul.f32 %v1498, %v1502
  %1504 = vmatprep.subr.mxu0 %v164
  %1505 = vmatpush1.msra.mxu0 %v163
  %1506 = vmatprep.subr.mxu0 %v168
  %1507 = vmatpush1.msra.mxu0 %v167
  %1508 = vmatprep.subr.mxu0 %v172
  %1509 = vmatpush1.msra.mxu0 %v171
  %1510 = vmatprep.subr.mxu0 %v176
  %1511 = vmatpush1.msra.mxu0 %v175
  %1512 = vmatprep.subr.mxu0 %v180
  %1513 = vmatpush1.msra.mxu0 %v179
  %1514 = vmatprep.subr.mxu0 %v184
  %1515 = vmatpush1.msra.mxu0 %v183
  %1516 = vmatprep.subr.mxu0 %v188
  %1517 = vmatpush1.msra.mxu0 %v187
  %1518 = vmatprep.subr.mxu0 %v192
  %1519 = vmatpush1.msra.mxu0 %v191
  %1520 = vmatprep.subr.mxu0 %v196
  %1521 = vmatpush1.msra.mxu0 %v195
  %1522 = vmatprep.subr.mxu0 %v200
  %1523 = vmatpush1.msra.mxu0 %v199
  %1524 = vmatprep.subr.mxu0 %v204
  %1525 = vmatpush1.msra.mxu0 %v203
  %1526 = vmatprep.subr.mxu0 %v208
  %1527 = vmatpush1.msra.mxu0 %v207
  %1528 = vmatprep.subr.mxu0 %v212
  %1529 = vmatpush1.msra.mxu0 %v211
  %1530 = vmatprep.subr.mxu0 %v216
  %1531 = vmatpush1.msra.mxu0 %v215
  %1532 = vmatprep.subr.mxu0 %v220
  %1533 = vmatpush1.msra.mxu0 %v219
  %1534 = vmatprep.subr.mxu0 %v224
  %1535 = vmatpush1.msra.mxu0 %v223
  %1536 = vmatprep.subr.mxu0 %v228
  %1537 = vmatpush1.msra.mxu0 %v227
  %1538 = vmatprep.subr.mxu0 %v232
  %1539 = vmatpush1.msra.mxu0 %v231
  %1540 = vmatprep.subr.mxu0 %v236
  %1541 = vmatpush1.msra.mxu0 %v235
  %1542 = vmatprep.subr.mxu0 %v240
  %1543 = vmatpush1.msra.mxu0 %v239
  %1544 = vmatprep.subr.mxu0 %v244
  %1545 = vmatpush1.msra.mxu0 %v243
  %1546 = vmatprep.subr.mxu0 %v248
  %1547 = vmatpush1.msra.mxu0 %v247
  %1548 = vmatprep.subr.mxu0 %v252
  %1549 = vmatpush1.msra.mxu0 %v251
  %1550 = vmatprep.subr.mxu0 %v256
  %1551 = vmatpush1.msra.mxu0 %v255
  %1552 = vmatprep.subr.mxu0 %v260
  %1553 = vmatpush1.msra.mxu0 %v259
  %1554 = vmatprep.subr.mxu0 %v264
  %1555 = vmatpush1.msra.mxu0 %v263
  %1556 = vmatprep.subr.mxu0 %v268
  %1557 = vmatpush1.msra.mxu0 %v267
  %1558 = vmatprep.subr.mxu0 %v272
  %1559 = vmatpush1.msra.mxu0 %v271
  %1560 = vmatprep.subr.mxu0 %v276
  %1561 = vmatpush1.msra.mxu0 %v275
  %1562 = vmatprep.subr.mxu0 %v280
  %1563 = vmatpush1.msra.mxu0 %v279
  %1564 = vmatprep.subr.mxu0 %v284
  %1565 = vmatpush1.msra.mxu0 %v283
  %1566 = vmatprep.subr.mxu0 %v288
  %1567 = vmatpush1.msra.mxu0 %v287
  %1568 = vmatprep.mubr.f32.mxu0 %v1335
  %1569 = vmatmul.mubr.f32.gmra.mrb[0].mxu0 %v1503
  %v1570 = vpop.f32.mrb[0].mxu0
  %v1571 = vadd.f32 %v318, %v1570
  %v1572 = vpop.f32.mrb[0].mxu0
  %v1573 = vadd.f32 %v322, %v1572
  %1574 = vdwg.mxu0
  %1575 = vmatprep.subr.mxu0 %v166
  %1576 = vmatpush1.msra.mxu0 %v165
  %1577 = vmatprep.subr.mxu0 %v170
  %1578 = vmatpush1.msra.mxu0 %v169
  %1579 = vmatprep.subr.mxu0 %v174
  %1580 = vmatpush1.msra.mxu0 %v173
  %1581 = vmatprep.subr.mxu0 %v178
  %1582 = vmatpush1.msra.mxu0 %v177
  %1583 = vmatprep.subr.mxu0 %v182
  %1584 = vmatpush1.msra.mxu0 %v181
  %1585 = vmatprep.subr.mxu0 %v186
  %1586 = vmatpush1.msra.mxu0 %v185
  %1587 = vmatprep.subr.mxu0 %v190
  %1588 = vmatpush1.msra.mxu0 %v189
  %1589 = vmatprep.subr.mxu0 %v194
  %1590 = vmatpush1.msra.mxu0 %v193
  %1591 = vmatprep.subr.mxu0 %v198
  %1592 = vmatpush1.msra.mxu0 %v197
  %1593 = vmatprep.subr.mxu0 %v202
  %1594 = vmatpush1.msra.mxu0 %v201
  %1595 = vmatprep.subr.mxu0 %v206
  %1596 = vmatpush1.msra.mxu0 %v205
  %1597 = vmatprep.subr.mxu0 %v210
  %1598 = vmatpush1.msra.mxu0 %v209
  %1599 = vmatprep.subr.mxu0 %v214
  %1600 = vmatpush1.msra.mxu0 %v213
  %1601 = vmatprep.subr.mxu0 %v218
  %1602 = vmatpush1.msra.mxu0 %v217
  %1603 = vmatprep.subr.mxu0 %v222
  %1604 = vmatpush1.msra.mxu0 %v221
  %1605 = vmatprep.subr.mxu0 %v226
  %1606 = vmatpush1.msra.mxu0 %v225
  %1607 = vmatprep.subr.mxu0 %v230
  %1608 = vmatpush1.msra.mxu0 %v229
  %1609 = vmatprep.subr.mxu0 %v234
  %1610 = vmatpush1.msra.mxu0 %v233
  %1611 = vmatprep.subr.mxu0 %v238
  %1612 = vmatpush1.msra.mxu0 %v237
  %1613 = vmatprep.subr.mxu0 %v242
  %1614 = vmatpush1.msra.mxu0 %v241
  %1615 = vmatprep.subr.mxu0 %v246
  %1616 = vmatpush1.msra.mxu0 %v245
  %1617 = vmatprep.subr.mxu0 %v250
  %1618 = vmatpush1.msra.mxu0 %v249
  %1619 = vmatprep.subr.mxu0 %v254
  %1620 = vmatpush1.msra.mxu0 %v253
  %1621 = vmatprep.subr.mxu0 %v258
  %1622 = vmatpush1.msra.mxu0 %v257
  %1623 = vmatprep.subr.mxu0 %v262
  %1624 = vmatpush1.msra.mxu0 %v261
  %1625 = vmatprep.subr.mxu0 %v266
  %1626 = vmatpush1.msra.mxu0 %v265
  %1627 = vmatprep.subr.mxu0 %v270
  %1628 = vmatpush1.msra.mxu0 %v269
  %1629 = vmatprep.subr.mxu0 %v274
  %1630 = vmatpush1.msra.mxu0 %v273
  %1631 = vmatprep.subr.mxu0 %v278
  %1632 = vmatpush1.msra.mxu0 %v277
  %1633 = vmatprep.subr.mxu0 %v282
  %1634 = vmatpush1.msra.mxu0 %v281
  %1635 = vmatprep.subr.mxu0 %v286
  %1636 = vmatpush1.msra.mxu0 %v285
  %1637 = vmatprep.subr.mxu0 %v290
  %1638 = vmatpush1.msra.mxu0 %v289
  %1639 = vmatprep.mubr.f32.mxu0 %v1335
  %1640 = vmatmul.mubr.f32.gmra.mrb[0].mxu0 %v1503
  %v1641 = vpop.f32.mrb[0].mxu0
  %v1642 = vadd.f32 %v326, %v1641
  %v1643 = vpop.f32.mrb[0].mxu0
  %v1644 = vadd.f32 %v330, %v1643
  %1645 = vdwg.mxu0
  %v1646 = vxor.u32 %v1571, 2147483648
  %v1647 = vmul.f32 %v1646, 1.442695
  %v1648 = vpow.pop %v1647
  %v1649 = vadd.f32 %v1648, 1.0
  %v1650 = vrcp.pop %v1649
  %v1651 = vmul.f32 1.0, %v1650
  %v1652 = vxor.u32 %v1573, 2147483648
  %v1653 = vmul.f32 %v1652, 1.442695
  %v1654 = vpow.pop %v1653
  %v1655 = vadd.f32 %v1654, 1.0
  %v1656 = vrcp.pop %v1655
  %v1657 = vmul.f32 1.0, %v1656
  %v1658 = vtanh.pop %v1642
  %v1659 = vxor.u32 %v1644, 2147483648
  %v1660 = vmul.f32 %v1659, 1.442695
  %v1661 = vpow.pop %v1660
  %v1662 = vadd.f32 %v1661, 1.0
  %v1663 = vrcp.pop %v1662
  %v1664 = vmul.f32 1.0, %v1663
  %v1665 = vmul.f32 %v1657, %v1333
  %v1666 = vmul.f32 %v1651, %v1658
  %v1667 = vadd.f32 %v1665, %v1666
  %v1668 = vtanh.pop %v1667
  %v1669 = vmul.f32 %v1664, %v1668
  %s1670 = scalar_lea.vmem %s0, 32
  %v1671 = vld [vmem:[%s1670] sm:$0xff]
  %1672 = vmatprep.subr.mxu0 %v36
  %1673 = vmatpush1.msra.mxu0 %v35
  %1674 = vmatprep.subr.mxu0 %v40
  %1675 = vmatpush1.msra.mxu0 %v39
  %1676 = vmatprep.subr.mxu0 %v44
  %1677 = vmatpush1.msra.mxu0 %v43
  %1678 = vmatprep.subr.mxu0 %v48
  %1679 = vmatpush1.msra.mxu0 %v47
  %1680 = vmatprep.subr.mxu0 %v52
  %1681 = vmatpush1.msra.mxu0 %v51
  %1682 = vmatprep.subr.mxu0 %v56
  %1683 = vmatpush1.msra.mxu0 %v55
  %1684 = vmatprep.subr.mxu0 %v60
  %1685 = vmatpush1.msra.mxu0 %v59
  %1686 = vmatprep.subr.mxu0 %v64
  %1687 = vmatpush1.msra.mxu0 %v63
  %1688 = vmatprep.subr.mxu0 %v68
  %1689 = vmatpush1.msra.mxu0 %v67
  %1690 = vmatprep.subr.mxu0 %v72
  %1691 = vmatpush1.msra.mxu0 %v71
  %1692 = vmatprep.subr.mxu0 %v76
  %1693 = vmatpush1.msra.mxu0 %v75
  %1694 = vmatprep.subr.mxu0 %v80
  %1695 = vmatpush1.msra.mxu0 %v79
  %1696 = vmatprep.subr.mxu0 %v84
  %1697 = vmatpush1.msra.mxu0 %v83
  %1698 = vmatprep.subr.mxu0 %v88
  %1699 = vmatpush1.msra.mxu0 %v87
  %1700 = vmatprep.subr.mxu0 %v92
  %1701 = vmatpush1.msra.mxu0 %v91
  %1702 = vmatprep.subr.mxu0 %v96
  %1703 = vmatpush1.msra.mxu0 %v95
  %1704 = vmatprep.subr.mxu0 %v100
  %1705 = vmatpush1.msra.mxu0 %v99
  %1706 = vmatprep.subr.mxu0 %v104
  %1707 = vmatpush1.msra.mxu0 %v103
  %1708 = vmatprep.subr.mxu0 %v108
  %1709 = vmatpush1.msra.mxu0 %v107
  %1710 = vmatprep.subr.mxu0 %v112
  %1711 = vmatpush1.msra.mxu0 %v111
  %1712 = vmatprep.subr.mxu0 %v116
  %1713 = vmatpush1.msra.mxu0 %v115
  %1714 = vmatprep.subr.mxu0 %v120
  %1715 = vmatpush1.msra.mxu0 %v119
  %1716 = vmatprep.subr.mxu0 %v124
  %1717 = vmatpush1.msra.mxu0 %v123
  %1718 = vmatprep.subr.mxu0 %v128
  %1719 = vmatpush1.msra.mxu0 %v127
  %1720 = vmatprep.subr.mxu0 %v132
  %1721 = vmatpush1.msra.mxu0 %v131
  %1722 = vmatprep.subr.mxu0 %v136
  %1723 = vmatpush1.msra.mxu0 %v135
  %1724 = vmatprep.subr.mxu0 %v140
  %1725 = vmatpush1.msra.mxu0 %v139
  %1726 = vmatprep.subr.mxu0 %v144
  %1727 = vmatpush1.msra.mxu0 %v143
  %1728 = vmatprep.subr.mxu0 %v148
  %1729 = vmatpush1.msra.mxu0 %v147
  %1730 = vmatprep.subr.mxu0 %v152
  %1731 = vmatpush1.msra.mxu0 %v151
  %1732 = vmatprep.subr.mxu0 %v156
  %1733 = vmatpush1.msra.mxu0 %v155
  %1734 = vmatprep.subr.mxu0 %v160
  %1735 = vmatpush1.msra.mxu0 %v159
  %1736 = vmatprep.mubr.f32.mxu0 %v1503
  %1737 = vmatmul.mubr.f32.gmra.mrb[0].mxu0 %v1671
  %v1738 = vpop.f32.mrb[0].mxu0
  %v1739 = vadd.f32 %v296, %v1738
  %v1740 = vpop.f32.mrb[0].mxu0
  %v1741 = vadd.f32 %v300, %v1740
  %1742 = vdwg.mxu0
  %1743 = vmatprep.subr.mxu0 %v38
  %1744 = vmatpush1.msra.mxu0 %v37
  %1745 = vmatprep.subr.mxu0 %v42
  %1746 = vmatpush1.msra.mxu0 %v41
  %1747 = vmatprep.subr.mxu0 %v46
  %1748 = vmatpush1.msra.mxu0 %v45
  %1749 = vmatprep.subr.mxu0 %v50
  %1750 = vmatpush1.msra.mxu0 %v49
  %1751 = vmatprep.subr.mxu0 %v54
  %1752 = vmatpush1.msra.mxu0 %v53
  %1753 = vmatprep.subr.mxu0 %v58
  %1754 = vmatpush1.msra.mxu0 %v57
  %1755 = vmatprep.subr.mxu0 %v62
  %1756 = vmatpush1.msra.mxu0 %v61
  %1757 = vmatprep.subr.mxu0 %v66
  %1758 = vmatpush1.msra.mxu0 %v65
  %1759 = vmatprep.subr.mxu0 %v70
  %1760 = vmatpush1.msra.mxu0 %v69
  %1761 = vmatprep.subr.mxu0 %v74
  %1762 = vmatpush1.msra.mxu0 %v73
  %1763 = vmatprep.subr.mxu0 %v78
  %1764 = vmatpush1.msra.mxu0 %v77
  %1765 = vmatprep.subr.mxu0 %v82
  %1766 = vmatpush1.msra.mxu0 %v81
  %1767 = vmatprep.subr.mxu0 %v86
  %1768 = vmatpush1.msra.mxu0 %v85
  %1769 = vmatprep.subr.mxu0 %v90
  %1770 = vmatpush1.msra.mxu0 %v89
  %1771 = vmatprep.subr.mxu0 %v94
  %1772 = vmatpush1.msra.mxu0 %v93
  %1773 = vmatprep.subr.mxu0 %v98
  %1774 = vmatpush1.msra.mxu0 %v97
  %1775 = vmatprep.subr.mxu0 %v102
  %1776 = vmatpush1.msra.mxu0 %v101
  %1777 = vmatprep.subr.mxu0 %v106
  %1778 = vmatpush1.msra.mxu0 %v105
  %1779 = vmatprep.subr.mxu0 %v110
  %1780 = vmatpush1.msra.mxu0 %v109
  %1781 = vmatprep.subr.mxu0 %v114
  %1782 = vmatpush1.msra.mxu0 %v113
  %1783 = vmatprep.subr.mxu0 %v118
  %1784 = vmatpush1.msra.mxu0 %v117
  %1785 = vmatprep.subr.mxu0 %v122
  %1786 = vmatpush1.msra.mxu0 %v121
  %1787 = vmatprep.subr.mxu0 %v126
  %1788 = vmatpush1.msra.mxu0 %v125
  %1789 = vmatprep.subr.mxu0 %v130
  %1790 = vmatpush1.msra.mxu0 %v129
  %1791 = vmatprep.subr.mxu0 %v134
  %1792 = vmatpush1.msra.mxu0 %v133
  %1793 = vmatprep.subr.mxu0 %v138
  %1794 = vmatpush1.msra.mxu0 %v137
  %1795 = vmatprep.subr.mxu0 %v142
  %1796 = vmatpush1.msra.mxu0 %v141
  %1797 = vmatprep.subr.mxu0 %v146
  %1798 = vmatpush1.msra.mxu0 %v145
  %1799 = vmatprep.subr.mxu0 %v150
  %1800 = vmatpush1.msra.mxu0 %v149
  %1801 = vmatprep.subr.mxu0 %v154
  %1802 = vmatpush1.msra.mxu0 %v153
  %1803 = vmatprep.subr.mxu0 %v158
  %1804 = vmatpush1.msra.mxu0 %v157
  %1805 = vmatprep.subr.mxu0 %v162
  %1806 = vmatpush1.msra.mxu0 %v161
  %1807 = vmatprep.mubr.f32.mxu0 %v1503
  %1808 = vmatmul.mubr.f32.gmra.mrb[0].mxu0 %v1671
  %v1809 = vpop.f32.mrb[0].mxu0
  %v1810 = vadd.f32 %v304, %v1809
  %v1811 = vpop.f32.mrb[0].mxu0
  %v1812 = vadd.f32 %v308, %v1811
  %1813 = vdwg.mxu0
  %v1814 = vxor.u32 %v1739, 2147483648
  %v1815 = vmul.f32 %v1814, 1.442695
  %v1816 = vpow.pop %v1815
  %v1817 = vadd.f32 %v1816, 1.0
  %v1818 = vrcp.pop %v1817
  %v1819 = vmul.f32 1.0, %v1818
  %v1820 = vxor.u32 %v1741, 2147483648
  %v1821 = vmul.f32 %v1820, 1.442695
  %v1822 = vpow.pop %v1821
  %v1823 = vadd.f32 %v1822, 1.0
  %v1824 = vrcp.pop %v1823
  %v1825 = vmul.f32 1.0, %v1824
  %v1826 = vtanh.pop %v1810
  %v1827 = vxor.u32 %v1812, 2147483648
  %v1828 = vmul.f32 %v1827, 1.442695
  %v1829 = vpow.pop %v1828
  %v1830 = vadd.f32 %v1829, 1.0
  %v1831 = vrcp.pop %v1830
  %v1832 = vmul.f32 1.0, %v1831
  %v1833 = vmul.f32 %v1825, %v1501
  %v1834 = vmul.f32 %v1819, %v1826
  %v1835 = vadd.f32 %v1833, %v1834
  %v1836 = vtanh.pop %v1835
  %v1837 = vmul.f32 %v1832, %v1836
  %1838 = vmatprep.subr.mxu0 %v164
  %1839 = vmatpush1.msra.mxu0 %v163
  %1840 = vmatprep.subr.mxu0 %v168
  %1841 = vmatpush1.msra.mxu0 %v167
  %1842 = vmatprep.subr.mxu0 %v172
  %1843 = vmatpush1.msra.mxu0 %v171
  %1844 = vmatprep.subr.mxu0 %v176
  %1845 = vmatpush1.msra.mxu0 %v175
  %1846 = vmatprep.subr.mxu0 %v180
  %1847 = vmatpush1.msra.mxu0 %v179
  %1848 = vmatprep.subr.mxu0 %v184
  %1849 = vmatpush1.msra.mxu0 %v183
  %1850 = vmatprep.subr.mxu0 %v188
  %1851 = vmatpush1.msra.mxu0 %v187
  %1852 = vmatprep.subr.mxu0 %v192
  %1853 = vmatpush1.msra.mxu0 %v191
  %1854 = vmatprep.subr.mxu0 %v196
  %1855 = vmatpush1.msra.mxu0 %v195
  %1856 = vmatprep.subr.mxu0 %v200
  %1857 = vmatpush1.msra.mxu0 %v199
  %1858 = vmatprep.subr.mxu0 %v204
  %1859 = vmatpush1.msra.mxu0 %v203
  %1860 = vmatprep.subr.mxu0 %v208
  %1861 = vmatpush1.msra.mxu0 %v207
  %1862 = vmatprep.subr.mxu0 %v212
  %1863 = vmatpush1.msra.mxu0 %v211
  %1864 = vmatprep.subr.mxu0 %v216
  %1865 = vmatpush1.msra.mxu0 %v215
  %1866 = vmatprep.subr.mxu0 %v220
  %1867 = vmatpush1.msra.mxu0 %v219
  %1868 = vmatprep.subr.mxu0 %v224
  %1869 = vmatpush1.msra.mxu0 %v223
  %1870 = vmatprep.subr.mxu0 %v228
  %1871 = vmatpush1.msra.mxu0 %v227
  %1872 = vmatprep.subr.mxu0 %v232
  %1873 = vmatpush1.msra.mxu0 %v231
  %1874 = vmatprep.subr.mxu0 %v236
  %1875 = vmatpush1.msra.mxu0 %v235
  %1876 = vmatprep.subr.mxu0 %v240
  %1877 = vmatpush1.msra.mxu0 %v239
  %1878 = vmatprep.subr.mxu0 %v244
  %1879 = vmatpush1.msra.mxu0 %v243
  %1880 = vmatprep.subr.mxu0 %v248
  %1881 = vmatpush1.msra.mxu0 %v247
  %1882 = vmatprep.subr.mxu0 %v252
  %1883 = vmatpush1.msra.mxu0 %v251
  %1884 = vmatprep.subr.mxu0 %v256
  %1885 = vmatpush1.msra.mxu0 %v255
  %1886 = vmatprep.subr.mxu0 %v260
  %1887 = vmatpush1.msra.mxu0 %v259
  %1888 = vmatprep.subr.mxu0 %v264
  %1889 = vmatpush1.msra.mxu0 %v263
  %1890 = vmatprep.subr.mxu0 %v268
  %1891 = vmatpush1.msra.mxu0 %v267
  %1892 = vmatprep.subr.mxu0 %v272
  %1893 = vmatpush1.msra.mxu0 %v271
  %1894 = vmatprep.subr.mxu0 %v276
  %1895 = vmatpush1.msra.mxu0 %v275
  %1896 = vmatprep.subr.mxu0 %v280
  %1897 = vmatpush1.msra.mxu0 %v279
  %1898 = vmatprep.subr.mxu0 %v284
  %1899 = vmatpush1.msra.mxu0 %v283
  %1900 = vmatprep.subr.mxu0 %v288
  %1901 = vmatpush1.msra.mxu0 %v287
  %1902 = vmatprep.mubr.f32.mxu0 %v1669
  %1903 = vmatmul.mubr.f32.gmra.mrb[0].mxu0 %v1837
  %v1904 = vpop.f32.mrb[0].mxu0
  %v1905 = vadd.f32 %v318, %v1904
  %v1906 = vpop.f32.mrb[0].mxu0
  %v1907 = vadd.f32 %v322, %v1906
  %1908 = vdwg.mxu0
  %1909 = vmatprep.subr.mxu0 %v166
  %1910 = vmatpush1.msra.mxu0 %v165
  %1911 = vmatprep.subr.mxu0 %v170
  %1912 = vmatpush1.msra.mxu0 %v169
  %1913 = vmatprep.subr.mxu0 %v174
  %1914 = vmatpush1.msra.mxu0 %v173
  %1915 = vmatprep.subr.mxu0 %v178
  %1916 = vmatpush1.msra.mxu0 %v177
  %1917 = vmatprep.subr.mxu0 %v182
  %1918 = vmatpush1.msra.mxu0 %v181
  %1919 = vmatprep.subr.mxu0 %v186
  %1920 = vmatpush1.msra.mxu0 %v185
  %1921 = vmatprep.subr.mxu0 %v190
  %1922 = vmatpush1.msra.mxu0 %v189
  %1923 = vmatprep.subr.mxu0 %v194
  %1924 = vmatpush1.msra.mxu0 %v193
  %1925 = vmatprep.subr.mxu0 %v198
  %1926 = vmatpush1.msra.mxu0 %v197
  %1927 = vmatprep.subr.mxu0 %v202
  %1928 = vmatpush1.msra.mxu0 %v201
  %1929 = vmatprep.subr.mxu0 %v206
  %1930 = vmatpush1.msra.mxu0 %v205
  %1931 = vmatprep.subr.mxu0 %v210
  %1932 = vmatpush1.msra.mxu0 %v209
  %1933 = vmatprep.subr.mxu0 %v214
  %1934 = vmatpush1.msra.mxu0 %v213
  %1935 = vmatprep.subr.mxu0 %v218
  %1936 = vmatpush1.msra.mxu0 %v217
  %1937 = vmatprep.subr.mxu0 %v222
  %1938 = vmatpush1.msra.mxu0 %v221
  %1939 = vmatprep.subr.mxu0 %v226
  %1940 = vmatpush1.msra.mxu0 %v225
  %1941 = vmatprep.subr.mxu0 %v230
  %1942 = vmatpush1.msra.mxu0 %v229
  %1943 = vmatprep.subr.mxu0 %v234
  %1944 = vmatpush1.msra.mxu0 %v233
  %1945 = vmatprep.subr.mxu0 %v238
  %1946 = vmatpush1.msra.mxu0 %v237
  %1947 = vmatprep.subr.mxu0 %v242
  %1948 = vmatpush1.msra.mxu0 %v241
  %1949 = vmatprep.subr.mxu0 %v246
  %1950 = vmatpush1.msra.mxu0 %v245
  %1951 = vmatprep.subr.mxu0 %v250
  %1952 = vmatpush1.msra.mxu0 %v249
  %1953 = vmatprep.subr.mxu0 %v254
  %1954 = vmatpush1.msra.mxu0 %v253
  %1955 = vmatprep.subr.mxu0 %v258
  %1956 = vmatpush1.msra.mxu0 %v257
  %1957 = vmatprep.subr.mxu0 %v262
  %1958 = vmatpush1.msra.mxu0 %v261
  %1959 = vmatprep.subr.mxu0 %v266
  %1960 = vmatpush1.msra.mxu0 %v265
  %1961 = vmatprep.subr.mxu0 %v270
  %1962 = vmatpush1.msra.mxu0 %v269
  %1963 = vmatprep.subr.mxu0 %v274
  %1964 = vmatpush1.msra.mxu0 %v273
  %1965 = vmatprep.subr.mxu0 %v278
  %1966 = vmatpush1.msra.mxu0 %v277
  %1967 = vmatprep.subr.mxu0 %v282
  %1968 = vmatpush1.msra.mxu0 %v281
  %1969 = vmatprep.subr.mxu0 %v286
  %1970 = vmatpush1.msra.mxu0 %v285
  %1971 = vmatprep.subr.mxu0 %v290
  %1972 = vmatpush1.msra.mxu0 %v289
  %1973 = vmatprep.mubr.f32.mxu0 %v1669
  %1974 = vmatmul.mubr.f32.gmra.mrb[0].mxu0 %v1837
  %v1975 = vpop.f32.mrb[0].mxu0
  %v1976 = vadd.f32 %v326, %v1975
  %v1977 = vpop.f32.mrb[0].mxu0
  %v1978 = vadd.f32 %v330, %v1977
  %1979 = vdwg.mxu0
  %v1980 = vxor.u32 %v1905, 2147483648
  %v1981 = vmul.f32 %v1980, 1.442695
  %v1982 = vpow.pop %v1981
  %v1983 = vadd.f32 %v1982, 1.0
  %v1984 = vrcp.pop %v1983
  %v1985 = vmul.f32 1.0, %v1984
  %v1986 = vxor.u32 %v1907, 2147483648
  %v1987 = vmul.f32 %v1986, 1.442695
  %v1988 = vpow.pop %v1987
  %v1989 = vadd.f32 %v1988, 1.0
  %v1990 = vrcp.pop %v1989
  %v1991 = vmul.f32 1.0, %v1990
  %v1992 = vtanh.pop %v1976
  %v1993 = vxor.u32 %v1978, 2147483648
  %v1994 = vmul.f32 %v1993, 1.442695
  %v1995 = vpow.pop %v1994
  %v1996 = vadd.f32 %v1995, 1.0
  %v1997 = vrcp.pop %v1996
  %v1998 = vmul.f32 1.0, %v1997
  %v1999 = vmul.f32 %v1991, %v1667
  %v2000 = vmul.f32 %v1985, %v1992
  %v2001 = vadd.f32 %v1999, %v2000
  %v2002 = vtanh.pop %v2001
  %v2003 = vmul.f32 %v1998, %v2002
  %s2004 = scalar_lea.vmem %s0, 40
  %v2005 = vld [vmem:[%s2004] sm:$0xff]
  %2006 = vmatprep.subr.mxu0 %v36
  %2007 = vmatpush1.msra.mxu0 %v35
  %2008 = vmatprep.subr.mxu0 %v40
  %2009 = vmatpush1.msra.mxu0 %v39
  %2010 = vmatprep.subr.mxu0 %v44
  %2011 = vmatpush1.msra.mxu0 %v43
  %2012 = vmatprep.subr.mxu0 %v48
  %2013 = vmatpush1.msra.mxu0 %v47
  %2014 = vmatprep.subr.mxu0 %v52
  %2015 = vmatpush1.msra.mxu0 %v51
  %2016 = vmatprep.subr.mxu0 %v56
  %2017 = vmatpush1.msra.mxu0 %v55
  %2018 = vmatprep.subr.mxu0 %v60
  %2019 = vmatpush1.msra.mxu0 %v59
  %2020 = vmatprep.subr.mxu0 %v64
  %2021 = vmatpush1.msra.mxu0 %v63
  %2022 = vmatprep.subr.mxu0 %v68
  %2023 = vmatpush1.msra.mxu0 %v67
  %2024 = vmatprep.subr.mxu0 %v72
  %2025 = vmatpush1.msra.mxu0 %v71
  %2026 = vmatprep.subr.mxu0 %v76
  %2027 = vmatpush1.msra.mxu0 %v75
  %2028 = vmatprep.subr.mxu0 %v80
  %2029 = vmatpush1.msra.mxu0 %v79
  %2030 = vmatprep.subr.mxu0 %v84
  %2031 = vmatpush1.msra.mxu0 %v83
  %2032 = vmatprep.subr.mxu0 %v88
  %2033 = vmatpush1.msra.mxu0 %v87
  %2034 = vmatprep.subr.mxu0 %v92
  %2035 = vmatpush1.msra.mxu0 %v91
  %2036 = vmatprep.subr.mxu0 %v96
  %2037 = vmatpush1.msra.mxu0 %v95
  %2038 = vmatprep.subr.mxu0 %v100
  %2039 = vmatpush1.msra.mxu0 %v99
  %2040 = vmatprep.subr.mxu0 %v104
  %2041 = vmatpush1.msra.mxu0 %v103
  %2042 = vmatprep.subr.mxu0 %v108
  %2043 = vmatpush1.msra.mxu0 %v107
  %2044 = vmatprep.subr.mxu0 %v112
  %2045 = vmatpush1.msra.mxu0 %v111
  %2046 = vmatprep.subr.mxu0 %v116
  %2047 = vmatpush1.msra.mxu0 %v115
  %2048 = vmatprep.subr.mxu0 %v120
  %2049 = vmatpush1.msra.mxu0 %v119
  %2050 = vmatprep.subr.mxu0 %v124
  %2051 = vmatpush1.msra.mxu0 %v123
  %2052 = vmatprep.subr.mxu0 %v128
  %2053 = vmatpush1.msra.mxu0 %v127
  %2054 = vmatprep.subr.mxu0 %v132
  %2055 = vmatpush1.msra.mxu0 %v131
  %2056 = vmatprep.subr.mxu0 %v136
  %2057 = vmatpush1.msra.mxu0 %v135
  %2058 = vmatprep.subr.mxu0 %v140
  %2059 = vmatpush1.msra.mxu0 %v139
  %2060 = vmatprep.subr.mxu0 %v144
  %2061 = vmatpush1.msra.mxu0 %v143
  %2062 = vmatprep.subr.mxu0 %v148
  %2063 = vmatpush1.msra.mxu0 %v147
  %2064 = vmatprep.subr.mxu0 %v152
  %2065 = vmatpush1.msra.mxu0 %v151
  %2066 = vmatprep.subr.mxu0 %v156
  %2067 = vmatpush1.msra.mxu0 %v155
  %2068 = vmatprep.subr.mxu0 %v160
  %2069 = vmatpush1.msra.mxu0 %v159
  %2070 = vmatprep.mubr.f32.mxu0 %v1837
  %2071 = vmatmul.mubr.f32.gmra.mrb[0].mxu0 %v2005
  %v2072 = vpop.f32.mrb[0].mxu0
  %v2073 = vadd.f32 %v296, %v2072
  %v2074 = vpop.f32.mrb[0].mxu0
  %v2075 = vadd.f32 %v300, %v2074
  %2076 = vdwg.mxu0
  %2077 = vmatprep.subr.mxu0 %v38
  %2078 = vmatpush1.msra.mxu0 %v37
  %2079 = vmatprep.subr.mxu0 %v42
  %2080 = vmatpush1.msra.mxu0 %v41
  %2081 = vmatprep.subr.mxu0 %v46
  %2082 = vmatpush1.msra.mxu0 %v45
  %2083 = vmatprep.subr.mxu0 %v50
  %2084 = vmatpush1.msra.mxu0 %v49
  %2085 = vmatprep.subr.mxu0 %v54
  %2086 = vmatpush1.msra.mxu0 %v53
  %2087 = vmatprep.subr.mxu0 %v58
  %2088 = vmatpush1.msra.mxu0 %v57
  %2089 = vmatprep.subr.mxu0 %v62
  %2090 = vmatpush1.msra.mxu0 %v61
  %2091 = vmatprep.subr.mxu0 %v66
  %2092 = vmatpush1.msra.mxu0 %v65
  %2093 = vmatprep.subr.mxu0 %v70
  %2094 = vmatpush1.msra.mxu0 %v69
  %2095 = vmatprep.subr.mxu0 %v74
  %2096 = vmatpush1.msra.mxu0 %v73
  %2097 = vmatprep.subr.mxu0 %v78
  %2098 = vmatpush1.msra.mxu0 %v77
  %2099 = vmatprep.subr.mxu0 %v82
  %2100 = vmatpush1.msra.mxu0 %v81
  %2101 = vmatprep.subr.mxu0 %v86
  %2102 = vmatpush1.msra.mxu0 %v85
  %2103 = vmatprep.subr.mxu0 %v90
  %2104 = vmatpush1.msra.mxu0 %v89
  %2105 = vmatprep.subr.mxu0 %v94
  %2106 = vmatpush1.msra.mxu0 %v93
  %2107 = vmatprep.subr.mxu0 %v98
  %2108 = vmatpush1.msra.mxu0 %v97
  %2109 = vmatprep.subr.mxu0 %v102
  %2110 = vmatpush1.msra.mxu0 %v101
  %2111 = vmatprep.subr.mxu0 %v106
  %2112 = vmatpush1.msra.mxu0 %v105
  %2113 = vmatprep.subr.mxu0 %v110
  %2114 = vmatpush1.msra.mxu0 %v109
  %2115 = vmatprep.subr.mxu0 %v114
  %2116 = vmatpush1.msra.mxu0 %v113
  %2117 = vmatprep.subr.mxu0 %v118
  %2118 = vmatpush1.msra.mxu0 %v117
  %2119 = vmatprep.subr.mxu0 %v122
  %2120 = vmatpush1.msra.mxu0 %v121
  %2121 = vmatprep.subr.mxu0 %v126
  %2122 = vmatpush1.msra.mxu0 %v125
  %2123 = vmatprep.subr.mxu0 %v130
  %2124 = vmatpush1.msra.mxu0 %v129
  %2125 = vmatprep.subr.mxu0 %v134
  %2126 = vmatpush1.msra.mxu0 %v133
  %2127 = vmatprep.subr.mxu0 %v138
  %2128 = vmatpush1.msra.mxu0 %v137
  %2129 = vmatprep.subr.mxu0 %v142
  %2130 = vmatpush1.msra.mxu0 %v141
  %2131 = vmatprep.subr.mxu0 %v146
  %2132 = vmatpush1.msra.mxu0 %v145
  %2133 = vmatprep.subr.mxu0 %v150
  %2134 = vmatpush1.msra.mxu0 %v149
  %2135 = vmatprep.subr.mxu0 %v154
  %2136 = vmatpush1.msra.mxu0 %v153
  %2137 = vmatprep.subr.mxu0 %v158
  %2138 = vmatpush1.msra.mxu0 %v157
  %2139 = vmatprep.subr.mxu0 %v162
  %2140 = vmatpush1.msra.mxu0 %v161
  %2141 = vmatprep.mubr.f32.mxu0 %v1837
  %2142 = vmatmul.mubr.f32.gmra.mrb[0].mxu0 %v2005
  %v2143 = vpop.f32.mrb[0].mxu0
  %v2144 = vadd.f32 %v304, %v2143
  %v2145 = vpop.f32.mrb[0].mxu0
  %v2146 = vadd.f32 %v308, %v2145
  %2147 = vdwg.mxu0
  %v2148 = vxor.u32 %v2073, 2147483648
  %v2149 = vmul.f32 %v2148, 1.442695
  %v2150 = vpow.pop %v2149
  %v2151 = vadd.f32 %v2150, 1.0
  %v2152 = vrcp.pop %v2151
  %v2153 = vmul.f32 1.0, %v2152
  %v2154 = vxor.u32 %v2075, 2147483648
  %v2155 = vmul.f32 %v2154, 1.442695
  %v2156 = vpow.pop %v2155
  %v2157 = vadd.f32 %v2156, 1.0
  %v2158 = vrcp.pop %v2157
  %v2159 = vmul.f32 1.0, %v2158
  %v2160 = vtanh.pop %v2144
  %v2161 = vxor.u32 %v2146, 2147483648
  %v2162 = vmul.f32 %v2161, 1.442695
  %v2163 = vpow.pop %v2162
  %v2164 = vadd.f32 %v2163, 1.0
  %v2165 = vrcp.pop %v2164
  %v2166 = vmul.f32 1.0, %v2165
  %v2167 = vmul.f32 %v2159, %v1835
  %v2168 = vmul.f32 %v2153, %v2160
  %v2169 = vadd.f32 %v2167, %v2168
  %v2170 = vtanh.pop %v2169
  %v2171 = vmul.f32 %v2166, %v2170
  %2172 = vmatprep.subr.mxu0 %v164
  %2173 = vmatpush1.msra.mxu0 %v163
  %2174 = vmatprep.subr.mxu0 %v168
  %2175 = vmatpush1.msra.mxu0 %v167
  %2176 = vmatprep.subr.mxu0 %v172
  %2177 = vmatpush1.msra.mxu0 %v171
  %2178 = vmatprep.subr.mxu0 %v176
  %2179 = vmatpush1.msra.mxu0 %v175
  %2180 = vmatprep.subr.mxu0 %v180
  %2181 = vmatpush1.msra.mxu0 %v179
  %2182 = vmatprep.subr.mxu0 %v184
  %2183 = vmatpush1.msra.mxu0 %v183
  %2184 = vmatprep.subr.mxu0 %v188
  %2185 = vmatpush1.msra.mxu0 %v187
  %2186 = vmatprep.subr.mxu0 %v192
  %2187 = vmatpush1.msra.mxu0 %v191
  %2188 = vmatprep.subr.mxu0 %v196
  %2189 = vmatpush1.msra.mxu0 %v195
  %2190 = vmatprep.subr.mxu0 %v200
  %2191 = vmatpush1.msra.mxu0 %v199
  %2192 = vmatprep.subr.mxu0 %v204
  %2193 = vmatpush1.msra.mxu0 %v203
  %2194 = vmatprep.subr.mxu0 %v208
  %2195 = vmatpush1.msra.mxu0 %v207
  %2196 = vmatprep.subr.mxu0 %v212
  %2197 = vmatpush1.msra.mxu0 %v211
  %2198 = vmatprep.subr.mxu0 %v216
  %2199 = vmatpush1.msra.mxu0 %v215
  %2200 = vmatprep.subr.mxu0 %v220
  %2201 = vmatpush1.msra.mxu0 %v219
  %2202 = vmatprep.subr.mxu0 %v224
  %2203 = vmatpush1.msra.mxu0 %v223
  %2204 = vmatprep.subr.mxu0 %v228
  %2205 = vmatpush1.msra.mxu0 %v227
  %2206 = vmatprep.subr.mxu0 %v232
  %2207 = vmatpush1.msra.mxu0 %v231
  %2208 = vmatprep.subr.mxu0 %v236
  %2209 = vmatpush1.msra.mxu0 %v235
  %2210 = vmatprep.subr.mxu0 %v240
  %2211 = vmatpush1.msra.mxu0 %v239
  %2212 = vmatprep.subr.mxu0 %v244
  %2213 = vmatpush1.msra.mxu0 %v243
  %2214 = vmatprep.subr.mxu0 %v248
  %2215 = vmatpush1.msra.mxu0 %v247
  %2216 = vmatprep.subr.mxu0 %v252
  %2217 = vmatpush1.msra.mxu0 %v251
  %2218 = vmatprep.subr.mxu0 %v256
  %2219 = vmatpush1.msra.mxu0 %v255
  %2220 = vmatprep.subr.mxu0 %v260
  %2221 = vmatpush1.msra.mxu0 %v259
  %2222 = vmatprep.subr.mxu0 %v264
  %2223 = vmatpush1.msra.mxu0 %v263
  %2224 = vmatprep.subr.mxu0 %v268
  %2225 = vmatpush1.msra.mxu0 %v267
  %2226 = vmatprep.subr.mxu0 %v272
  %2227 = vmatpush1.msra.mxu0 %v271
  %2228 = vmatprep.subr.mxu0 %v276
  %2229 = vmatpush1.msra.mxu0 %v275
  %2230 = vmatprep.subr.mxu0 %v280
  %2231 = vmatpush1.msra.mxu0 %v279
  %2232 = vmatprep.subr.mxu0 %v284
  %2233 = vmatpush1.msra.mxu0 %v283
  %2234 = vmatprep.subr.mxu0 %v288
  %2235 = vmatpush1.msra.mxu0 %v287
  %2236 = vmatprep.mubr.f32.mxu0 %v2003
  %2237 = vmatmul.mubr.f32.gmra.mrb[0].mxu0 %v2171
  %v2238 = vpop.f32.mrb[0].mxu0
  %v2239 = vadd.f32 %v318, %v2238
  %v2240 = vpop.f32.mrb[0].mxu0
  %v2241 = vadd.f32 %v322, %v2240
  %2242 = vdwg.mxu0
  %2243 = vmatprep.subr.mxu0 %v166
  %2244 = vmatpush1.msra.mxu0 %v165
  %2245 = vmatprep.subr.mxu0 %v170
  %2246 = vmatpush1.msra.mxu0 %v169
  %2247 = vmatprep.subr.mxu0 %v174
  %2248 = vmatpush1.msra.mxu0 %v173
  %2249 = vmatprep.subr.mxu0 %v178
  %2250 = vmatpush1.msra.mxu0 %v177
  %2251 = vmatprep.subr.mxu0 %v182
  %2252 = vmatpush1.msra.mxu0 %v181
  %2253 = vmatprep.subr.mxu0 %v186
  %2254 = vmatpush1.msra.mxu0 %v185
  %2255 = vmatprep.subr.mxu0 %v190
  %2256 = vmatpush1.msra.mxu0 %v189
  %2257 = vmatprep.subr.mxu0 %v194
  %2258 = vmatpush1.msra.mxu0 %v193
  %2259 = vmatprep.subr.mxu0 %v198
  %2260 = vmatpush1.msra.mxu0 %v197
  %2261 = vmatprep.subr.mxu0 %v202
  %2262 = vmatpush1.msra.mxu0 %v201
  %2263 = vmatprep.subr.mxu0 %v206
  %2264 = vmatpush1.msra.mxu0 %v205
  %2265 = vmatprep.subr.mxu0 %v210
  %2266 = vmatpush1.msra.mxu0 %v209
  %2267 = vmatprep.subr.mxu0 %v214
  %2268 = vmatpush1.msra.mxu0 %v213
  %2269 = vmatprep.subr.mxu0 %v218
  %2270 = vmatpush1.msra.mxu0 %v217
  %2271 = vmatprep.subr.mxu0 %v222
  %2272 = vmatpush1.msra.mxu0 %v221
  %2273 = vmatprep.subr.mxu0 %v226
  %2274 = vmatpush1.msra.mxu0 %v225
  %2275 = vmatprep.subr.mxu0 %v230
  %2276 = vmatpush1.msra.mxu0 %v229
  %2277 = vmatprep.subr.mxu0 %v234
  %2278 = vmatpush1.msra.mxu0 %v233
  %2279 = vmatprep.subr.mxu0 %v238
  %2280 = vmatpush1.msra.mxu0 %v237
  %2281 = vmatprep.subr.mxu0 %v242
  %2282 = vmatpush1.msra.mxu0 %v241
  %2283 = vmatprep.subr.mxu0 %v246
  %2284 = vmatpush1.msra.mxu0 %v245
  %2285 = vmatprep.subr.mxu0 %v250
  %2286 = vmatpush1.msra.mxu0 %v249
  %2287 = vmatprep.subr.mxu0 %v254
  %2288 = vmatpush1.msra.mxu0 %v253
  %2289 = vmatprep.subr.mxu0 %v258
  %2290 = vmatpush1.msra.mxu0 %v257
  %2291 = vmatprep.subr.mxu0 %v262
  %2292 = vmatpush1.msra.mxu0 %v261
  %2293 = vmatprep.subr.mxu0 %v266
  %2294 = vmatpush1.msra.mxu0 %v265
  %2295 = vmatprep.subr.mxu0 %v270
  %2296 = vmatpush1.msra.mxu0 %v269
  %2297 = vmatprep.subr.mxu0 %v274
  %2298 = vmatpush1.msra.mxu0 %v273
  %2299 = vmatprep.subr.mxu0 %v278
  %2300 = vmatpush1.msra.mxu0 %v277
  %2301 = vmatprep.subr.mxu0 %v282
  %2302 = vmatpush1.msra.mxu0 %v281
  %2303 = vmatprep.subr.mxu0 %v286
  %2304 = vmatpush1.msra.mxu0 %v285
  %2305 = vmatprep.subr.mxu0 %v290
  %2306 = vmatpush1.msra.mxu0 %v289
  %2307 = vmatprep.mubr.f32.mxu0 %v2003
  %2308 = vmatmul.mubr.f32.gmra.mrb[0].mxu0 %v2171
  %v2309 = vpop.f32.mrb[0].mxu0
  %v2310 = vadd.f32 %v326, %v2309
  %v2311 = vpop.f32.mrb[0].mxu0
  %v2312 = vadd.f32 %v330, %v2311
  %2313 = vdwg.mxu0
  %v2314 = vxor.u32 %v2239, 2147483648
  %v2315 = vmul.f32 %v2314, 1.442695
  %v2316 = vpow.pop %v2315
  %v2317 = vadd.f32 %v2316, 1.0
  %v2318 = vrcp.pop %v2317
  %v2319 = vmul.f32 1.0, %v2318
  %v2320 = vxor.u32 %v2241, 2147483648
  %v2321 = vmul.f32 %v2320, 1.442695
  %v2322 = vpow.pop %v2321
  %v2323 = vadd.f32 %v2322, 1.0
  %v2324 = vrcp.pop %v2323
  %v2325 = vmul.f32 1.0, %v2324
  %v2326 = vtanh.pop %v2310
  %v2327 = vxor.u32 %v2312, 2147483648
  %v2328 = vmul.f32 %v2327, 1.442695
  %v2329 = vpow.pop %v2328
  %v2330 = vadd.f32 %v2329, 1.0
  %v2331 = vrcp.pop %v2330
  %v2332 = vmul.f32 1.0, %v2331
  %v2333 = vmul.f32 %v2325, %v2001
  %v2334 = vmul.f32 %v2319, %v2326
  %v2335 = vadd.f32 %v2333, %v2334
  %v2336 = vtanh.pop %v2335
  %v2337 = vmul.f32 %v2332, %v2336
  %s2338 = scalar_lea.vmem %s0, 48
  %v2339 = vld [vmem:[%s2338] sm:$0xff]
  %2340 = vmatprep.subr.mxu0 %v36
  %2341 = vmatpush1.msra.mxu0 %v35
  %2342 = vmatprep.subr.mxu0 %v40
  %2343 = vmatpush1.msra.mxu0 %v39
  %2344 = vmatprep.subr.mxu0 %v44
  %2345 = vmatpush1.msra.mxu0 %v43
  %2346 = vmatprep.subr.mxu0 %v48
  %2347 = vmatpush1.msra.mxu0 %v47
  %2348 = vmatprep.subr.mxu0 %v52
  %2349 = vmatpush1.msra.mxu0 %v51
  %2350 = vmatprep.subr.mxu0 %v56
  %2351 = vmatpush1.msra.mxu0 %v55
  %2352 = vmatprep.subr.mxu0 %v60
  %2353 = vmatpush1.msra.mxu0 %v59
  %2354 = vmatprep.subr.mxu0 %v64
  %2355 = vmatpush1.msra.mxu0 %v63
  %2356 = vmatprep.subr.mxu0 %v68
  %2357 = vmatpush1.msra.mxu0 %v67
  %2358 = vmatprep.subr.mxu0 %v72
  %2359 = vmatpush1.msra.mxu0 %v71
  %2360 = vmatprep.subr.mxu0 %v76
  %2361 = vmatpush1.msra.mxu0 %v75
  %2362 = vmatprep.subr.mxu0 %v80
  %2363 = vmatpush1.msra.mxu0 %v79
  %2364 = vmatprep.subr.mxu0 %v84
  %2365 = vmatpush1.msra.mxu0 %v83
  %2366 = vmatprep.subr.mxu0 %v88
  %2367 = vmatpush1.msra.mxu0 %v87
  %2368 = vmatprep.subr.mxu0 %v92
  %2369 = vmatpush1.msra.mxu0 %v91
  %2370 = vmatprep.subr.mxu0 %v96
  %2371 = vmatpush1.msra.mxu0 %v95
  %2372 = vmatprep.subr.mxu0 %v100
  %2373 = vmatpush1.msra.mxu0 %v99
  %2374 = vmatprep.subr.mxu0 %v104
  %2375 = vmatpush1.msra.mxu0 %v103
  %2376 = vmatprep.subr.mxu0 %v108
  %2377 = vmatpush1.msra.mxu0 %v107
  %2378 = vmatprep.subr.mxu0 %v112
  %2379 = vmatpush1.msra.mxu0 %v111
  %2380 = vmatprep.subr.mxu0 %v116
  %2381 = vmatpush1.msra.mxu0 %v115
  %2382 = vmatprep.subr.mxu0 %v120
  %2383 = vmatpush1.msra.mxu0 %v119
  %2384 = vmatprep.subr.mxu0 %v124
  %2385 = vmatpush1.msra.mxu0 %v123
  %2386 = vmatprep.subr.mxu0 %v128
  %2387 = vmatpush1.msra.mxu0 %v127
  %2388 = vmatprep.subr.mxu0 %v132
  %2389 = vmatpush1.msra.mxu0 %v131
  %2390 = vmatprep.subr.mxu0 %v136
  %2391 = vmatpush1.msra.mxu0 %v135
  %2392 = vmatprep.subr.mxu0 %v140
  %2393 = vmatpush1.msra.mxu0 %v139
  %2394 = vmatprep.subr.mxu0 %v144
  %2395 = vmatpush1.msra.mxu0 %v143
  %2396 = vmatprep.subr.mxu0 %v148
  %2397 = vmatpush1.msra.mxu0 %v147
  %2398 = vmatprep.subr.mxu0 %v152
  %2399 = vmatpush1.msra.mxu0 %v151
  %2400 = vmatprep.subr.mxu0 %v156
  %2401 = vmatpush1.msra.mxu0 %v155
  %2402 = vmatprep.subr.mxu0 %v160
  %2403 = vmatpush1.msra.mxu0 %v159
  %2404 = vmatprep.mubr.f32.mxu0 %v2171
  %2405 = vmatmul.mubr.f32.gmra.mrb[0].mxu0 %v2339
  %v2406 = vpop.f32.mrb[0].mxu0
  %v2407 = vadd.f32 %v296, %v2406
  %v2408 = vpop.f32.mrb[0].mxu0
  %v2409 = vadd.f32 %v300, %v2408
  %2410 = vdwg.mxu0
  %2411 = vmatprep.subr.mxu0 %v38
  %2412 = vmatpush1.msra.mxu0 %v37
  %2413 = vmatprep.subr.mxu0 %v42
  %2414 = vmatpush1.msra.mxu0 %v41
  %2415 = vmatprep.subr.mxu0 %v46
  %2416 = vmatpush1.msra.mxu0 %v45
  %2417 = vmatprep.subr.mxu0 %v50
  %2418 = vmatpush1.msra.mxu0 %v49
  %2419 = vmatprep.subr.mxu0 %v54
  %2420 = vmatpush1.msra.mxu0 %v53
  %2421 = vmatprep.subr.mxu0 %v58
  %2422 = vmatpush1.msra.mxu0 %v57
  %2423 = vmatprep.subr.mxu0 %v62
  %2424 = vmatpush1.msra.mxu0 %v61
  %2425 = vmatprep.subr.mxu0 %v66
  %2426 = vmatpush1.msra.mxu0 %v65
  %2427 = vmatprep.subr.mxu0 %v70
  %2428 = vmatpush1.msra.mxu0 %v69
  %2429 = vmatprep.subr.mxu0 %v74
  %2430 = vmatpush1.msra.mxu0 %v73
  %2431 = vmatprep.subr.mxu0 %v78
  %2432 = vmatpush1.msra.mxu0 %v77
  %2433 = vmatprep.subr.mxu0 %v82
  %2434 = vmatpush1.msra.mxu0 %v81
  %2435 = vmatprep.subr.mxu0 %v86
  %2436 = vmatpush1.msra.mxu0 %v85
  %2437 = vmatprep.subr.mxu0 %v90
  %2438 = vmatpush1.msra.mxu0 %v89
  %2439 = vmatprep.subr.mxu0 %v94
  %2440 = vmatpush1.msra.mxu0 %v93
  %2441 = vmatprep.subr.mxu0 %v98
  %2442 = vmatpush1.msra.mxu0 %v97
  %2443 = vmatprep.subr.mxu0 %v102
  %2444 = vmatpush1.msra.mxu0 %v101
  %2445 = vmatprep.subr.mxu0 %v106
  %2446 = vmatpush1.msra.mxu0 %v105
  %2447 = vmatprep.subr.mxu0 %v110
  %2448 = vmatpush1.msra.mxu0 %v109
  %2449 = vmatprep.subr.mxu0 %v114
  %2450 = vmatpush1.msra.mxu0 %v113
  %2451 = vmatprep.subr.mxu0 %v118
  %2452 = vmatpush1.msra.mxu0 %v117
  %2453 = vmatprep.subr.mxu0 %v122
  %2454 = vmatpush1.msra.mxu0 %v121
  %2455 = vmatprep.subr.mxu0 %v126
  %2456 = vmatpush1.msra.mxu0 %v125
  %2457 = vmatprep.subr.mxu0 %v130
  %2458 = vmatpush1.msra.mxu0 %v129
  %2459 = vmatprep.subr.mxu0 %v134
  %2460 = vmatpush1.msra.mxu0 %v133
  %2461 = vmatprep.subr.mxu0 %v138
  %2462 = vmatpush1.msra.mxu0 %v137
  %2463 = vmatprep.subr.mxu0 %v142
  %2464 = vmatpush1.msra.mxu0 %v141
  %2465 = vmatprep.subr.mxu0 %v146
  %2466 = vmatpush1.msra.mxu0 %v145
  %2467 = vmatprep.subr.mxu0 %v150
  %2468 = vmatpush1.msra.mxu0 %v149
  %2469 = vmatprep.subr.mxu0 %v154
  %2470 = vmatpush1.msra.mxu0 %v153
  %2471 = vmatprep.subr.mxu0 %v158
  %2472 = vmatpush1.msra.mxu0 %v157
  %2473 = vmatprep.subr.mxu0 %v162
  %2474 = vmatpush1.msra.mxu0 %v161
  %2475 = vmatprep.mubr.f32.mxu0 %v2171
  %2476 = vmatmul.mubr.f32.gmra.mrb[0].mxu0 %v2339
  %v2477 = vpop.f32.mrb[0].mxu0
  %v2478 = vadd.f32 %v304, %v2477
  %v2479 = vpop.f32.mrb[0].mxu0
  %v2480 = vadd.f32 %v308, %v2479
  %2481 = vdwg.mxu0
  %v2482 = vxor.u32 %v2407, 2147483648
  %v2483 = vmul.f32 %v2482, 1.442695
  %v2484 = vpow.pop %v2483
  %v2485 = vadd.f32 %v2484, 1.0
  %v2486 = vrcp.pop %v2485
  %v2487 = vmul.f32 1.0, %v2486
  %v2488 = vxor.u32 %v2409, 2147483648
  %v2489 = vmul.f32 %v2488, 1.442695
  %v2490 = vpow.pop %v2489
  %v2491 = vadd.f32 %v2490, 1.0
  %v2492 = vrcp.pop %v2491
  %v2493 = vmul.f32 1.0, %v2492
  %v2494 = vtanh.pop %v2478
  %v2495 = vxor.u32 %v2480, 2147483648
  %v2496 = vmul.f32 %v2495, 1.442695
  %v2497 = vpow.pop %v2496
  %v2498 = vadd.f32 %v2497, 1.0
  %v2499 = vrcp.pop %v2498
  %v2500 = vmul.f32 1.0, %v2499
  %v2501 = vmul.f32 %v2493, %v2169
  %v2502 = vmul.f32 %v2487, %v2494
  %v2503 = vadd.f32 %v2501, %v2502
  %v2504 = vtanh.pop %v2503
  %v2505 = vmul.f32 %v2500, %v2504
  %2506 = vmatprep.subr.mxu0 %v164
  %2507 = vmatpush1.msra.mxu0 %v163
  %2508 = vmatprep.subr.mxu0 %v168
  %2509 = vmatpush1.msra.mxu0 %v167
  %2510 = vmatprep.subr.mxu0 %v172
  %2511 = vmatpush1.msra.mxu0 %v171
  %2512 = vmatprep.subr.mxu0 %v176
  %2513 = vmatpush1.msra.mxu0 %v175
  %2514 = vmatprep.subr.mxu0 %v180
  %2515 = vmatpush1.msra.mxu0 %v179
  %2516 = vmatprep.subr.mxu0 %v184
  %2517 = vmatpush1.msra.mxu0 %v183
  %2518 = vmatprep.subr.mxu0 %v188
  %2519 = vmatpush1.msra.mxu0 %v187
  %2520 = vmatprep.subr.mxu0 %v192
  %2521 = vmatpush1.msra.mxu0 %v191
  %2522 = vmatprep.subr.mxu0 %v196
  %2523 = vmatpush1.msra.mxu0 %v195
  %2524 = vmatprep.subr.mxu0 %v200
  %2525 = vmatpush1.msra.mxu0 %v199
  %2526 = vmatprep.subr.mxu0 %v204
  %2527 = vmatpush1.msra.mxu0 %v203
  %2528 = vmatprep.subr.mxu0 %v208
  %2529 = vmatpush1.msra.mxu0 %v207
  %2530 = vmatprep.subr.mxu0 %v212
  %2531 = vmatpush1.msra.mxu0 %v211
  %2532 = vmatprep.subr.mxu0 %v216
  %2533 = vmatpush1.msra.mxu0 %v215
  %2534 = vmatprep.subr.mxu0 %v220
  %2535 = vmatpush1.msra.mxu0 %v219
  %2536 = vmatprep.subr.mxu0 %v224
  %2537 = vmatpush1.msra.mxu0 %v223
  %2538 = vmatprep.subr.mxu0 %v228
  %2539 = vmatpush1.msra.mxu0 %v227
  %2540 = vmatprep.subr.mxu0 %v232
  %2541 = vmatpush1.msra.mxu0 %v231
  %2542 = vmatprep.subr.mxu0 %v236
  %2543 = vmatpush1.msra.mxu0 %v235
  %2544 = vmatprep.subr.mxu0 %v240
  %2545 = vmatpush1.msra.mxu0 %v239
  %2546 = vmatprep.subr.mxu0 %v244
  %2547 = vmatpush1.msra.mxu0 %v243
  %2548 = vmatprep.subr.mxu0 %v248
  %2549 = vmatpush1.msra.mxu0 %v247
  %2550 = vmatprep.subr.mxu0 %v252
  %2551 = vmatpush1.msra.mxu0 %v251
  %2552 = vmatprep.subr.mxu0 %v256
  %2553 = vmatpush1.msra.mxu0 %v255
  %2554 = vmatprep.subr.mxu0 %v260
  %2555 = vmatpush1.msra.mxu0 %v259
  %2556 = vmatprep.subr.mxu0 %v264
  %2557 = vmatpush1.msra.mxu0 %v263
  %2558 = vmatprep.subr.mxu0 %v268
  %2559 = vmatpush1.msra.mxu0 %v267
  %2560 = vmatprep.subr.mxu0 %v272
  %2561 = vmatpush1.msra.mxu0 %v271
  %2562 = vmatprep.subr.mxu0 %v276
  %2563 = vmatpush1.msra.mxu0 %v275
  %2564 = vmatprep.subr.mxu0 %v280
  %2565 = vmatpush1.msra.mxu0 %v279
  %2566 = vmatprep.subr.mxu0 %v284
  %2567 = vmatpush1.msra.mxu0 %v283
  %2568 = vmatprep.subr.mxu0 %v288
  %2569 = vmatpush1.msra.mxu0 %v287
  %2570 = vmatprep.mubr.f32.mxu0 %v2337
  %2571 = vmatmul.mubr.f32.gmra.mrb[0].mxu0 %v2505
  %v2572 = vpop.f32.mrb[0].mxu0
  %v2573 = vadd.f32 %v318, %v2572
  %v2574 = vpop.f32.mrb[0].mxu0
  %v2575 = vadd.f32 %v322, %v2574
  %2576 = vdwg.mxu0
  %2577 = vmatprep.subr.mxu0 %v166
  %2578 = vmatpush1.msra.mxu0 %v165
  %2579 = vmatprep.subr.mxu0 %v170
  %2580 = vmatpush1.msra.mxu0 %v169
  %2581 = vmatprep.subr.mxu0 %v174
  %2582 = vmatpush1.msra.mxu0 %v173
  %2583 = vmatprep.subr.mxu0 %v178
  %2584 = vmatpush1.msra.mxu0 %v177
  %2585 = vmatprep.subr.mxu0 %v182
  %2586 = vmatpush1.msra.mxu0 %v181
  %2587 = vmatprep.subr.mxu0 %v186
  %2588 = vmatpush1.msra.mxu0 %v185
  %2589 = vmatprep.subr.mxu0 %v190
  %2590 = vmatpush1.msra.mxu0 %v189
  %2591 = vmatprep.subr.mxu0 %v194
  %2592 = vmatpush1.msra.mxu0 %v193
  %2593 = vmatprep.subr.mxu0 %v198
  %2594 = vmatpush1.msra.mxu0 %v197
  %2595 = vmatprep.subr.mxu0 %v202
  %2596 = vmatpush1.msra.mxu0 %v201
  %2597 = vmatprep.subr.mxu0 %v206
  %2598 = vmatpush1.msra.mxu0 %v205
  %2599 = vmatprep.subr.mxu0 %v210
  %2600 = vmatpush1.msra.mxu0 %v209
  %2601 = vmatprep.subr.mxu0 %v214
  %2602 = vmatpush1.msra.mxu0 %v213
  %2603 = vmatprep.subr.mxu0 %v218
  %2604 = vmatpush1.msra.mxu0 %v217
  %2605 = vmatprep.subr.mxu0 %v222
  %2606 = vmatpush1.msra.mxu0 %v221
  %2607 = vmatprep.subr.mxu0 %v226
  %2608 = vmatpush1.msra.mxu0 %v225
  %2609 = vmatprep.subr.mxu0 %v230
  %2610 = vmatpush1.msra.mxu0 %v229
  %2611 = vmatprep.subr.mxu0 %v234
  %2612 = vmatpush1.msra.mxu0 %v233
  %2613 = vmatprep.subr.mxu0 %v238
  %2614 = vmatpush1.msra.mxu0 %v237
  %2615 = vmatprep.subr.mxu0 %v242
  %2616 = vmatpush1.msra.mxu0 %v241
  %2617 = vmatprep.subr.mxu0 %v246
  %2618 = vmatpush1.msra.mxu0 %v245
  %2619 = vmatprep.subr.mxu0 %v250
  %2620 = vmatpush1.msra.mxu0 %v249
  %2621 = vmatprep.subr.mxu0 %v254
  %2622 = vmatpush1.msra.mxu0 %v253
  %2623 = vmatprep.subr.mxu0 %v258
  %2624 = vmatpush1.msra.mxu0 %v257
  %2625 = vmatprep.subr.mxu0 %v262
  %2626 = vmatpush1.msra.mxu0 %v261
  %2627 = vmatprep.subr.mxu0 %v266
  %2628 = vmatpush1.msra.mxu0 %v265
  %2629 = vmatprep.subr.mxu0 %v270
  %2630 = vmatpush1.msra.mxu0 %v269
  %2631 = vmatprep.subr.mxu0 %v274
  %2632 = vmatpush1.msra.mxu0 %v273
  %2633 = vmatprep.subr.mxu0 %v278
  %2634 = vmatpush1.msra.mxu0 %v277
  %2635 = vmatprep.subr.mxu0 %v282
  %2636 = vmatpush1.msra.mxu0 %v281
  %2637 = vmatprep.subr.mxu0 %v286
  %2638 = vmatpush1.msra.mxu0 %v285
  %2639 = vmatprep.subr.mxu0 %v290
  %2640 = vmatpush1.msra.mxu0 %v289
  %2641 = vmatprep.mubr.f32.mxu0 %v2337
  %2642 = vmatmul.mubr.f32.gmra.mrb[0].mxu0 %v2505
  %v2643 = vpop.f32.mrb[0].mxu0
  %v2644 = vadd.f32 %v326, %v2643
  %v2645 = vpop.f32.mrb[0].mxu0
  %v2646 = vadd.f32 %v330, %v2645
  %2647 = vdwg.mxu0
  %v2648 = vxor.u32 %v2573, 2147483648
  %v2649 = vmul.f32 %v2648, 1.442695
  %v2650 = vpow.pop %v2649
  %v2651 = vadd.f32 %v2650, 1.0
  %v2652 = vrcp.pop %v2651
  %v2653 = vmul.f32 1.0, %v2652
  %v2654 = vxor.u32 %v2575, 2147483648
  %v2655 = vmul.f32 %v2654, 1.442695
  %v2656 = vpow.pop %v2655
  %v2657 = vadd.f32 %v2656, 1.0
  %v2658 = vrcp.pop %v2657
  %v2659 = vmul.f32 1.0, %v2658
  %v2660 = vtanh.pop %v2644
  %v2661 = vxor.u32 %v2646, 2147483648
  %v2662 = vmul.f32 %v2661, 1.442695
  %v2663 = vpow.pop %v2662
  %v2664 = vadd.f32 %v2663, 1.0
  %v2665 = vrcp.pop %v2664
  %v2666 = vmul.f32 1.0, %v2665
  %v2667 = vmul.f32 %v2659, %v2335
  %v2668 = vmul.f32 %v2653, %v2660
  %v2669 = vadd.f32 %v2667, %v2668
  %v2670 = vtanh.pop %v2669
  %v2671 = vmul.f32 %v2666, %v2670
  %s2672 = scalar_lea.vmem %s0, 56
  %v2673 = vld [vmem:[%s2672] sm:$0xff]
  %2674 = vmatprep.subr.mxu0 %v36
  %2675 = vmatpush1.msra.mxu0 %v35
  %2676 = vmatprep.subr.mxu0 %v40
  %2677 = vmatpush1.msra.mxu0 %v39
  %2678 = vmatprep.subr.mxu0 %v44
  %2679 = vmatpush1.msra.mxu0 %v43
  %2680 = vmatprep.subr.mxu0 %v48
  %2681 = vmatpush1.msra.mxu0 %v47
  %2682 = vmatprep.subr.mxu0 %v52
  %2683 = vmatpush1.msra.mxu0 %v51
  %2684 = vmatprep.subr.mxu0 %v56
  %2685 = vmatpush1.msra.mxu0 %v55
  %2686 = vmatprep.subr.mxu0 %v60
  %2687 = vmatpush1.msra.mxu0 %v59
  %2688 = vmatprep.subr.mxu0 %v64
  %2689 = vmatpush1.msra.mxu0 %v63
  %2690 = vmatprep.subr.mxu0 %v68
  %2691 = vmatpush1.msra.mxu0 %v67
  %2692 = vmatprep.subr.mxu0 %v72
  %2693 = vmatpush1.msra.mxu0 %v71
  %2694 = vmatprep.subr.mxu0 %v76
  %2695 = vmatpush1.msra.mxu0 %v75
  %2696 = vmatprep.subr.mxu0 %v80
  %2697 = vmatpush1.msra.mxu0 %v79
  %2698 = vmatprep.subr.mxu0 %v84
  %2699 = vmatpush1.msra.mxu0 %v83
  %2700 = vmatprep.subr.mxu0 %v88
  %2701 = vmatpush1.msra.mxu0 %v87
  %2702 = vmatprep.subr.mxu0 %v92
  %2703 = vmatpush1.msra.mxu0 %v91
  %2704 = vmatprep.subr.mxu0 %v96
  %2705 = vmatpush1.msra.mxu0 %v95
  %2706 = vmatprep.subr.mxu0 %v100
  %2707 = vmatpush1.msra.mxu0 %v99
  %2708 = vmatprep.subr.mxu0 %v104
  %2709 = vmatpush1.msra.mxu0 %v103
  %2710 = vmatprep.subr.mxu0 %v108
  %2711 = vmatpush1.msra.mxu0 %v107
  %2712 = vmatprep.subr.mxu0 %v112
  %2713 = vmatpush1.msra.mxu0 %v111
  %2714 = vmatprep.subr.mxu0 %v116
  %2715 = vmatpush1.msra.mxu0 %v115
  %2716 = vmatprep.subr.mxu0 %v120
  %2717 = vmatpush1.msra.mxu0 %v119
  %2718 = vmatprep.subr.mxu0 %v124
  %2719 = vmatpush1.msra.mxu0 %v123
  %2720 = vmatprep.subr.mxu0 %v128
  %2721 = vmatpush1.msra.mxu0 %v127
  %2722 = vmatprep.subr.mxu0 %v132
  %2723 = vmatpush1.msra.mxu0 %v131
  %2724 = vmatprep.subr.mxu0 %v136
  %2725 = vmatpush1.msra.mxu0 %v135
  %2726 = vmatprep.subr.mxu0 %v140
  %2727 = vmatpush1.msra.mxu0 %v139
  %2728 = vmatprep.subr.mxu0 %v144
  %2729 = vmatpush1.msra.mxu0 %v143
  %2730 = vmatprep.subr.mxu0 %v148
  %2731 = vmatpush1.msra.mxu0 %v147
  %2732 = vmatprep.subr.mxu0 %v152
  %2733 = vmatpush1.msra.mxu0 %v151
  %2734 = vmatprep.subr.mxu0 %v156
  %2735 = vmatpush1.msra.mxu0 %v155
  %2736 = vmatprep.subr.mxu0 %v160
  %2737 = vmatpush1.msra.mxu0 %v159
  %2738 = vmatprep.mubr.f32.mxu0 %v2505
  %2739 = vmatmul.mubr.f32.gmra.mrb[0].mxu0 %v2673
  %v2740 = vpop.f32.mrb[0].mxu0
  %v2741 = vadd.f32 %v296, %v2740
  %v2742 = vpop.f32.mrb[0].mxu0
  %v2743 = vadd.f32 %v300, %v2742
  %2744 = vdwg.mxu0
  %2745 = vmatprep.subr.mxu0 %v38
  %2746 = vmatpush1.msra.mxu0 %v37
  %2747 = vmatprep.subr.mxu0 %v42
  %2748 = vmatpush1.msra.mxu0 %v41
  %2749 = vmatprep.subr.mxu0 %v46
  %2750 = vmatpush1.msra.mxu0 %v45
  %2751 = vmatprep.subr.mxu0 %v50
  %2752 = vmatpush1.msra.mxu0 %v49
  %2753 = vmatprep.subr.mxu0 %v54
  %2754 = vmatpush1.msra.mxu0 %v53
  %2755 = vmatprep.subr.mxu0 %v58
  %2756 = vmatpush1.msra.mxu0 %v57
  %2757 = vmatprep.subr.mxu0 %v62
  %2758 = vmatpush1.msra.mxu0 %v61
  %2759 = vmatprep.subr.mxu0 %v66
  %2760 = vmatpush1.msra.mxu0 %v65
  %2761 = vmatprep.subr.mxu0 %v70
  %2762 = vmatpush1.msra.mxu0 %v69
  %2763 = vmatprep.subr.mxu0 %v74
  %2764 = vmatpush1.msra.mxu0 %v73
  %2765 = vmatprep.subr.mxu0 %v78
  %2766 = vmatpush1.msra.mxu0 %v77
  %2767 = vmatprep.subr.mxu0 %v82
  %2768 = vmatpush1.msra.mxu0 %v81
  %2769 = vmatprep.subr.mxu0 %v86
  %2770 = vmatpush1.msra.mxu0 %v85
  %2771 = vmatprep.subr.mxu0 %v90
  %2772 = vmatpush1.msra.mxu0 %v89
  %2773 = vmatprep.subr.mxu0 %v94
  %2774 = vmatpush1.msra.mxu0 %v93
  %2775 = vmatprep.subr.mxu0 %v98
  %2776 = vmatpush1.msra.mxu0 %v97
  %2777 = vmatprep.subr.mxu0 %v102
  %2778 = vmatpush1.msra.mxu0 %v101
  %2779 = vmatprep.subr.mxu0 %v106
  %2780 = vmatpush1.msra.mxu0 %v105
  %2781 = vmatprep.subr.mxu0 %v110
  %2782 = vmatpush1.msra.mxu0 %v109
  %2783 = vmatprep.subr.mxu0 %v114
  %2784 = vmatpush1.msra.mxu0 %v113
  %2785 = vmatprep.subr.mxu0 %v118
  %2786 = vmatpush1.msra.mxu0 %v117
  %2787 = vmatprep.subr.mxu0 %v122
  %2788 = vmatpush1.msra.mxu0 %v121
  %2789 = vmatprep.subr.mxu0 %v126
  %2790 = vmatpush1.msra.mxu0 %v125
  %2791 = vmatprep.subr.mxu0 %v130
  %2792 = vmatpush1.msra.mxu0 %v129
  %2793 = vmatprep.subr.mxu0 %v134
  %2794 = vmatpush1.msra.mxu0 %v133
  %2795 = vmatprep.subr.mxu0 %v138
  %2796 = vmatpush1.msra.mxu0 %v137
  %2797 = vmatprep.subr.mxu0 %v142
  %2798 = vmatpush1.msra.mxu0 %v141
  %2799 = vmatprep.subr.mxu0 %v146
  %2800 = vmatpush1.msra.mxu0 %v145
  %2801 = vmatprep.subr.mxu0 %v150
  %2802 = vmatpush1.msra.mxu0 %v149
  %2803 = vmatprep.subr.mxu0 %v154
  %2804 = vmatpush1.msra.mxu0 %v153
  %2805 = vmatprep.subr.mxu0 %v158
  %2806 = vmatpush1.msra.mxu0 %v157
  %2807 = vmatprep.subr.mxu0 %v162
  %2808 = vmatpush1.msra.mxu0 %v161
  %2809 = vmatprep.mubr.f32.mxu0 %v2505
  %2810 = vmatmul.mubr.f32.gmra.mrb[0].mxu0 %v2673
  %v2811 = vpop.f32.mrb[0].mxu0
  %v2812 = vadd.f32 %v304, %v2811
  %v2813 = vpop.f32.mrb[0].mxu0
  %v2814 = vadd.f32 %v308, %v2813
  %2815 = vdwg.mxu0
  %v2816 = vxor.u32 %v2741, 2147483648
  %v2817 = vmul.f32 %v2816, 1.442695
  %v2818 = vpow.pop %v2817
  %v2819 = vadd.f32 %v2818, 1.0
  %v2820 = vrcp.pop %v2819
  %v2821 = vmul.f32 1.0, %v2820
  %v2822 = vxor.u32 %v2743, 2147483648
  %v2823 = vmul.f32 %v2822, 1.442695
  %v2824 = vpow.pop %v2823
  %v2825 = vadd.f32 %v2824, 1.0
  %v2826 = vrcp.pop %v2825
  %v2827 = vmul.f32 1.0, %v2826
  %v2828 = vtanh.pop %v2812
  %v2829 = vxor.u32 %v2814, 2147483648
  %v2830 = vmul.f32 %v2829, 1.442695
  %v2831 = vpow.pop %v2830
  %v2832 = vadd.f32 %v2831, 1.0
  %v2833 = vrcp.pop %v2832
  %v2834 = vmul.f32 1.0, %v2833
  %v2835 = vmul.f32 %v2827, %v2503
  %v2836 = vmul.f32 %v2821, %v2828
  %v2837 = vadd.f32 %v2835, %v2836
  %v2838 = vtanh.pop %v2837
  %v2839 = vmul.f32 %v2834, %v2838
  %2840 = vmatprep.subr.mxu0 %v164
  %2841 = vmatpush1.msra.mxu0 %v163
  %2842 = vmatprep.subr.mxu0 %v168
  %2843 = vmatpush1.msra.mxu0 %v167
  %2844 = vmatprep.subr.mxu0 %v172
  %2845 = vmatpush1.msra.mxu0 %v171
  %2846 = vmatprep.subr.mxu0 %v176
  %2847 = vmatpush1.msra.mxu0 %v175
  %2848 = vmatprep.subr.mxu0 %v180
  %2849 = vmatpush1.msra.mxu0 %v179
  %2850 = vmatprep.subr.mxu0 %v184
  %2851 = vmatpush1.msra.mxu0 %v183
  %2852 = vmatprep.subr.mxu0 %v188
  %2853 = vmatpush1.msra.mxu0 %v187
  %2854 = vmatprep.subr.mxu0 %v192
  %2855 = vmatpush1.msra.mxu0 %v191
  %2856 = vmatprep.subr.mxu0 %v196
  %2857 = vmatpush1.msra.mxu0 %v195
  %2858 = vmatprep.subr.mxu0 %v200
  %2859 = vmatpush1.msra.mxu0 %v199
  %2860 = vmatprep.subr.mxu0 %v204
  %2861 = vmatpush1.msra.mxu0 %v203
  %2862 = vmatprep.subr.mxu0 %v208
  %2863 = vmatpush1.msra.mxu0 %v207
  %2864 = vmatprep.subr.mxu0 %v212
  %2865 = vmatpush1.msra.mxu0 %v211
  %2866 = vmatprep.subr.mxu0 %v216
  %2867 = vmatpush1.msra.mxu0 %v215
  %2868 = vmatprep.subr.mxu0 %v220
  %2869 = vmatpush1.msra.mxu0 %v219
  %2870 = vmatprep.subr.mxu0 %v224
  %2871 = vmatpush1.msra.mxu0 %v223
  %2872 = vmatprep.subr.mxu0 %v228
  %2873 = vmatpush1.msra.mxu0 %v227
  %2874 = vmatprep.subr.mxu0 %v232
  %2875 = vmatpush1.msra.mxu0 %v231
  %2876 = vmatprep.subr.mxu0 %v236
  %2877 = vmatpush1.msra.mxu0 %v235
  %2878 = vmatprep.subr.mxu0 %v240
  %2879 = vmatpush1.msra.mxu0 %v239
  %2880 = vmatprep.subr.mxu0 %v244
  %2881 = vmatpush1.msra.mxu0 %v243
  %2882 = vmatprep.subr.mxu0 %v248
  %2883 = vmatpush1.msra.mxu0 %v247
  %2884 = vmatprep.subr.mxu0 %v252
  %2885 = vmatpush1.msra.mxu0 %v251
  %2886 = vmatprep.subr.mxu0 %v256
  %2887 = vmatpush1.msra.mxu0 %v255
  %2888 = vmatprep.subr.mxu0 %v260
  %2889 = vmatpush1.msra.mxu0 %v259
  %2890 = vmatprep.subr.mxu0 %v264
  %2891 = vmatpush1.msra.mxu0 %v263
  %2892 = vmatprep.subr.mxu0 %v268
  %2893 = vmatpush1.msra.mxu0 %v267
  %2894 = vmatprep.subr.mxu0 %v272
  %2895 = vmatpush1.msra.mxu0 %v271
  %2896 = vmatprep.subr.mxu0 %v276
  %2897 = vmatpush1.msra.mxu0 %v275
  %2898 = vmatprep.subr.mxu0 %v280
  %2899 = vmatpush1.msra.mxu0 %v279
  %2900 = vmatprep.subr.mxu0 %v284
  %2901 = vmatpush1.msra.mxu0 %v283
  %2902 = vmatprep.subr.mxu0 %v288
  %2903 = vmatpush1.msra.mxu0 %v287
  %2904 = vmatprep.mubr.f32.mxu0 %v2671
  %2905 = vmatmul.mubr.f32.gmra.mrb[0].mxu0 %v2839
  %v2906 = vpop.f32.mrb[0].mxu0
  %v2907 = vadd.f32 %v318, %v2906
  %v2908 = vpop.f32.mrb[0].mxu0
  %v2909 = vadd.f32 %v322, %v2908
  %2910 = vdwg.mxu0
  %2911 = vmatprep.subr.mxu0 %v166
  %2912 = vmatpush1.msra.mxu0 %v165
  %2913 = vmatprep.subr.mxu0 %v170
  %2914 = vmatpush1.msra.mxu0 %v169
  %2915 = vmatprep.subr.mxu0 %v174
  %2916 = vmatpush1.msra.mxu0 %v173
  %2917 = vmatprep.subr.mxu0 %v178
  %2918 = vmatpush1.msra.mxu0 %v177
  %2919 = vmatprep.subr.mxu0 %v182
  %2920 = vmatpush1.msra.mxu0 %v181
  %2921 = vmatprep.subr.mxu0 %v186
  %2922 = vmatpush1.msra.mxu0 %v185
  %2923 = vmatprep.subr.mxu0 %v190
  %2924 = vmatpush1.msra.mxu0 %v189
  %2925 = vmatprep.subr.mxu0 %v194
  %2926 = vmatpush1.msra.mxu0 %v193
  %2927 = vmatprep.subr.mxu0 %v198
  %2928 = vmatpush1.msra.mxu0 %v197
  %2929 = vmatprep.subr.mxu0 %v202
  %2930 = vmatpush1.msra.mxu0 %v201
  %2931 = vmatprep.subr.mxu0 %v206
  %2932 = vmatpush1.msra.mxu0 %v205
  %2933 = vmatprep.subr.mxu0 %v210
  %2934 = vmatpush1.msra.mxu0 %v209
  %2935 = vmatprep.subr.mxu0 %v214
  %2936 = vmatpush1.msra.mxu0 %v213
  %2937 = vmatprep.subr.mxu0 %v218
  %2938 = vmatpush1.msra.mxu0 %v217
  %2939 = vmatprep.subr.mxu0 %v222
  %2940 = vmatpush1.msra.mxu0 %v221
  %2941 = vmatprep.subr.mxu0 %v226
  %2942 = vmatpush1.msra.mxu0 %v225
  %2943 = vmatprep.subr.mxu0 %v230
  %2944 = vmatpush1.msra.mxu0 %v229
  %2945 = vmatprep.subr.mxu0 %v234
  %2946 = vmatpush1.msra.mxu0 %v233
  %2947 = vmatprep.subr.mxu0 %v238
  %2948 = vmatpush1.msra.mxu0 %v237
  %2949 = vmatprep.subr.mxu0 %v242
  %2950 = vmatpush1.msra.mxu0 %v241
  %2951 = vmatprep.subr.mxu0 %v246
  %2952 = vmatpush1.msra.mxu0 %v245
  %2953 = vmatprep.subr.mxu0 %v250
  %2954 = vmatpush1.msra.mxu0 %v249
  %2955 = vmatprep.subr.mxu0 %v254
  %2956 = vmatpush1.msra.mxu0 %v253
  %2957 = vmatprep.subr.mxu0 %v258
  %2958 = vmatpush1.msra.mxu0 %v257
  %2959 = vmatprep.subr.mxu0 %v262
  %2960 = vmatpush1.msra.mxu0 %v261
  %2961 = vmatprep.subr.mxu0 %v266
  %2962 = vmatpush1.msra.mxu0 %v265
  %2963 = vmatprep.subr.mxu0 %v270
  %2964 = vmatpush1.msra.mxu0 %v269
  %2965 = vmatprep.subr.mxu0 %v274
  %2966 = vmatpush1.msra.mxu0 %v273
  %2967 = vmatprep.subr.mxu0 %v278
  %2968 = vmatpush1.msra.mxu0 %v277
  %2969 = vmatprep.subr.mxu0 %v282
  %2970 = vmatpush1.msra.mxu0 %v281
  %2971 = vmatprep.subr.mxu0 %v286
  %2972 = vmatpush1.msra.mxu0 %v285
  %2973 = vmatprep.subr.mxu0 %v290
  %2974 = vmatpush1.msra.mxu0 %v289
  %2975 = vmatprep.mubr.f32.mxu0 %v2671
  %2976 = vmatmul.mubr.f32.gmra.mrb[0].mxu0 %v2839
  %v2977 = vpop.f32.mrb[0].mxu0
  %v2978 = vadd.f32 %v326, %v2977
  %v2979 = vpop.f32.mrb[0].mxu0
  %v2980 = vadd.f32 %v330, %v2979
  %2981 = vdwg.mxu0
  %v2982 = vxor.u32 %v2907, 2147483648
  %v2983 = vmul.f32 %v2982, 1.442695
  %v2984 = vpow.pop %v2983
  %v2985 = vadd.f32 %v2984, 1.0
  %v2986 = vrcp.pop %v2985
  %v2987 = vmul.f32 1.0, %v2986
  %v2988 = vxor.u32 %v2909, 2147483648
  %v2989 = vmul.f32 %v2988, 1.442695
  %v2990 = vpow.pop %v2989
  %v2991 = vadd.f32 %v2990, 1.0
  %v2992 = vrcp.pop %v2991
  %v2993 = vmul.f32 1.0, %v2992
  %v2994 = vtanh.pop %v2978
  %v2995 = vxor.u32 %v2980, 2147483648
  %v2996 = vmul.f32 %v2995, 1.442695
  %v2997 = vpow.pop %v2996
  %v2998 = vadd.f32 %v2997, 1.0
  %v2999 = vrcp.pop %v2998
  %v3000 = vmul.f32 1.0, %v2999
  %v3001 = vmul.f32 %v2993, %v2669
  %v3002 = vmul.f32 %v2987, %v2994
  %v3003 = vadd.f32 %v3001, %v3002
  %v3004 = vtanh.pop %v3003
  %v3005 = vmul.f32 %v3000, %v3004
  %v3006 = vld [vmem:[%s5] sm:$0xff]
  %v3007 = vld [vmem:[%s5 + $0x8] sm:$0xff]
  %v3008 = vld [vmem:[%s5 + $0x10] sm:$0xff]
  %v3009 = vld [vmem:[%s5 + $0x18] sm:$0xff]
  %v3010 = vld [vmem:[%s5 + $0x20] sm:$0xff]
  %v3011 = vld [vmem:[%s5 + $0x28] sm:$0xff]
  %v3012 = vld [vmem:[%s5 + $0x30] sm:$0xff]
  %v3013 = vld [vmem:[%s5 + $0x38] sm:$0xff]
  %v3014 = vld [vmem:[%s5 + $0x40] sm:$0xff]
  %v3015 = vld [vmem:[%s5 + $0x48] sm:$0xff]
  %v3016 = vld [vmem:[%s5 + $0x50] sm:$0xff]
  %v3017 = vld [vmem:[%s5 + $0x58] sm:$0xff]
  %v3018 = vld [vmem:[%s5 + $0x60] sm:$0xff]
  %v3019 = vld [vmem:[%s5 + $0x68] sm:$0xff]
  %v3020 = vld [vmem:[%s5 + $0x70] sm:$0xff]
  %v3021 = vld [vmem:[%s5 + $0x78] sm:$0xff]
  %v3022 = vld [vmem:[%s6] sm:$0x1]
  %v3024 = vlaneseq
  %v3025 = vshrl.u32 %v3024, 7
  %v3026 = vsub.s32 0, %v3025
  %v3027 = vrot.slane %v3022, %v3026
  %3029 = vmatprep.subr.mxu0 0.0
  %3030 = vmatpush1.msra.mxu0 %v3006
  %3031 = vmatprep.subr.mxu0 0.0
  %3032 = vmatpush1.msra.mxu0 %v3007
  %3033 = vmatprep.subr.mxu0 0.0
  %3034 = vmatpush1.msra.mxu0 %v3008
  %3035 = vmatprep.subr.mxu0 0.0
  %3036 = vmatpush1.msra.mxu0 %v3009
  %3037 = vmatprep.subr.mxu0 0.0
  %3038 = vmatpush1.msra.mxu0 %v3010
  %3039 = vmatprep.subr.mxu0 0.0
  %3040 = vmatpush1.msra.mxu0 %v3011
  %3041 = vmatprep.subr.mxu0 0.0
  %3042 = vmatpush1.msra.mxu0 %v3012
  %3043 = vmatprep.subr.mxu0 0.0
  %3044 = vmatpush1.msra.mxu0 %v3013
  %3045 = vmatprep.subr.mxu0 0.0
  %3046 = vmatpush1.msra.mxu0 %v3014
  %3047 = vmatprep.subr.mxu0 0.0
  %3048 = vmatpush1.msra.mxu0 %v3015
  %3049 = vmatprep.subr.mxu0 0.0
  %3050 = vmatpush1.msra.mxu0 %v3016
  %3051 = vmatprep.subr.mxu0 0.0
  %3052 = vmatpush1.msra.mxu0 %v3017
  %3053 = vmatprep.subr.mxu0 0.0
  %3054 = vmatpush1.msra.mxu0 %v3018
  %3055 = vmatprep.subr.mxu0 0.0
  %3056 = vmatpush1.msra.mxu0 %v3019
  %3057 = vmatprep.subr.mxu0 0.0
  %3058 = vmatpush1.msra.mxu0 %v3020
  %3059 = vmatprep.subr.mxu0 0.0
  %3060 = vmatpush1.msra.mxu0 %v3021
  %3061 = vmatprep.subr.mxu0 0.0
  %3062 = vmatpush1.msra.mxu0 0.0
  %3063 = vmatprep.subr.mxu0 0.0
  %3064 = vmatpush1.msra.mxu0 0.0
  %3065 = vmatprep.subr.mxu0 0.0
  %3066 = vmatpush1.msra.mxu0 0.0
  %3067 = vmatprep.subr.mxu0 0.0
  %3068 = vmatpush1.msra.mxu0 0.0
  %3069 = vmatprep.subr.mxu0 0.0
  %3070 = vmatpush1.msra.mxu0 0.0
  %3071 = vmatprep.subr.mxu0 0.0
  %3072 = vmatpush1.msra.mxu0 0.0
  %3073 = vmatprep.subr.mxu0 0.0
  %3074 = vmatpush1.msra.mxu0 0.0
  %3075 = vmatprep.subr.mxu0 0.0
  %3076 = vmatpush1.msra.mxu0 0.0
  %3077 = vmatprep.subr.mxu0 0.0
  %3078 = vmatpush1.msra.mxu0 0.0
  %3079 = vmatprep.subr.mxu0 0.0
  %3080 = vmatpush1.msra.mxu0 0.0
  %3081 = vmatprep.subr.mxu0 0.0
  %3082 = vmatpush1.msra.mxu0 0.0
  %3083 = vmatprep.subr.mxu0 0.0
  %3084 = vmatpush1.msra.mxu0 0.0
  %3085 = vmatprep.subr.mxu0 0.0
  %3086 = vmatpush1.msra.mxu0 0.0
  %3087 = vmatprep.subr.mxu0 0.0
  %3088 = vmatpush1.msra.mxu0 0.0
  %3089 = vmatprep.subr.mxu0 0.0
  %3090 = vmatpush1.msra.mxu0 0.0
  %3091 = vmatprep.subr.mxu0 0.0
  %3092 = vmatpush1.msra.mxu0 0.0
  %3093 = vmatprep.mubr.f32.mxu0 0.0
  %3094 = vmatmul.mubr.f32.gmra.mrb[0].mxu0 %v3005
  %v3095 = vpop.f32.mrb[0].mxu0
  %v3096 = vadd.f32 %v3027, %v3095
  %v3097 = vpop.f32.mrb[0].mxu0
  %3098 = vdwg.mxu0
  %v3099 = vmax.f32 %v3096, 0.0
  %v3100 = vld [vmem:[%s7] sm:$0xff]
  %v3101 = vld [vmem:[%s7 + $0x8] sm:$0xff]
  %v3102 = vld [vmem:[%s7 + $0x10] sm:$0xff]
  %v3103 = vld [vmem:[%s7 + $0x18] sm:$0xff]
  %v3104 = vld [vmem:[%s7 + $0x20] sm:$0xff]
  %v3105 = vld [vmem:[%s7 + $0x28] sm:$0xff]
  %v3106 = vld [vmem:[%s7 + $0x30] sm:$0xff]
  %v3107 = vld [vmem:[%s7 + $0x38] sm:$0xff]
  %v3108 = vld [vmem:[%s7 + $0x40] sm:$0xff]
  %v3109 = vld [vmem:[%s7 + $0x48] sm:$0xff]
  %v3110 = vld [vmem:[%s7 + $0x50] sm:$0xff]
  %v3111 = vld [vmem:[%s7 + $0x58] sm:$0xff]
  %v3112 = vld [vmem:[%s7 + $0x60] sm:$0xff]
  %v3113 = vld [vmem:[%s7 + $0x68] sm:$0xff]
  %v3114 = vld [vmem:[%s7 + $0x70] sm:$0xff]
  %v3115 = vld [vmem:[%s7 + $0x78] sm:$0xff]
  %v3116 = vld [vmem:[%s8] sm:$0x1]
  %v3118 = vlaneseq
  %v3119 = vshrl.u32 %v3118, 7
  %v3120 = vsub.s32 0, %v3119
  %v3121 = vrot.slane %v3116, %v3120
  %3123 = vmatprep.subr.mxu0 0.0
  %3124 = vmatpush1.msra.mxu0 %v3100
  %3125 = vmatprep.subr.mxu0 0.0
  %3126 = vmatpush1.msra.mxu0 %v3101
  %3127 = vmatprep.subr.mxu0 0.0
  %3128 = vmatpush1.msra.mxu0 %v3102
  %3129 = vmatprep.subr.mxu0 0.0
  %3130 = vmatpush1.msra.mxu0 %v3103
  %3131 = vmatprep.subr.mxu0 0.0
  %3132 = vmatpush1.msra.mxu0 %v3104
  %3133 = vmatprep.subr.mxu0 0.0
  %3134 = vmatpush1.msra.mxu0 %v3105
  %3135 = vmatprep.subr.mxu0 0.0
  %3136 = vmatpush1.msra.mxu0 %v3106
  %3137 = vmatprep.subr.mxu0 0.0
  %3138 = vmatpush1.msra.mxu0 %v3107
  %3139 = vmatprep.subr.mxu0 0.0
  %3140 = vmatpush1.msra.mxu0 %v3108
  %3141 = vmatprep.subr.mxu0 0.0
  %3142 = vmatpush1.msra.mxu0 %v3109
  %3143 = vmatprep.subr.mxu0 0.0
  %3144 = vmatpush1.msra.mxu0 %v3110
  %3145 = vmatprep.subr.mxu0 0.0
  %3146 = vmatpush1.msra.mxu0 %v3111
  %3147 = vmatprep.subr.mxu0 0.0
  %3148 = vmatpush1.msra.mxu0 %v3112
  %3149 = vmatprep.subr.mxu0 0.0
  %3150 = vmatpush1.msra.mxu0 %v3113
  %3151 = vmatprep.subr.mxu0 0.0
  %3152 = vmatpush1.msra.mxu0 %v3114
  %3153 = vmatprep.subr.mxu0 0.0
  %3154 = vmatpush1.msra.mxu0 %v3115
  %3155 = vmatprep.subr.mxu0 0.0
  %3156 = vmatpush1.msra.mxu0 0.0
  %3157 = vmatprep.subr.mxu0 0.0
  %3158 = vmatpush1.msra.mxu0 0.0
  %3159 = vmatprep.subr.mxu0 0.0
  %3160 = vmatpush1.msra.mxu0 0.0
  %3161 = vmatprep.subr.mxu0 0.0
  %3162 = vmatpush1.msra.mxu0 0.0
  %3163 = vmatprep.subr.mxu0 0.0
  %3164 = vmatpush1.msra.mxu0 0.0
  %3165 = vmatprep.subr.mxu0 0.0
  %3166 = vmatpush1.msra.mxu0 0.0
  %3167 = vmatprep.subr.mxu0 0.0
  %3168 = vmatpush1.msra.mxu0 0.0
  %3169 = vmatprep.subr.mxu0 0.0
  %3170 = vmatpush1.msra.mxu0 0.0
  %3171 = vmatprep.subr.mxu0 0.0
  %3172 = vmatpush1.msra.mxu0 0.0
  %3173 = vmatprep.subr.mxu0 0.0
  %3174 = vmatpush1.msra.mxu0 0.0
  %3175 = vmatprep.subr.mxu0 0.0
  %3176 = vmatpush1.msra.mxu0 0.0
  %3177 = vmatprep.subr.mxu0 0.0
  %3178 = vmatpush1.msra.mxu0 0.0
  %3179 = vmatprep.subr.mxu0 0.0
  %3180 = vmatpush1.msra.mxu0 0.0
  %3181 = vmatprep.subr.mxu0 0.0
  %3182 = vmatpush1.msra.mxu0 0.0
  %3183 = vmatprep.subr.mxu0 0.0
  %3184 = vmatpush1.msra.mxu0 0.0
  %3185 = vmatprep.subr.mxu0 0.0
  %3186 = vmatpush1.msra.mxu0 0.0
  %3187 = vmatprep.mubr.f32.mxu0 0.0
  %3188 = vmatmul.mubr.f32.gmra.mrb[0].mxu0 %v3099
  %v3189 = vpop.f32.mrb[0].mxu0
  %v3190 = vadd.f32 %v3121, %v3189
  %v3191 = vpop.f32.mrb[0].mxu0
  %3192 = vdwg.mxu0
  %3193 = vst [vmem:[%s9] sm:$0xff] %v3190
  %3194 = vst [vmem:[%s10] sm:$0xff] %v2839
  %s3195 = scalar_lea.vmem %s10, 8
  %3196 = vst [vmem:[%s3195] sm:$0xff] %v3005
  %3197 = vst [vmem:[%s11] sm:$0xff] %v2837
  %s3198 = scalar_lea.vmem %s11, 8
  %3199 = vst [vmem:[%s3198] sm:$0xff] %v3003
  // Predicated region
  $region38: #{lstm_classification_forward.1} parent=0 // pred_check
    _
  $region39: #{lstm_classification_forward.1} parent=0 // pred_check_branch
    %3201 = sbr.rel (0) target = $region41
  $region40: #{lstm_classification_forward.1} parent=0 // pred_region
    _
  $region41: #{lstm_classification_forward.1} parent=0 // pred_fallthru
    _
  // Predicated region
  $region42: #{lstm_classification_forward.1} parent=0 // pred_check
    _
  $region43: #{lstm_classification_forward.1} parent=0 // pred_check_branch
    %3203 = sbr.rel (0) target = $region45
  $region44: #{lstm_classification_forward.1} parent=0 // pred_region
    _
  $region45: #{lstm_classification_forward.1} parent=0 // pred_fallthru
    _
  // Predicated region
  $region46: #{lstm_classification_forward.1} parent=0 // pred_check
    _
  $region47: #{lstm_classification_forward.1} parent=0 // pred_check_branch
    %3205 = sbr.rel (0) target = $region49
  $region48: #{lstm_classification_forward.1} parent=0 // pred_region
    _
  $region49: #{lstm_classification_forward.1} parent=0 // pred_fallthru
    _
  // Predicated region
  $region50: #{lstm_classification_forward.1} parent=0 // pred_check
    _
  $region51: #{lstm_classification_forward.1} parent=0 // pred_check_branch
    %3207 = sbr.rel (0) target = $region53
  $region52: #{lstm_classification_forward.1} parent=0 // pred_region
    _
  $region53: #{lstm_classification_forward.1} parent=0 // pred_fallthru
    _
  // Predicated region
  $region54: #{lstm_classification_forward.1} parent=0 // pred_check
    _
  $region55: #{lstm_classification_forward.1} parent=0 // pred_check_branch
    %3209 = sbr.rel (0) target = $region57
  $region56: #{lstm_classification_forward.1} parent=0 // pred_region
    _
  $region57: #{lstm_classification_forward.1} parent=0 // pred_fallthru
    _
  // Predicated region
  $region58: #{lstm_classification_forward.1} parent=0 // pred_check
    _
  $region59: #{lstm_classification_forward.1} parent=0 // pred_check_branch
    %3211 = sbr.rel (0) target = $region61
  $region60: #{lstm_classification_forward.1} parent=0 // pred_region
    _
  $region61: #{lstm_classification_forward.1} parent=0 // pred_fallthru
    _

</llo_original>
